<compile_context>
chip_gen: v5e
topology: v5e:2x2
jax: 0.10.0
libtpu: 0.0.40
codegen_flags: <defaults>
</compile_context>

<pallas_src>
import functools

import numpy as np
import jax
import jax.numpy as jnp
from jax import lax
from jax.experimental import pallas as pl
from jax.experimental.pallas import tpu as pltpu


# --------------------------------------------------------------------------
# Kernel
# --------------------------------------------------------------------------
def mmt_kernel(
    x_ref,                                  # (rows_blk, Dtot) packed activations
    wproj_ref,                              # (Dtot, 4*rsum) block-diag proj weight
    wl_ref,                                 # (k_tot, Dtot) block-diag output linear
    bl_ref,                                 # (1, Dtot) packed bias, f32
    e1_ref, e2_ref,                         # (rsum, k_tot) 0/1 KR expanders (resident)
    y_ref,                                  # (rows_blk, Dtot) packed output
    *, alpha, seq_len, seq_pad, block_bz, r1, r2, r3, mxu_dtype, mxu_precision,
):
    f32 = jnp.float32
    hi = lax.Precision.HIGHEST
    rows = block_bz * seq_pad
    rsum = r1 + r2 + r3
    inv_s = jnp.float32(1.0 / seq_len)      # true seq_len; padded rows are zero

    # --- fused projection: one MXU matmul against the block-diagonal weight ---
    x_mx = x_ref[...].astype(mxu_dtype)                        # cast once
    p = jnp.dot(x_mx, wproj_ref[...], preferred_element_type=f32,
                precision=mxu_precision)                       # (rows, 4*rsum) f32

    q1 = p[:, 0 * rsum:1 * rsum]            # [q_t1(r2) | q_v1(r1) | q_a1(r3)]
    k1 = p[:, 1 * rsum:2 * rsum]
    q2 = p[:, 2 * rsum:3 * rsum]            # [q_t2(r3) | q_v2(r2) | q_a2(r1)]
    k2 = p[:, 3 * rsum:4 * rsum]
    A = q1 * k1                             # (rows, rsum) f32: [A_t | A_v | A_a]
    B = q2 * k2                             # (rows, rsum) f32: [B_t | B_v | B_a]

    A_t, A_v, A_a = A[:, :r2], A[:, r2:r2 + r1], A[:, r2 + r1:]
    B_t, B_v, B_a = B[:, :r3], B[:, r3:r3 + r2], B[:, r3 + r2:]

    def pb(x2d):                            # (rows, r) -> (block_bz, seq_pad, r)
        return x2d.reshape(block_bz, seq_pad, x2d.shape[-1])

    # --- per-batch rank-1 means + chained contraction (tiny, kept in f32) ---
    # NOTE: 'bsp,bsq->bpq' contracts the sublane (seq) dim of both operands; a
    # small per-batch transpose may be emitted — accepted knowingly (tiles are
    # (seq_pad, r<=16) and the XLU has slack in this HBM-bound kernel).
    def mean_outer(A2, B2):
        m = jnp.einsum('bsp,bsq->bpq', pb(A2), pb(B2),
                       preferred_element_type=f32, precision=hi)
        return m * inv_s

    M_t = mean_outer(A_t, B_t)              # (Bb, r2, r3)
    M_v = mean_outer(A_v, B_v)              # (Bb, r1, r2)
    M_a = mean_outer(A_a, B_a)              # (Bb, r3, r1)

    def bmm(xm, ym):
        return jnp.einsum('bij,bjk->bik', xm, ym,
                          preferred_element_type=f32, precision=hi)

    MM_t = bmm(M_a, M_v)                    # (Bb, r3, r2)
    MM_v = bmm(M_t, M_a)                    # (Bb, r2, r1)
    MM_a = bmm(M_v, M_t)                    # (Bb, r1, r3)

    def chain(B2, MM, r_out):
        c = jnp.einsum('bsr,brq->bsq', pb(B2), MM,
                       preferred_element_type=f32, precision=hi)
        return c.reshape(rows, r_out)

    C_t = chain(B_t, MM_t, r2)
    C_v = chain(B_v, MM_v, r1)
    C_a = chain(B_a, MM_a, r3)
    C = jnp.concatenate([C_t, C_v, C_a], axis=1)   # (rows, rsum): [C_t | C_v | C_a]

    # --- packed Khatri-Rao via resident block-diagonal 0/1 expanders ---
    attn = (jnp.dot(A.astype(mxu_dtype), e1_ref[...], preferred_element_type=f32,
                    precision=mxu_precision) *
            jnp.dot(C.astype(mxu_dtype), e2_ref[...], preferred_element_type=f32,
                    precision=mxu_precision))     # (rows, r2^2 + r1^2 + r3^2) f32

    # --- packed output linear + bias + fused residual: one lane-dense store ---
    out = jnp.dot(attn.astype(mxu_dtype), wl_ref[...], preferred_element_type=f32,
                  precision=mxu_precision) + bl_ref[...]
    y_ref[...] = (x_ref[...].astype(f32) * (out + alpha)).astype(y_ref.dtype)


# --------------------------------------------------------------------------
# Host-side packing
# --------------------------------------------------------------------------
def _kr_expander_blocks(r):
    """0/1 expanders so (a @ e1) * (c @ e2) == row-major flattened outer(a, c)."""
    cols = np.arange(r * r)[None, :]
    rows = np.arange(r)[:, None]
    e1 = (rows == cols // r).astype(np.float32)
    e2 = (rows == cols % r).astype(np.float32)
    return e1, e2


def pack_params(params, dims, ranks, mxu_dtype):
    """Block-diagonal packing of all weights (projections, output linears, biases)
    plus the block-diagonal Khatri-Rao expanders. Done once, outside the grid."""
    Dt, Dv, Da = dims
    r1, r2, r3 = ranks
    d_tot = Dt + Dv + Da
    rsum = r1 + r2 + r3
    k_tot = r2 * r2 + r1 * r1 + r3 * r3
    P = {k: np.asarray(v, np.float32) for k, v in params.items()}
    row_off = (0, Dt, Dt + Dv)              # modality row offsets (t, v, a)

    # block-diagonal fused projection weight (d_tot, 4*rsum),
    # column groups [Q1 | K1 | Q2 | K2], each ordered (t, v, a).
    w_proj = np.zeros((d_tot, 4 * rsum), np.float32)
    col = 0
    for group in (("wqt1", "wqv1", "wqa1"), ("wkt1", "wkv1", "wka1"),
                  ("wqt2", "wqv2", "wqa2"), ("wkt2", "wkv2", "wka2")):
        for name, ro in zip(group, row_off):
            w = P[name]
            w_proj[ro:ro + w.shape[0], col:col + w.shape[1]] = w
            col += w.shape[1]

    # block-diagonal 0/1 KR expanders (rsum, k_tot); row/col blocks ordered (t,v,a)
    # matching A/C packed column order (r2, r1, r3) and K order (r2^2, r1^2, r3^2).
    e1 = np.zeros((rsum, k_tot), np.float32)
    e2 = np.zeros((rsum, k_tot), np.float32)
    r_off, k_off = 0, 0
    for r in (r2, r1, r3):
        b1, b2 = _kr_expander_blocks(r)
        e1[r_off:r_off + r, k_off:k_off + r * r] = b1
        e2[r_off:r_off + r, k_off:k_off + r * r] = b2
        r_off += r
        k_off += r * r

    # block-diagonal output linear (k_tot, d_tot) and packed bias (1, d_tot).
    w_l = np.zeros((k_tot, d_tot), np.float32)
    b_l = np.zeros((1, d_tot), np.float32)
    k_off = 0
    for name_w, name_b, r, ro, dl in (("wlt", "blt", r2, 0, Dt),
                                      ("wlv", "blv", r1, Dt, Dv),
                                      ("wla", "bla", r3, Dt + Dv, Da)):
        w_l[k_off:k_off + r * r, ro:ro + dl] = P[name_w]
        b_l[:, ro:ro + dl] = P[name_b]
        k_off += r * r

    return (jnp.asarray(w_proj, mxu_dtype), jnp.asarray(w_l, mxu_dtype),
            jnp.asarray(b_l, jnp.float32),
            jnp.asarray(e1, mxu_dtype), jnp.asarray(e2, mxu_dtype))


def _pick_block_bz(bz, seq_pad, d_tot, rsum, k_tot, *, want_rows=1024,
                   vmem_budget_bytes=40 * 1024 * 1024, prefer_even_steps=True):
    """Largest batch tile (divisor of bz) whose double-buffered packed in/out
    slabs + f32 intermediates fit the VMEM budget (v7x-safe default 40 MiB of
    64 MiB), capped at ~want_rows rows, preferring 1 or an even number of grid
    steps so v7x megacore sharding of the 'parallel' axis stays balanced."""
    per_row = 4 * (2 * 2 * d_tot + 4 * rsum + 3 * rsum + k_tot)
    cap_rows = max(seq_pad, int(vmem_budget_bytes // max(per_row, 1)))
    cap_rows = min(cap_rows, max(want_rows, seq_pad))
    cap = max(1, min(bz, cap_rows // seq_pad))
    divisors = [d for d in range(1, cap + 1) if bz % d == 0]
    if prefer_even_steps:
        ok = [d for d in divisors if (bz // d) == 1 or (bz // d) % 2 == 0]
        if ok:
            divisors = ok
    return max(divisors)


# --------------------------------------------------------------------------
# Wrapper
# --------------------------------------------------------------------------
def mmt_layer_pallas(t, v, a, params, *, alpha, mxu_dtype=jnp.bfloat16,
                     block_bz=None, want_rows=1024,
                     vmem_budget_bytes=40 * 1024 * 1024):
    bz, S, Dt = t.shape
    Dv, Da = v.shape[-1], a.shape[-1]
    r2 = params["wqt1"].shape[1]
    r3 = params["wqt2"].shape[1]
    r1 = params["wqv1"].shape[1]
    d_tot = Dt + Dv + Da
    rsum = r1 + r2 + r3
    k_tot = r2 * r2 + r1 * r1 + r3 * r3

    # Pad seq to a multiple of 8 so per-batch reshapes never split sublane groups.
    # Zero padding projects to zero -> the per-batch mean (divided by true S) is
    # unaffected; padded rows are sliced off below.
    s_pad = ((S + 7) // 8) * 8
    if s_pad != S:
        pad = ((0, 0), (0, s_pad - S), (0, 0))
        t_p, v_p, a_p = jnp.pad(t, pad), jnp.pad(v, pad), jnp.pad(a, pad)
    else:
        t_p, v_p, a_p = t, v, a

    # Lane-concat the three modality streams into one packed, lane-dense slab.
    x = jnp.concatenate([t_p, v_p, a_p], axis=-1).reshape(bz * s_pad, d_tot)

    if block_bz is None:
        block_bz = _pick_block_bz(bz, s_pad, d_tot, rsum, k_tot,
                                  want_rows=want_rows,
                                  vmem_budget_bytes=vmem_budget_bytes)
    rows_blk = block_bz * s_pad
    grid = (bz // block_bz,)

    w_proj, w_l, b_l, e1, e2 = pack_params(
        params, (Dt, Dv, Da), (r1, r2, r3), mxu_dtype)
    weights = (w_proj, w_l, b_l, e1, e2)

    # Budget-derived scoped-VMEM limit (capped at 64 MiB: safe on v5e/v6e/v7x).
    slab_bytes = rows_blk * d_tot * 4
    inter_bytes = rows_blk * (4 * rsum + 3 * rsum + k_tot) * 4
    weight_bytes = sum(int(w.size) * w.dtype.itemsize for w in weights)
    vmem_limit = int(min(64 * 1024 * 1024,
                         max(16 * 1024 * 1024,
                             4 * slab_bytes + inter_bytes + 2 * weight_bytes
                             + 4 * 1024 * 1024)))

    # Constant index_map -> weights/expanders are fetched once and stay resident.
    # (pipeline_mode=pl.Buffered(1) would halve their footprint; negligible here.)
    in_specs = [
        pl.BlockSpec((rows_blk, d_tot), lambda b: (b, 0)),
        pl.BlockSpec(w_proj.shape, lambda b: (0, 0)),
        pl.BlockSpec(w_l.shape, lambda b: (0, 0)),
        pl.BlockSpec(b_l.shape, lambda b: (0, 0)),
        pl.BlockSpec(e1.shape, lambda b: (0, 0)),
        pl.BlockSpec(e2.shape, lambda b: (0, 0)),
    ]
    out_specs = pl.BlockSpec((rows_blk, d_tot), lambda b: (b, 0))
    out_shape = jax.ShapeDtypeStruct((bz * s_pad, d_tot), x.dtype)

    mxu_precision = (lax.Precision.HIGHEST
                     if jnp.dtype(mxu_dtype) == jnp.dtype(jnp.float32) else None)
    kernel = functools.partial(
        mmt_kernel, alpha=float(alpha), seq_len=S, seq_pad=s_pad,
        block_bz=block_bz, r1=r1, r2=r2, r3=r3,
        mxu_dtype=mxu_dtype, mxu_precision=mxu_precision)

    y = pl.pallas_call(
        kernel,
        out_shape=out_shape,
        grid=grid,
        in_specs=in_specs,
        out_specs=out_specs,
        compiler_params=pltpu.CompilerParams(
            dimension_semantics=("parallel",),
            vmem_limit_bytes=vmem_limit),
    )(x, w_proj, w_l, b_l, e1, e2)

    y = y.reshape(bz, s_pad, d_tot)[:, :S, :]
    return (y[..., :Dt].astype(t.dtype),
            y[..., Dt:Dt + Dv].astype(v.dtype),
            y[..., Dt + Dv:].astype(a.dtype))


# --------------------------------------------------------------------------
# Parameter init (matches nn.Linear defaults) and f64 reference forward
# --------------------------------------------------------------------------
def init_params(key, Dt, Dv, Da, r1, r2, r3):
    ks = jax.random.split(key, 18)

    def lin_w(k, din, dout):
        bound = 1.0 / np.sqrt(din)
        return jax.random.uniform(k, (din, dout), jnp.float32, -bound, bound)

    def lin_b(k, din, dout):
        bound = 1.0 / np.sqrt(din)
        return jax.random.uniform(k, (1, dout), jnp.float32, -bound, bound)

    return {
        "wqt1": lin_w(ks[0], Dt, r2), "wqt2": lin_w(ks[1], Dt, r3),
        "wqv1": lin_w(ks[2], Dv, r1), "wqv2": lin_w(ks[3], Dv, r2),
        "wqa1": lin_w(ks[4], Da, r3), "wqa2": lin_w(ks[5], Da, r1),
        "wkt1": lin_w(ks[6], Dt, r2), "wkt2": lin_w(ks[7], Dt, r3),
        "wkv1": lin_w(ks[8], Dv, r1), "wkv2": lin_w(ks[9], Dv, r2),
        "wka1": lin_w(ks[10], Da, r3), "wka2": lin_w(ks[11], Da, r1),
        "wlt": lin_w(ks[12], r2 * r2, Dt), "blt": lin_b(ks[13], r2 * r2, Dt),
        "wlv": lin_w(ks[14], r1 * r1, Dv), "blv": lin_b(ks[15], r1 * r1, Dv),
        "wla": lin_w(ks[16], r3 * r3, Da), "bla": lin_b(ks[17], r3 * r3, Da),
    }


def reference_forward(t, v, a, P, *, alpha, seq_len):
    """Literal numpy float64 transcription of the PyTorch forward."""
    f = lambda x: np.asarray(x, np.float64)
    t64, v64, a64 = f(t), f(v), f(a)
    W = {k: f(val) for k, val in P.items()}
    qt1, qt2 = t64 @ W["wqt1"], t64 @ W["wqt2"]
    kt1, kt2 = t64 @ W["wkt1"], t64 @ W["wkt2"]
    qv1, qv2 = v64 @ W["wqv1"], v64 @ W["wqv2"]
    kv1, kv2 = v64 @ W["wkv1"], v64 @ W["wkv2"]
    qa1, qa2 = a64 @ W["wqa1"], a64 @ W["wqa2"]
    ka1, ka2 = a64 @ W["wka1"], a64 @ W["wka2"]

    kr = lambda x, y: np.einsum("bsp,bsq->bspq", x, y)      # mode_one_khatri_rao
    G_QK_t = kr(qt1, qt2) * kr(kt1, kt2)
    G_QK_v = kr(qv1, qv2) * kr(kv1, kv2)
    G_QK_a = kr(qa1, qa2) * kr(ka1, ka2)
    M_t = G_QK_t.mean(axis=1)
    M_v = G_QK_v.mean(axis=1)
    M_a = G_QK_a.mean(axis=1)

    ctr = lambda x, y: np.einsum("bspq,bqr->bspr", x, y)    # three_one_tensor_contraction
    attn_t = ctr(ctr(G_QK_t, M_a), M_v)
    attn_v = ctr(ctr(G_QK_v, M_t), M_a)
    attn_a = ctr(ctr(G_QK_a, M_v), M_t)

    bz = t64.shape[0]
    attn_t = attn_t.reshape(bz, seq_len, -1) @ W["wlt"] + W["blt"]
    attn_v = attn_v.reshape(bz, seq_len, -1) @ W["wlv"] + W["blv"]
    attn_a = attn_a.reshape(bz, seq_len, -1) @ W["wla"] + W["bla"]

    y_t = attn_t * t64 + alpha * t64
    y_v = attn_v * v64 + alpha * v64
    y_a = attn_a * a64 + alpha * a64
    return (y_t.astype(np.float32), y_v.astype(np.float32),
            y_a.astype(np.float32))


if __name__ == "__main__":
    bz, S = 2, 8
    Dt, Dv, Da = 32, 24, 16      # text_dim, video_dim, audio_dim
    r1, r2, r3 = 4, 8, 16
    alpha = 0.5

    key = jax.random.PRNGKey(0)
    k_t, k_v, k_a, k_p = jax.random.split(key, 4)
    t = jax.random.normal(k_t, (bz, S, Dt), jnp.float32)
    v = jax.random.normal(k_v, (bz, S, Dv), jnp.float32)
    a = jax.random.normal(k_a, (bz, S, Da), jnp.float32)

    params = init_params(k_p, Dt, Dv, Da, r1, r2, r3)
    ref = reference_forward(t, v, a, params, alpha=alpha, seq_len=S)

    # f32 MXU path (HIGHEST precision): tight check against the f64 reference.
    y32 = jax.block_until_ready(
        mmt_layer_pallas(t, v, a, params, alpha=alpha, mxu_dtype=jnp.float32))
    for got, want in zip(y32, ref):
        np.testing.assert_allclose(np.asarray(got), want, rtol=1e-2, atol=1e-3)

    # bf16 MXU path (perf config): bf16 operands only on the big matmuls, f32
    # accumulation and f32 tiny contractions -> looser but comfortable check.
    y16 = jax.block_until_ready(
        mmt_layer_pallas(t, v, a, params, alpha=alpha, mxu_dtype=jnp.bfloat16))
    for got, want in zip(y16, ref):
        np.testing.assert_allclose(np.asarray(got), want, rtol=5e-2, atol=5e-2)

    print("KERNEL_OK")
</pallas_src>

<mosaic_0001>
module attributes {stable_mosaic.version = 11 : i64} {
  func.func @mmt_kernel(%arg0: i32, %arg1: memref<16x72xf32, #tpu.memory_space<vmem>>, %arg2: memref<72x112xf32, #tpu.memory_space<vmem>>, %arg3: memref<336x72xf32, #tpu.memory_space<vmem>>, %arg4: memref<1x72xf32, #tpu.memory_space<vmem>>, %arg5: memref<28x336xf32, #tpu.memory_space<vmem>>, %arg6: memref<28x336xf32, #tpu.memory_space<vmem>>, %arg7: memref<16x72xf32, #tpu.memory_space<vmem>>) attributes {dimension_semantics = [#tpu.dimension_semantics<parallel>], iteration_bounds = array<i64: 1>, scalar_prefetch = 0 : i64, scratch_operands = 0 : i64, tpu.core_type = #tpu.core_type<tc>, window_params = [{transform_indices = @transform_0, window_bounds = array<i64: 16, 72>}, {pipeline_mode = #tpu.pipeline_mode<synchronous>, transform_indices = @transform_1, window_bounds = array<i64: 72, 112>}, {pipeline_mode = #tpu.pipeline_mode<synchronous>, transform_indices = @transform_2, window_bounds = array<i64: 336, 72>}, {pipeline_mode = #tpu.pipeline_mode<synchronous>, transform_indices = @transform_3, window_bounds = array<i64: 1, 72>}, {pipeline_mode = #tpu.pipeline_mode<synchronous>, transform_indices = @transform_4, window_bounds = array<i64: 28, 336>}, {pipeline_mode = #tpu.pipeline_mode<synchronous>, transform_indices = @transform_5, window_bounds = array<i64: 28, 336>}, {transform_indices = @transform_6, window_bounds = array<i64: 16, 72>}]} {
    %c0 = arith.constant 0 : index
    %c0_0 = arith.constant 0 : index
    %0 = vector.load %arg1[%c0, %c0_0] : memref<16x72xf32, #tpu.memory_space<vmem>>, vector<16x72xf32>
    %c0_1 = arith.constant 0 : index
    %c0_2 = arith.constant 0 : index
    %1 = vector.load %arg2[%c0_1, %c0_2] : memref<72x112xf32, #tpu.memory_space<vmem>>, vector<72x112xf32>
    %cst = arith.constant dense<0.000000e+00> : vector<16x112xf32>
    %2 = tpu.matmul %0, %1, %cst {dimension_numbers = #tpu.dot_dimension_numbers<[1], [0], [0], [1], [0, 0, 1, 1], [], []>, precision = #tpu.contract_precision<fp32>} : vector<16x72xf32>, vector<72x112xf32>, vector<16x112xf32> -> vector<16x112xf32>
    %3 = vector.extract_strided_slice %2 {offsets = [0, 0], sizes = [16, 28], strides = [1, 1]} : vector<16x112xf32> to vector<16x28xf32>
    %4 = vector.extract_strided_slice %2 {offsets = [0, 28], sizes = [16, 28], strides = [1, 1]} : vector<16x112xf32> to vector<16x28xf32>
    %5 = vector.extract_strided_slice %2 {offsets = [0, 56], sizes = [16, 28], strides = [1, 1]} : vector<16x112xf32> to vector<16x28xf32>
    %6 = vector.extract_strided_slice %2 {offsets = [0, 84], sizes = [16, 28], strides = [1, 1]} : vector<16x112xf32> to vector<16x28xf32>
    %7 = arith.mulf %3, %4 : vector<16x28xf32>
    %8 = arith.mulf %5, %6 : vector<16x28xf32>
    %9 = vector.extract_strided_slice %7 {offsets = [0, 0], sizes = [16, 8], strides = [1, 1]} : vector<16x28xf32> to vector<16x8xf32>
    %10 = vector.extract_strided_slice %7 {offsets = [0, 8], sizes = [16, 4], strides = [1, 1]} : vector<16x28xf32> to vector<16x4xf32>
    %11 = vector.extract_strided_slice %7 {offsets = [0, 12], sizes = [16, 16], strides = [1, 1]} : vector<16x28xf32> to vector<16x16xf32>
    %12 = vector.extract_strided_slice %8 {offsets = [0, 0], sizes = [16, 16], strides = [1, 1]} : vector<16x28xf32> to vector<16x16xf32>
    %13 = vector.extract_strided_slice %8 {offsets = [0, 16], sizes = [16, 8], strides = [1, 1]} : vector<16x28xf32> to vector<16x8xf32>
    %14 = vector.extract_strided_slice %8 {offsets = [0, 24], sizes = [16, 4], strides = [1, 1]} : vector<16x28xf32> to vector<16x4xf32>
    %15 = vector.shape_cast %9 : vector<16x8xf32> to vector<2x8x8xf32>
    %16 = vector.shape_cast %12 : vector<16x16xf32> to vector<2x8x16xf32>
    "tpu.trace_start"() <{level = 10 : i32, message = "bsp,bsq->bpq"}> : () -> ()
    %cst_3 = arith.constant dense<0.000000e+00> : vector<2x8x16xf32>
    %17 = tpu.matmul %15, %16, %cst_3 {dimension_numbers = #tpu.dot_dimension_numbers<[1], [1], [2], [2], [0, 0, 0, 2, 1, 2], [0], [0]>, precision = #tpu.contract_precision<fp32>} : vector<2x8x8xf32>, vector<2x8x16xf32>, vector<2x8x16xf32> -> vector<2x8x16xf32>
    "tpu.trace_stop"() : () -> ()
    %cst_4 = arith.constant 1.250000e-01 : f32
    %18 = vector.broadcast %cst_4 : f32 to vector<2x8x16xf32>
    %19 = arith.mulf %17, %18 : vector<2x8x16xf32>
    %20 = vector.shape_cast %10 : vector<16x4xf32> to vector<2x8x4xf32>
    %21 = vector.shape_cast %13 : vector<16x8xf32> to vector<2x8x8xf32>
    "tpu.trace_start"() <{level = 10 : i32, message = "bsp,bsq->bpq"}> : () -> ()
    %cst_5 = arith.constant dense<0.000000e+00> : vector<2x4x8xf32>
    %22 = tpu.matmul %20, %21, %cst_5 {dimension_numbers = #tpu.dot_dimension_numbers<[1], [1], [2], [2], [0, 0, 0, 2, 1, 2], [0], [0]>, precision = #tpu.contract_precision<fp32>} : vector<2x8x4xf32>, vector<2x8x8xf32>, vector<2x4x8xf32> -> vector<2x4x8xf32>
    "tpu.trace_stop"() : () -> ()
    %cst_6 = arith.constant 1.250000e-01 : f32
    %23 = vector.broadcast %cst_6 : f32 to vector<2x4x8xf32>
    %24 = arith.mulf %22, %23 : vector<2x4x8xf32>
    %25 = vector.shape_cast %11 : vector<16x16xf32> to vector<2x8x16xf32>
    %26 = vector.shape_cast %14 : vector<16x4xf32> to vector<2x8x4xf32>
    "tpu.trace_start"() <{level = 10 : i32, message = "bsp,bsq->bpq"}> : () -> ()
    %cst_7 = arith.constant dense<0.000000e+00> : vector<2x16x4xf32>
    %27 = tpu.matmul %25, %26, %cst_7 {dimension_numbers = #tpu.dot_dimension_numbers<[1], [1], [2], [2], [0, 0, 0, 2, 1, 2], [0], [0]>, precision = #tpu.contract_precision<fp32>} : vector<2x8x16xf32>, vector<2x8x4xf32>, vector<2x16x4xf32> -> vector<2x16x4xf32>
    "tpu.trace_stop"() : () -> ()
    %cst_8 = arith.constant 1.250000e-01 : f32
    %28 = vector.broadcast %cst_8 : f32 to vector<2x16x4xf32>
    %29 = arith.mulf %27, %28 : vector<2x16x4xf32>
    "tpu.trace_start"() <{level = 10 : i32, message = "bij,bjk->bik"}> : () -> ()
    %cst_9 = arith.constant dense<0.000000e+00> : vector<2x16x8xf32>
    %30 = tpu.matmul %29, %24, %cst_9 {dimension_numbers = #tpu.dot_dimension_numbers<[2], [1], [1], [2], [0, 0, 0, 1, 1, 2], [0], [0]>, precision = #tpu.contract_precision<fp32>} : vector<2x16x4xf32>, vector<2x4x8xf32>, vector<2x16x8xf32> -> vector<2x16x8xf32>
    %cst_10 = arith.constant dense<0.000000e+00> : vector<2x8x4xf32>
    %31 = tpu.matmul %19, %29, %cst_10 {dimension_numbers = #tpu.dot_dimension_numbers<[2], [1], [1], [2], [0, 0, 0, 1, 1, 2], [0], [0]>, precision = #tpu.contract_precision<fp32>} : vector<2x8x16xf32>, vector<2x16x4xf32>, vector<2x8x4xf32> -> vector<2x8x4xf32>
    %cst_11 = arith.constant dense<0.000000e+00> : vector<2x4x16xf32>
    %32 = tpu.matmul %24, %19, %cst_11 {dimension_numbers = #tpu.dot_dimension_numbers<[2], [1], [1], [2], [0, 0, 0, 1, 1, 2], [0], [0]>, precision = #tpu.contract_precision<fp32>} : vector<2x4x8xf32>, vector<2x8x16xf32>, vector<2x4x16xf32> -> vector<2x4x16xf32>
    "tpu.trace_stop"() : () -> ()
    %33 = vector.shape_cast %12 : vector<16x16xf32> to vector<2x8x16xf32>
    "tpu.trace_start"() <{level = 10 : i32, message = "bsr,brq->bsq"}> : () -> ()
    %cst_12 = arith.constant dense<0.000000e+00> : vector<2x8x8xf32>
    %34 = tpu.matmul %33, %30, %cst_12 {dimension_numbers = #tpu.dot_dimension_numbers<[2], [1], [1], [2], [0, 0, 0, 1, 1, 2], [0], [0]>, precision = #tpu.contract_precision<fp32>} : vector<2x8x16xf32>, vector<2x16x8xf32>, vector<2x8x8xf32> -> vector<2x8x8xf32>
    "tpu.trace_stop"() : () -> ()
    %35 = vector.shape_cast %34 : vector<2x8x8xf32> to vector<16x8xf32>
    %36 = vector.shape_cast %13 : vector<16x8xf32> to vector<2x8x8xf32>
    "tpu.trace_start"() <{level = 10 : i32, message = "bsr,brq->bsq"}> : () -> ()
    %cst_13 = arith.constant dense<0.000000e+00> : vector<2x8x4xf32>
    %37 = tpu.matmul %36, %31, %cst_13 {dimension_numbers = #tpu.dot_dimension_numbers<[2], [1], [1], [2], [0, 0, 0, 1, 1, 2], [0], [0]>, precision = #tpu.contract_precision<fp32>} : vector<2x8x8xf32>, vector<2x8x4xf32>, vector<2x8x4xf32> -> vector<2x8x4xf32>
    "tpu.trace_stop"() : () -> ()
    %38 = vector.shape_cast %37 : vector<2x8x4xf32> to vector<16x4xf32>
    %39 = vector.shape_cast %14 : vector<16x4xf32> to vector<2x8x4xf32>
    "tpu.trace_start"() <{level = 10 : i32, message = "bsr,brq->bsq"}> : () -> ()
    %cst_14 = arith.constant dense<0.000000e+00> : vector<2x8x16xf32>
    %40 = tpu.matmul %39, %32, %cst_14 {dimension_numbers = #tpu.dot_dimension_numbers<[2], [1], [1], [2], [0, 0, 0, 1, 1, 2], [0], [0]>, precision = #tpu.contract_precision<fp32>} : vector<2x8x4xf32>, vector<2x4x16xf32>, vector<2x8x16xf32> -> vector<2x8x16xf32>
    "tpu.trace_stop"() : () -> ()
    %41 = vector.shape_cast %40 : vector<2x8x16xf32> to vector<16x16xf32>
    %42 = tpu.concatenate %35, %38, %41 in 1 : vector<16x8xf32>, vector<16x4xf32>, vector<16x16xf32> -> vector<16x28xf32>
    %c0_15 = arith.constant 0 : index
    %c0_16 = arith.constant 0 : index
    %43 = vector.load %arg5[%c0_15, %c0_16] : memref<28x336xf32, #tpu.memory_space<vmem>>, vector<28x336xf32>
    %cst_17 = arith.constant dense<0.000000e+00> : vector<16x336xf32>
    %44 = tpu.matmul %7, %43, %cst_17 {dimension_numbers = #tpu.dot_dimension_numbers<[1], [0], [0], [1], [0, 0, 1, 1], [], []>, precision = #tpu.contract_precision<fp32>} : vector<16x28xf32>, vector<28x336xf32>, vector<16x336xf32> -> vector<16x336xf32>
    %c0_18 = arith.constant 0 : index
    %c0_19 = arith.constant 0 : index
    %45 = vector.load %arg6[%c0_18, %c0_19] : memref<28x336xf32, #tpu.memory_space<vmem>>, vector<28x336xf32>
    %cst_20 = arith.constant dense<0.000000e+00> : vector<16x336xf32>
    %46 = tpu.matmul %42, %45, %cst_20 {dimension_numbers = #tpu.dot_dimension_numbers<[1], [0], [0], [1], [0, 0, 1, 1], [], []>, precision = #tpu.contract_precision<fp32>} : vector<16x28xf32>, vector<28x336xf32>, vector<16x336xf32> -> vector<16x336xf32>
    %47 = arith.mulf %44, %46 : vector<16x336xf32>
    %c0_21 = arith.constant 0 : index
    %c0_22 = arith.constant 0 : index
    %48 = vector.load %arg3[%c0_21, %c0_22] : memref<336x72xf32, #tpu.memory_space<vmem>>, vector<336x72xf32>
    %cst_23 = arith.constant dense<0.000000e+00> : vector<16x72xf32>
    %49 = tpu.matmul %47, %48, %cst_23 {dimension_numbers = #tpu.dot_dimension_numbers<[1], [0], [0], [1], [0, 0, 1, 1], [], []>, precision = #tpu.contract_precision<fp32>} : vector<16x336xf32>, vector<336x72xf32>, vector<16x72xf32> -> vector<16x72xf32>
    %c0_24 = arith.constant 0 : index
    %c0_25 = arith.constant 0 : index
    %50 = vector.load %arg4[%c0_24, %c0_25] : memref<1x72xf32, #tpu.memory_space<vmem>>, vector<1x72xf32>
    %51 = vector.broadcast %50 : vector<1x72xf32> to vector<16x72xf32>
    %52 = arith.addf %49, %51 : vector<16x72xf32>
    %c0_26 = arith.constant 0 : index
    %c0_27 = arith.constant 0 : index
    %53 = vector.load %arg1[%c0_26, %c0_27] : memref<16x72xf32, #tpu.memory_space<vmem>>, vector<16x72xf32>
    %cst_28 = arith.constant 5.000000e-01 : f32
    %54 = vector.broadcast %cst_28 : f32 to vector<16x72xf32>
    %55 = arith.addf %52, %54 : vector<16x72xf32>
    %56 = arith.mulf %53, %55 : vector<16x72xf32>
    %c0_29 = arith.constant 0 : index
    %c0_30 = arith.constant 0 : index
    %57 = vector.load %arg7[%c0_29, %c0_30] : memref<16x72xf32, #tpu.memory_space<vmem>>, vector<16x72xf32>
    tpu.vector_store %arg7[%c0_29, %c0_30], %56 {strides = array<i32>} : memref<16x72xf32, #tpu.memory_space<vmem>>, vector<16x72xf32>,
    return
  }
  func.func @transform_0(%arg0: i32) -> (i32, i32) {
    %c0_i32 = arith.constant 0 : i32
    %c0_i32_0 = arith.constant 0 : i32
    return %arg0, %c0_i32 : i32, i32
  }
  func.func @transform_1(%arg0: i32) -> (i32, i32) {
    %c0_i32 = arith.constant 0 : i32
    %c0_i32_0 = arith.constant 0 : i32
    %c0_i32_1 = arith.constant 0 : i32
    return %c0_i32, %c0_i32_0 : i32, i32
  }
  func.func @transform_2(%arg0: i32) -> (i32, i32) {
    %c0_i32 = arith.constant 0 : i32
    %c0_i32_0 = arith.constant 0 : i32
    %c0_i32_1 = arith.constant 0 : i32
    return %c0_i32, %c0_i32_0 : i32, i32
  }
  func.func @transform_3(%arg0: i32) -> (i32, i32) {
    %c0_i32 = arith.constant 0 : i32
    %c0_i32_0 = arith.constant 0 : i32
    %c0_i32_1 = arith.constant 0 : i32
    return %c0_i32, %c0_i32_0 : i32, i32
  }
  func.func @transform_4(%arg0: i32) -> (i32, i32) {
    %c0_i32 = arith.constant 0 : i32
    %c0_i32_0 = arith.constant 0 : i32
    %c0_i32_1 = arith.constant 0 : i32
    return %c0_i32, %c0_i32_0 : i32, i32
  }
  func.func @transform_5(%arg0: i32) -> (i32, i32) {
    %c0_i32 = arith.constant 0 : i32
    %c0_i32_0 = arith.constant 0 : i32
    %c0_i32_1 = arith.constant 0 : i32
    return %c0_i32, %c0_i32_0 : i32, i32
  }
  func.func @transform_6(%arg0: i32) -> (i32, i32) {
    %c0_i32 = arith.constant 0 : i32
    %c0_i32_0 = arith.constant 0 : i32
    return %arg0, %c0_i32 : i32, i32
  }
}

</mosaic_0001>

<llo_original>
// kernel: tpu_custom_call.1
$region0: #{tpu_custom_call.1}
  #allocation0 [shape = 'u32[]', space=smem, size = 0x4, offset = 0x4, fixed_abs, tag = 'smem constant byte address 0x4 - core index']
  #allocation1 [shape = 'u32[72,128]{1,0:T(1,128)}', space=vmem, size = 0x9000, scoped, tag = 'internal scratch']
  %s0 = inlined_call_operand.vmem [shape: f32[16,72], index: 0, kind: input, shape index: {}]
  %s1 = inlined_call_operand.vmem [shape: f32[72,112], index: 1, kind: input, shape index: {}]
  %s2 = inlined_call_operand.vmem [shape: f32[336,72], index: 2, kind: input, shape index: {}]
  %s3 = inlined_call_operand.vmem [shape: f32[1,72], index: 3, kind: input, shape index: {}]
  %s4 = inlined_call_operand.vmem [shape: f32[28,336], index: 4, kind: input, shape index: {}]
  %s5 = inlined_call_operand.vmem [shape: f32[28,336], index: 5, kind: input, shape index: {}]
  %s6 = inlined_call_operand.hbm [shape: f32[16,72], index: 6, kind: output, shape index: {}]
  %s7 = sld [smem:[#allocation0]]
  $region34: #{tpu_custom_call.1} parent=0
    _
  %s9 = ssub.s32 1, %s7
  %s10 = scalar_select 0, %s9, %s7
  $region1: #{tpu_custom_call.1} parent=0
    #allocation2 [shape = 'u8[8192]{0}', space=vmem, size = 0x2000, scoped, tag = 'output window, operand 0, single buffered']
    #allocation3 [shape = 's32[1]{0}', space=sflag, size = 0x4, scoped, tag = 'scoped memory for tpu_custom_call.1']
    %11 = vsyncpa [#allocation3], 0
    // Predicated region
    $region2: #{tpu_custom_call.1} parent=1 // pred_check
      _
    $region3: #{tpu_custom_call.1} parent=1 // pred_check_branch
      %13 = sbr.rel (0) target = $region5
    $region4: #{tpu_custom_call.1} parent=1 // pred_region
      _
    $region5: #{tpu_custom_call.1} parent=1 // pred_fallthru
      _
    // Predicated region
    $region6: #{tpu_custom_call.1} parent=1 // pred_check
      _
    $region7: #{tpu_custom_call.1} parent=1 // pred_check_branch
      %15 = sbr.rel (0) target = $region9
    $region8: #{tpu_custom_call.1} parent=1 // pred_region
      _
    $region9: #{tpu_custom_call.1} parent=1 // pred_fallthru
      _
    // Predicated region
    $region10: #{tpu_custom_call.1} parent=1 // pred_check
      _
    $region11: #{tpu_custom_call.1} parent=1 // pred_check_branch
      %17 = sbr.rel (0) target = $region13
    $region12: #{tpu_custom_call.1} parent=1 // pred_region
      _
    $region13: #{tpu_custom_call.1} parent=1 // pred_fallthru
      _
    // Predicated region
    $region14: #{tpu_custom_call.1} parent=1 // pred_check
      _
    $region15: #{tpu_custom_call.1} parent=1 // pred_check_branch
      %19 = sbr.rel (0) target = $region17
    $region16: #{tpu_custom_call.1} parent=1 // pred_region
      _
    $region17: #{tpu_custom_call.1} parent=1 // pred_fallthru
      _
    // Predicated region
    $region18: #{tpu_custom_call.1} parent=1 // pred_check
      _
    $region19: #{tpu_custom_call.1} parent=1 // pred_check_branch
      %21 = sbr.rel (0) target = $region21
    $region20: #{tpu_custom_call.1} parent=1 // pred_region
      _
    $region21: #{tpu_custom_call.1} parent=1 // pred_fallthru
      _
    // Predicated region
    $region22: #{tpu_custom_call.1} parent=1 // pred_check
      _
    $region23: #{tpu_custom_call.1} parent=1 // pred_check_branch
      %23 = sbr.rel (0) target = $region25
    $region24: #{tpu_custom_call.1} parent=1 // pred_region
      _
    $region25: #{tpu_custom_call.1} parent=1 // pred_fallthru
      _
    %v24 = vld [vmem:[%s0] sm:$0xff]
    %v25 = vld [vmem:[%s0 + $0x8] sm:$0xff]
    %v26 = vld [vmem:[%s1] sm:$0xff]
    %v27 = vld [vmem:[%s1 + $0x8] sm:$0xff]
    %v28 = vld [vmem:[%s1 + $0x10] sm:$0xff]
    %v29 = vld [vmem:[%s1 + $0x18] sm:$0xff]
    %v30 = vld [vmem:[%s1 + $0x20] sm:$0xff]
    %v31 = vld [vmem:[%s1 + $0x28] sm:$0xff]
    %v32 = vld [vmem:[%s1 + $0x30] sm:$0xff]
    %v33 = vld [vmem:[%s1 + $0x38] sm:$0xff]
    %v34 = vld [vmem:[%s1 + $0x40] sm:$0xff]
    %vm35 = vcmask 588800
    %v37 = vsel %vm35, %v24, 0
    %v40 = vsel %vm35, %v25, 0
    %42 = vmatpush.msra.mxu0 0.0
    %43 = vmatpush.msra.mxu0 0.0
    %44 = vmatpush.msra.mxu0 0.0
    %45 = vmatpush.msra.mxu0 0.0
    %46 = vmatpush.msra.mxu0 0.0
    %47 = vmatpush.msra.mxu0 0.0
    %48 = vmatpush.msra.mxu0 0.0
    %v49 = vand.u32 %v34, 4294901760
    %50 = vmatpush.msra.mxu0 %v49
    %v51 = vand.u32 %v33, 4294901760
    %52 = vmatpush.msra.mxu0 %v51
    %v53 = vand.u32 %v32, 4294901760
    %54 = vmatpush.msra.mxu0 %v53
    %v55 = vand.u32 %v31, 4294901760
    %56 = vmatpush.msra.mxu0 %v55
    %v57 = vand.u32 %v30, 4294901760
    %58 = vmatpush.msra.mxu0 %v57
    %v59 = vand.u32 %v29, 4294901760
    %60 = vmatpush.msra.mxu0 %v59
    %v61 = vand.u32 %v28, 4294901760
    %62 = vmatpush.msra.mxu0 %v61
    %v63 = vand.u32 %v27, 4294901760
    %64 = vmatpush.msra.mxu0 %v63
    %v65 = vand.u32 %v26, 4294901760
    %66 = vmatpush.msra.mxu0 %v65
    %v67 = vand.u32 %v37, 4294901760
    %v68 = vsub.f32 %v37, %v67
    %v69 = vand.u32 %v68, 4294901760
    %v70 = vsub.f32 %v68, %v69
    %v71 = vand.u32 %v70, 4294901760
    %72 = vmatmul.f32.gmra.mxu0 %v71
    %v73 = vpop.f32.mrf.mxu0
    %v74 = vadd.f32 0.0, %v73
    %v75 = vand.u32 %v40, 4294901760
    %v76 = vsub.f32 %v40, %v75
    %v77 = vand.u32 %v76, 4294901760
    %v78 = vsub.f32 %v76, %v77
    %v79 = vand.u32 %v78, 4294901760
    %80 = vmatmul.f32.gmra.mxu0 %v79
    %v81 = vpop.f32.mrf.mxu0
    %v82 = vadd.f32 0.0, %v81
    %83 = vdwg.mxu0
    %84 = vmatpush.msra.mxu0 0.0
    %85 = vmatpush.msra.mxu0 0.0
    %86 = vmatpush.msra.mxu0 0.0
    %87 = vmatpush.msra.mxu0 0.0
    %88 = vmatpush.msra.mxu0 0.0
    %89 = vmatpush.msra.mxu0 0.0
    %90 = vmatpush.msra.mxu0 0.0
    %v91 = vand.u32 %v34, 4294901760
    %v92 = vsub.f32 %v34, %v91
    %v93 = vand.u32 %v92, 4294901760
    %v94 = vsub.f32 %v92, %v93
    %v95 = vand.u32 %v94, 4294901760
    %96 = vmatpush.msra.mxu0 %v95
    %v97 = vand.u32 %v33, 4294901760
    %v98 = vsub.f32 %v33, %v97
    %v99 = vand.u32 %v98, 4294901760
    %v100 = vsub.f32 %v98, %v99
    %v101 = vand.u32 %v100, 4294901760
    %102 = vmatpush.msra.mxu0 %v101
    %v103 = vand.u32 %v32, 4294901760
    %v104 = vsub.f32 %v32, %v103
    %v105 = vand.u32 %v104, 4294901760
    %v106 = vsub.f32 %v104, %v105
    %v107 = vand.u32 %v106, 4294901760
    %108 = vmatpush.msra.mxu0 %v107
    %v109 = vand.u32 %v31, 4294901760
    %v110 = vsub.f32 %v31, %v109
    %v111 = vand.u32 %v110, 4294901760
    %v112 = vsub.f32 %v110, %v111
    %v113 = vand.u32 %v112, 4294901760
    %114 = vmatpush.msra.mxu0 %v113
    %v115 = vand.u32 %v30, 4294901760
    %v116 = vsub.f32 %v30, %v115
    %v117 = vand.u32 %v116, 4294901760
    %v118 = vsub.f32 %v116, %v117
    %v119 = vand.u32 %v118, 4294901760
    %120 = vmatpush.msra.mxu0 %v119
    %v121 = vand.u32 %v29, 4294901760
    %v122 = vsub.f32 %v29, %v121
    %v123 = vand.u32 %v122, 4294901760
    %v124 = vsub.f32 %v122, %v123
    %v125 = vand.u32 %v124, 4294901760
    %126 = vmatpush.msra.mxu0 %v125
    %v127 = vand.u32 %v28, 4294901760
    %v128 = vsub.f32 %v28, %v127
    %v129 = vand.u32 %v128, 4294901760
    %v130 = vsub.f32 %v128, %v129
    %v131 = vand.u32 %v130, 4294901760
    %132 = vmatpush.msra.mxu0 %v131
    %v133 = vand.u32 %v27, 4294901760
    %v134 = vsub.f32 %v27, %v133
    %v135 = vand.u32 %v134, 4294901760
    %v136 = vsub.f32 %v134, %v135
    %v137 = vand.u32 %v136, 4294901760
    %138 = vmatpush.msra.mxu0 %v137
    %v139 = vand.u32 %v26, 4294901760
    %v140 = vsub.f32 %v26, %v139
    %v141 = vand.u32 %v140, 4294901760
    %v142 = vsub.f32 %v140, %v141
    %v143 = vand.u32 %v142, 4294901760
    %144 = vmatpush.msra.mxu0 %v143
    %v145 = vand.u32 %v37, 4294901760
    %146 = vmatmul.f32.gmra.mxu0 %v145
    %v147 = vpop.f32.mrf.mxu0
    %v148 = vadd.f32 %v74, %v147
    %v149 = vand.u32 %v40, 4294901760
    %150 = vmatmul.f32.gmra.mxu0 %v149
    %v151 = vpop.f32.mrf.mxu0
    %v152 = vadd.f32 %v82, %v151
    %153 = vdwg.mxu0
    %154 = vmatpush.msra.mxu0 0.0
    %155 = vmatpush.msra.mxu0 0.0
    %156 = vmatpush.msra.mxu0 0.0
    %157 = vmatpush.msra.mxu0 0.0
    %158 = vmatpush.msra.mxu0 0.0
    %159 = vmatpush.msra.mxu0 0.0
    %160 = vmatpush.msra.mxu0 0.0
    %v161 = vand.u32 %v34, 4294901760
    %v162 = vsub.f32 %v34, %v161
    %163 = vmatpush.msra.mxu0 %v162
    %v164 = vand.u32 %v33, 4294901760
    %v165 = vsub.f32 %v33, %v164
    %166 = vmatpush.msra.mxu0 %v165
    %v167 = vand.u32 %v32, 4294901760
    %v168 = vsub.f32 %v32, %v167
    %169 = vmatpush.msra.mxu0 %v168
    %v170 = vand.u32 %v31, 4294901760
    %v171 = vsub.f32 %v31, %v170
    %172 = vmatpush.msra.mxu0 %v171
    %v173 = vand.u32 %v30, 4294901760
    %v174 = vsub.f32 %v30, %v173
    %175 = vmatpush.msra.mxu0 %v174
    %v176 = vand.u32 %v29, 4294901760
    %v177 = vsub.f32 %v29, %v176
    %178 = vmatpush.msra.mxu0 %v177
    %v179 = vand.u32 %v28, 4294901760
    %v180 = vsub.f32 %v28, %v179
    %181 = vmatpush.msra.mxu0 %v180
    %v182 = vand.u32 %v27, 4294901760
    %v183 = vsub.f32 %v27, %v182
    %184 = vmatpush.msra.mxu0 %v183
    %v185 = vand.u32 %v26, 4294901760
    %v186 = vsub.f32 %v26, %v185
    %187 = vmatpush.msra.mxu0 %v186
    %v188 = vand.u32 %v37, 4294901760
    %v189 = vsub.f32 %v37, %v188
    %190 = vmatmul.f32.gmra.mxu0 %v189
    %v191 = vpop.f32.mrf.mxu0
    %v192 = vadd.f32 %v148, %v191
    %v193 = vand.u32 %v40, 4294901760
    %v194 = vsub.f32 %v40, %v193
    %195 = vmatmul.f32.gmra.mxu0 %v194
    %v196 = vpop.f32.mrf.mxu0
    %v197 = vadd.f32 %v152, %v196
    %198 = vdwg.mxu0
    %199 = vmatpush.msra.mxu0 0.0
    %200 = vmatpush.msra.mxu0 0.0
    %201 = vmatpush.msra.mxu0 0.0
    %202 = vmatpush.msra.mxu0 0.0
    %203 = vmatpush.msra.mxu0 0.0
    %204 = vmatpush.msra.mxu0 0.0
    %205 = vmatpush.msra.mxu0 0.0
    %v206 = vand.u32 %v34, 4294901760
    %207 = vmatpush.msra.mxu0 %v206
    %v208 = vand.u32 %v33, 4294901760
    %209 = vmatpush.msra.mxu0 %v208
    %v210 = vand.u32 %v32, 4294901760
    %211 = vmatpush.msra.mxu0 %v210
    %v212 = vand.u32 %v31, 4294901760
    %213 = vmatpush.msra.mxu0 %v212
    %v214 = vand.u32 %v30, 4294901760
    %215 = vmatpush.msra.mxu0 %v214
    %v216 = vand.u32 %v29, 4294901760
    %217 = vmatpush.msra.mxu0 %v216
    %v218 = vand.u32 %v28, 4294901760
    %219 = vmatpush.msra.mxu0 %v218
    %v220 = vand.u32 %v27, 4294901760
    %221 = vmatpush.msra.mxu0 %v220
    %v222 = vand.u32 %v26, 4294901760
    %223 = vmatpush.msra.mxu0 %v222
    %v224 = vand.u32 %v37, 4294901760
    %v225 = vsub.f32 %v37, %v224
    %v226 = vand.u32 %v225, 4294901760
    %227 = vmatmul.f32.gmra.mxu0 %v226
    %v228 = vpop.f32.mrf.mxu0
    %v229 = vadd.f32 %v192, %v228
    %v230 = vand.u32 %v40, 4294901760
    %v231 = vsub.f32 %v40, %v230
    %v232 = vand.u32 %v231, 4294901760
    %233 = vmatmul.f32.gmra.mxu0 %v232
    %v234 = vpop.f32.mrf.mxu0
    %v235 = vadd.f32 %v197, %v234
    %236 = vdwg.mxu0
    %237 = vmatpush.msra.mxu0 0.0
    %238 = vmatpush.msra.mxu0 0.0
    %239 = vmatpush.msra.mxu0 0.0
    %240 = vmatpush.msra.mxu0 0.0
    %241 = vmatpush.msra.mxu0 0.0
    %242 = vmatpush.msra.mxu0 0.0
    %243 = vmatpush.msra.mxu0 0.0
    %v244 = vand.u32 %v34, 4294901760
    %v245 = vsub.f32 %v34, %v244
    %v246 = vand.u32 %v245, 4294901760
    %247 = vmatpush.msra.mxu0 %v246
    %v248 = vand.u32 %v33, 4294901760
    %v249 = vsub.f32 %v33, %v248
    %v250 = vand.u32 %v249, 4294901760
    %251 = vmatpush.msra.mxu0 %v250
    %v252 = vand.u32 %v32, 4294901760
    %v253 = vsub.f32 %v32, %v252
    %v254 = vand.u32 %v253, 4294901760
    %255 = vmatpush.msra.mxu0 %v254
    %v256 = vand.u32 %v31, 4294901760
    %v257 = vsub.f32 %v31, %v256
    %v258 = vand.u32 %v257, 4294901760
    %259 = vmatpush.msra.mxu0 %v258
    %v260 = vand.u32 %v30, 4294901760
    %v261 = vsub.f32 %v30, %v260
    %v262 = vand.u32 %v261, 4294901760
    %263 = vmatpush.msra.mxu0 %v262
    %v264 = vand.u32 %v29, 4294901760
    %v265 = vsub.f32 %v29, %v264
    %v266 = vand.u32 %v265, 4294901760
    %267 = vmatpush.msra.mxu0 %v266
    %v268 = vand.u32 %v28, 4294901760
    %v269 = vsub.f32 %v28, %v268
    %v270 = vand.u32 %v269, 4294901760
    %271 = vmatpush.msra.mxu0 %v270
    %v272 = vand.u32 %v27, 4294901760
    %v273 = vsub.f32 %v27, %v272
    %v274 = vand.u32 %v273, 4294901760
    %275 = vmatpush.msra.mxu0 %v274
    %v276 = vand.u32 %v26, 4294901760
    %v277 = vsub.f32 %v26, %v276
    %v278 = vand.u32 %v277, 4294901760
    %279 = vmatpush.msra.mxu0 %v278
    %v280 = vand.u32 %v37, 4294901760
    %281 = vmatmul.f32.gmra.mxu0 %v280
    %v282 = vpop.f32.mrf.mxu0
    %v283 = vadd.f32 %v229, %v282
    %v284 = vand.u32 %v40, 4294901760
    %285 = vmatmul.f32.gmra.mxu0 %v284
    %v286 = vpop.f32.mrf.mxu0
    %v287 = vadd.f32 %v235, %v286
    %288 = vdwg.mxu0
    %289 = vmatpush.msra.mxu0 0.0
    %290 = vmatpush.msra.mxu0 0.0
    %291 = vmatpush.msra.mxu0 0.0
    %292 = vmatpush.msra.mxu0 0.0
    %293 = vmatpush.msra.mxu0 0.0
    %294 = vmatpush.msra.mxu0 0.0
    %295 = vmatpush.msra.mxu0 0.0
    %v296 = vand.u32 %v34, 4294901760
    %297 = vmatpush.msra.mxu0 %v296
    %v298 = vand.u32 %v33, 4294901760
    %299 = vmatpush.msra.mxu0 %v298
    %v300 = vand.u32 %v32, 4294901760
    %301 = vmatpush.msra.mxu0 %v300
    %v302 = vand.u32 %v31, 4294901760
    %303 = vmatpush.msra.mxu0 %v302
    %v304 = vand.u32 %v30, 4294901760
    %305 = vmatpush.msra.mxu0 %v304
    %v306 = vand.u32 %v29, 4294901760
    %307 = vmatpush.msra.mxu0 %v306
    %v308 = vand.u32 %v28, 4294901760
    %309 = vmatpush.msra.mxu0 %v308
    %v310 = vand.u32 %v27, 4294901760
    %311 = vmatpush.msra.mxu0 %v310
    %v312 = vand.u32 %v26, 4294901760
    %313 = vmatpush.msra.mxu0 %v312
    %v314 = vand.u32 %v37, 4294901760
    %315 = vmatmul.f32.gmra.mxu0 %v314
    %v316 = vpop.f32.mrf.mxu0
    %v317 = vadd.f32 %v283, %v316
    %v318 = vand.u32 %v40, 4294901760
    %319 = vmatmul.f32.gmra.mxu0 %v318
    %v320 = vpop.f32.mrf.mxu0
    %v321 = vadd.f32 %v287, %v320
    %322 = vdwg.mxu0
    %325 = vrot.lane.b32.xlu0 %v317, 100
    %v326 = vpop.permute.xlu0 %325
    %327 = vrot.lane.b32.xlu0 %v321, 100
    %v328 = vpop.permute.xlu0 %327
    %v331 = vmul.f32 %v317, %v326
    %v332 = vmul.f32 %v321, %v328
    %333 = vxpose.xlu0.b32.start [1/16] %v331, 128
    %334 = vxpose.xlu0.b32.cont [2/16] 0.0, 128
    %335 = vxpose.xlu0.b32.cont [3/16] 0.0, 128
    %336 = vxpose.xlu0.b32.cont [4/16] 0.0, 128
    %337 = vxpose.xlu0.b32.cont [5/16] 0.0, 128
    %338 = vxpose.xlu0.b32.cont [6/16] 0.0, 128
    %339 = vxpose.xlu0.b32.cont [7/16] 0.0, 128
    %340 = vxpose.xlu0.b32.cont [8/16] 0.0, 128
    %341 = vxpose.xlu0.b32.cont [9/16] 0.0, 128
    %342 = vxpose.xlu0.b32.cont [10/16] 0.0, 128
    %343 = vxpose.xlu0.b32.cont [11/16] 0.0, 128
    %344 = vxpose.xlu0.b32.cont [12/16] 0.0, 128
    %345 = vxpose.xlu0.b32.cont [13/16] 0.0, 128
    %346 = vxpose.xlu0.b32.cont [14/16] 0.0, 128
    %347 = vxpose.xlu0.b32.cont [15/16] 0.0, 128
    %348 = vxpose.xlu0.b32.end [16/16] 0.0, 128
    %v349 = vpop.trf.xlu0
    %v350 = vpop.trf.xlu0
    %v351 = vpop.trf.xlu0
    %v352 = vpop.trf.xlu0
    %v353 = vpop.trf.xlu0
    %v354 = vpop.trf.xlu0
    %v355 = vpop.trf.xlu0
    %v356 = vpop.trf.xlu0
    %v357 = vpop.trf.xlu0
    %v358 = vpop.trf.xlu0
    %v359 = vpop.trf.xlu0
    %v360 = vpop.trf.xlu0
    %v361 = vpop.trf.xlu0
    %v362 = vpop.trf.xlu0
    %v363 = vpop.trf.xlu0
    %v364 = vpop.trf.xlu0
    %366 = vrot.lane.b32.xlu0 %v331, 72
    %v367 = vpop.permute.xlu0 %366
    %vm369 = vcmask 64512
    %v371 = vsel %vm369, %v349, 0
    %373 = vmatpush.msra.mxu0 0.0
    %374 = vmatpush.msra.mxu0 0.0
    %375 = vmatpush.msra.mxu0 0.0
    %376 = vmatpush.msra.mxu0 0.0
    %377 = vmatpush.msra.mxu0 0.0
    %378 = vmatpush.msra.mxu0 0.0
    %379 = vmatpush.msra.mxu0 0.0
    %380 = vmatpush.msra.mxu0 0.0
    %381 = vmatpush.msra.mxu0 0.0
    %382 = vmatpush.msra.mxu0 0.0
    %383 = vmatpush.msra.mxu0 0.0
    %384 = vmatpush.msra.mxu0 0.0
    %385 = vmatpush.msra.mxu0 0.0
    %386 = vmatpush.msra.mxu0 0.0
    %387 = vmatpush.msra.mxu0 0.0
    %v388 = vand.u32 %v367, 4294901760
    %389 = vmatpush.msra.mxu0 %v388
    %v390 = vand.u32 %v371, 4294901760
    %v391 = vsub.f32 %v371, %v390
    %v392 = vand.u32 %v391, 4294901760
    %v393 = vsub.f32 %v391, %v392
    %v394 = vand.u32 %v393, 4294901760
    %395 = vmatmul.f32.gmra.mxu0 %v394
    %v396 = vpop.f32.mrf.mxu0
    %v397 = vadd.f32 0.0, %v396
    %398 = vdwg.mxu0
    %399 = vmatpush.msra.mxu0 0.0
    %400 = vmatpush.msra.mxu0 0.0
    %401 = vmatpush.msra.mxu0 0.0
    %402 = vmatpush.msra.mxu0 0.0
    %403 = vmatpush.msra.mxu0 0.0
    %404 = vmatpush.msra.mxu0 0.0
    %405 = vmatpush.msra.mxu0 0.0
    %406 = vmatpush.msra.mxu0 0.0
    %407 = vmatpush.msra.mxu0 0.0
    %408 = vmatpush.msra.mxu0 0.0
    %409 = vmatpush.msra.mxu0 0.0
    %410 = vmatpush.msra.mxu0 0.0
    %411 = vmatpush.msra.mxu0 0.0
    %412 = vmatpush.msra.mxu0 0.0
    %413 = vmatpush.msra.mxu0 0.0
    %v414 = vand.u32 %v367, 4294901760
    %v415 = vsub.f32 %v367, %v414
    %v416 = vand.u32 %v415, 4294901760
    %v417 = vsub.f32 %v415, %v416
    %v418 = vand.u32 %v417, 4294901760
    %419 = vmatpush.msra.mxu0 %v418
    %v420 = vand.u32 %v371, 4294901760
    %421 = vmatmul.f32.gmra.mxu0 %v420
    %v422 = vpop.f32.mrf.mxu0
    %v423 = vadd.f32 %v397, %v422
    %424 = vdwg.mxu0
    %425 = vmatpush.msra.mxu0 0.0
    %426 = vmatpush.msra.mxu0 0.0
    %427 = vmatpush.msra.mxu0 0.0
    %428 = vmatpush.msra.mxu0 0.0
    %429 = vmatpush.msra.mxu0 0.0
    %430 = vmatpush.msra.mxu0 0.0
    %431 = vmatpush.msra.mxu0 0.0
    %432 = vmatpush.msra.mxu0 0.0
    %433 = vmatpush.msra.mxu0 0.0
    %434 = vmatpush.msra.mxu0 0.0
    %435 = vmatpush.msra.mxu0 0.0
    %436 = vmatpush.msra.mxu0 0.0
    %437 = vmatpush.msra.mxu0 0.0
    %438 = vmatpush.msra.mxu0 0.0
    %439 = vmatpush.msra.mxu0 0.0
    %v440 = vand.u32 %v367, 4294901760
    %v441 = vsub.f32 %v367, %v440
    %442 = vmatpush.msra.mxu0 %v441
    %v443 = vand.u32 %v371, 4294901760
    %v444 = vsub.f32 %v371, %v443
    %445 = vmatmul.f32.gmra.mxu0 %v444
    %v446 = vpop.f32.mrf.mxu0
    %v447 = vadd.f32 %v423, %v446
    %448 = vdwg.mxu0
    %449 = vmatpush.msra.mxu0 0.0
    %450 = vmatpush.msra.mxu0 0.0
    %451 = vmatpush.msra.mxu0 0.0
    %452 = vmatpush.msra.mxu0 0.0
    %453 = vmatpush.msra.mxu0 0.0
    %454 = vmatpush.msra.mxu0 0.0
    %455 = vmatpush.msra.mxu0 0.0
    %456 = vmatpush.msra.mxu0 0.0
    %457 = vmatpush.msra.mxu0 0.0
    %458 = vmatpush.msra.mxu0 0.0
    %459 = vmatpush.msra.mxu0 0.0
    %460 = vmatpush.msra.mxu0 0.0
    %461 = vmatpush.msra.mxu0 0.0
    %462 = vmatpush.msra.mxu0 0.0
    %463 = vmatpush.msra.mxu0 0.0
    %v464 = vand.u32 %v367, 4294901760
    %465 = vmatpush.msra.mxu0 %v464
    %v466 = vand.u32 %v371, 4294901760
    %v467 = vsub.f32 %v371, %v466
    %v468 = vand.u32 %v467, 4294901760
    %469 = vmatmul.f32.gmra.mxu0 %v468
    %v470 = vpop.f32.mrf.mxu0
    %v471 = vadd.f32 %v447, %v470
    %472 = vdwg.mxu0
    %473 = vmatpush.msra.mxu0 0.0
    %474 = vmatpush.msra.mxu0 0.0
    %475 = vmatpush.msra.mxu0 0.0
    %476 = vmatpush.msra.mxu0 0.0
    %477 = vmatpush.msra.mxu0 0.0
    %478 = vmatpush.msra.mxu0 0.0
    %479 = vmatpush.msra.mxu0 0.0
    %480 = vmatpush.msra.mxu0 0.0
    %481 = vmatpush.msra.mxu0 0.0
    %482 = vmatpush.msra.mxu0 0.0
    %483 = vmatpush.msra.mxu0 0.0
    %484 = vmatpush.msra.mxu0 0.0
    %485 = vmatpush.msra.mxu0 0.0
    %486 = vmatpush.msra.mxu0 0.0
    %487 = vmatpush.msra.mxu0 0.0
    %v488 = vand.u32 %v367, 4294901760
    %v489 = vsub.f32 %v367, %v488
    %v490 = vand.u32 %v489, 4294901760
    %491 = vmatpush.msra.mxu0 %v490
    %v492 = vand.u32 %v371, 4294901760
    %493 = vmatmul.f32.gmra.mxu0 %v492
    %v494 = vpop.f32.mrf.mxu0
    %v495 = vadd.f32 %v471, %v494
    %496 = vdwg.mxu0
    %497 = vmatpush.msra.mxu0 0.0
    %498 = vmatpush.msra.mxu0 0.0
    %499 = vmatpush.msra.mxu0 0.0
    %500 = vmatpush.msra.mxu0 0.0
    %501 = vmatpush.msra.mxu0 0.0
    %502 = vmatpush.msra.mxu0 0.0
    %503 = vmatpush.msra.mxu0 0.0
    %504 = vmatpush.msra.mxu0 0.0
    %505 = vmatpush.msra.mxu0 0.0
    %506 = vmatpush.msra.mxu0 0.0
    %507 = vmatpush.msra.mxu0 0.0
    %508 = vmatpush.msra.mxu0 0.0
    %509 = vmatpush.msra.mxu0 0.0
    %510 = vmatpush.msra.mxu0 0.0
    %511 = vmatpush.msra.mxu0 0.0
    %v512 = vand.u32 %v367, 4294901760
    %513 = vmatpush.msra.mxu0 %v512
    %v514 = vand.u32 %v371, 4294901760
    %515 = vmatmul.f32.gmra.mxu0 %v514
    %v516 = vpop.f32.mrf.mxu0
    %v517 = vadd.f32 %v495, %v516
    %518 = vdwg.mxu0
    %519 = vxpose.xlu0.b32.start [1/16] %v332, 128
    %520 = vxpose.xlu0.b32.cont [2/16] 0.0, 128
    %521 = vxpose.xlu0.b32.cont [3/16] 0.0, 128
    %522 = vxpose.xlu0.b32.cont [4/16] 0.0, 128
    %523 = vxpose.xlu0.b32.cont [5/16] 0.0, 128
    %524 = vxpose.xlu0.b32.cont [6/16] 0.0, 128
    %525 = vxpose.xlu0.b32.cont [7/16] 0.0, 128
    %526 = vxpose.xlu0.b32.cont [8/16] 0.0, 128
    %527 = vxpose.xlu0.b32.cont [9/16] 0.0, 128
    %528 = vxpose.xlu0.b32.cont [10/16] 0.0, 128
    %529 = vxpose.xlu0.b32.cont [11/16] 0.0, 128
    %530 = vxpose.xlu0.b32.cont [12/16] 0.0, 128
    %531 = vxpose.xlu0.b32.cont [13/16] 0.0, 128
    %532 = vxpose.xlu0.b32.cont [14/16] 0.0, 128
    %533 = vxpose.xlu0.b32.cont [15/16] 0.0, 128
    %534 = vxpose.xlu0.b32.end [16/16] 0.0, 128
    %v535 = vpop.trf.xlu0
    %v536 = vpop.trf.xlu0
    %v537 = vpop.trf.xlu0
    %v538 = vpop.trf.xlu0
    %v539 = vpop.trf.xlu0
    %v540 = vpop.trf.xlu0
    %v541 = vpop.trf.xlu0
    %v542 = vpop.trf.xlu0
    %v543 = vpop.trf.xlu0
    %v544 = vpop.trf.xlu0
    %v545 = vpop.trf.xlu0
    %v546 = vpop.trf.xlu0
    %v547 = vpop.trf.xlu0
    %v548 = vpop.trf.xlu0
    %v549 = vpop.trf.xlu0
    %v550 = vpop.trf.xlu0
    %552 = vrot.lane.b32.xlu0 %v332, 72
    %v553 = vpop.permute.xlu0 %552
    %v556 = vsel %vm369, %v535, 0
    %558 = vmatpush.msra.mxu0 0.0
    %559 = vmatpush.msra.mxu0 0.0
    %560 = vmatpush.msra.mxu0 0.0
    %561 = vmatpush.msra.mxu0 0.0
    %562 = vmatpush.msra.mxu0 0.0
    %563 = vmatpush.msra.mxu0 0.0
    %564 = vmatpush.msra.mxu0 0.0
    %565 = vmatpush.msra.mxu0 0.0
    %566 = vmatpush.msra.mxu0 0.0
    %567 = vmatpush.msra.mxu0 0.0
    %568 = vmatpush.msra.mxu0 0.0
    %569 = vmatpush.msra.mxu0 0.0
    %570 = vmatpush.msra.mxu0 0.0
    %571 = vmatpush.msra.mxu0 0.0
    %572 = vmatpush.msra.mxu0 0.0
    %v573 = vand.u32 %v553, 4294901760
    %574 = vmatpush.msra.mxu0 %v573
    %v575 = vand.u32 %v556, 4294901760
    %v576 = vsub.f32 %v556, %v575
    %v577 = vand.u32 %v576, 4294901760
    %v578 = vsub.f32 %v576, %v577
    %v579 = vand.u32 %v578, 4294901760
    %580 = vmatmul.f32.gmra.mxu0 %v579
    %v581 = vpop.f32.mrf.mxu0
    %v582 = vadd.f32 0.0, %v581
    %583 = vdwg.mxu0
    %584 = vmatpush.msra.mxu0 0.0
    %585 = vmatpush.msra.mxu0 0.0
    %586 = vmatpush.msra.mxu0 0.0
    %587 = vmatpush.msra.mxu0 0.0
    %588 = vmatpush.msra.mxu0 0.0
    %589 = vmatpush.msra.mxu0 0.0
    %590 = vmatpush.msra.mxu0 0.0
    %591 = vmatpush.msra.mxu0 0.0
    %592 = vmatpush.msra.mxu0 0.0
    %593 = vmatpush.msra.mxu0 0.0
    %594 = vmatpush.msra.mxu0 0.0
    %595 = vmatpush.msra.mxu0 0.0
    %596 = vmatpush.msra.mxu0 0.0
    %597 = vmatpush.msra.mxu0 0.0
    %598 = vmatpush.msra.mxu0 0.0
    %v599 = vand.u32 %v553, 4294901760
    %v600 = vsub.f32 %v553, %v599
    %v601 = vand.u32 %v600, 4294901760
    %v602 = vsub.f32 %v600, %v601
    %v603 = vand.u32 %v602, 4294901760
    %604 = vmatpush.msra.mxu0 %v603
    %v605 = vand.u32 %v556, 4294901760
    %606 = vmatmul.f32.gmra.mxu0 %v605
    %v607 = vpop.f32.mrf.mxu0
    %v608 = vadd.f32 %v582, %v607
    %609 = vdwg.mxu0
    %610 = vmatpush.msra.mxu0 0.0
    %611 = vmatpush.msra.mxu0 0.0
    %612 = vmatpush.msra.mxu0 0.0
    %613 = vmatpush.msra.mxu0 0.0
    %614 = vmatpush.msra.mxu0 0.0
    %615 = vmatpush.msra.mxu0 0.0
    %616 = vmatpush.msra.mxu0 0.0
    %617 = vmatpush.msra.mxu0 0.0
    %618 = vmatpush.msra.mxu0 0.0
    %619 = vmatpush.msra.mxu0 0.0
    %620 = vmatpush.msra.mxu0 0.0
    %621 = vmatpush.msra.mxu0 0.0
    %622 = vmatpush.msra.mxu0 0.0
    %623 = vmatpush.msra.mxu0 0.0
    %624 = vmatpush.msra.mxu0 0.0
    %v625 = vand.u32 %v553, 4294901760
    %v626 = vsub.f32 %v553, %v625
    %627 = vmatpush.msra.mxu0 %v626
    %v628 = vand.u32 %v556, 4294901760
    %v629 = vsub.f32 %v556, %v628
    %630 = vmatmul.f32.gmra.mxu0 %v629
    %v631 = vpop.f32.mrf.mxu0
    %v632 = vadd.f32 %v608, %v631
    %633 = vdwg.mxu0
    %634 = vmatpush.msra.mxu0 0.0
    %635 = vmatpush.msra.mxu0 0.0
    %636 = vmatpush.msra.mxu0 0.0
    %637 = vmatpush.msra.mxu0 0.0
    %638 = vmatpush.msra.mxu0 0.0
    %639 = vmatpush.msra.mxu0 0.0
    %640 = vmatpush.msra.mxu0 0.0
    %641 = vmatpush.msra.mxu0 0.0
    %642 = vmatpush.msra.mxu0 0.0
    %643 = vmatpush.msra.mxu0 0.0
    %644 = vmatpush.msra.mxu0 0.0
    %645 = vmatpush.msra.mxu0 0.0
    %646 = vmatpush.msra.mxu0 0.0
    %647 = vmatpush.msra.mxu0 0.0
    %648 = vmatpush.msra.mxu0 0.0
    %v649 = vand.u32 %v553, 4294901760
    %650 = vmatpush.msra.mxu0 %v649
    %v651 = vand.u32 %v556, 4294901760
    %v652 = vsub.f32 %v556, %v651
    %v653 = vand.u32 %v652, 4294901760
    %654 = vmatmul.f32.gmra.mxu0 %v653
    %v655 = vpop.f32.mrf.mxu0
    %v656 = vadd.f32 %v632, %v655
    %657 = vdwg.mxu0
    %658 = vmatpush.msra.mxu0 0.0
    %659 = vmatpush.msra.mxu0 0.0
    %660 = vmatpush.msra.mxu0 0.0
    %661 = vmatpush.msra.mxu0 0.0
    %662 = vmatpush.msra.mxu0 0.0
    %663 = vmatpush.msra.mxu0 0.0
    %664 = vmatpush.msra.mxu0 0.0
    %665 = vmatpush.msra.mxu0 0.0
    %666 = vmatpush.msra.mxu0 0.0
    %667 = vmatpush.msra.mxu0 0.0
    %668 = vmatpush.msra.mxu0 0.0
    %669 = vmatpush.msra.mxu0 0.0
    %670 = vmatpush.msra.mxu0 0.0
    %671 = vmatpush.msra.mxu0 0.0
    %672 = vmatpush.msra.mxu0 0.0
    %v673 = vand.u32 %v553, 4294901760
    %v674 = vsub.f32 %v553, %v673
    %v675 = vand.u32 %v674, 4294901760
    %676 = vmatpush.msra.mxu0 %v675
    %v677 = vand.u32 %v556, 4294901760
    %678 = vmatmul.f32.gmra.mxu0 %v677
    %v679 = vpop.f32.mrf.mxu0
    %v680 = vadd.f32 %v656, %v679
    %681 = vdwg.mxu0
    %682 = vmatpush.msra.mxu0 0.0
    %683 = vmatpush.msra.mxu0 0.0
    %684 = vmatpush.msra.mxu0 0.0
    %685 = vmatpush.msra.mxu0 0.0
    %686 = vmatpush.msra.mxu0 0.0
    %687 = vmatpush.msra.mxu0 0.0
    %688 = vmatpush.msra.mxu0 0.0
    %689 = vmatpush.msra.mxu0 0.0
    %690 = vmatpush.msra.mxu0 0.0
    %691 = vmatpush.msra.mxu0 0.0
    %692 = vmatpush.msra.mxu0 0.0
    %693 = vmatpush.msra.mxu0 0.0
    %694 = vmatpush.msra.mxu0 0.0
    %695 = vmatpush.msra.mxu0 0.0
    %696 = vmatpush.msra.mxu0 0.0
    %v697 = vand.u32 %v553, 4294901760
    %698 = vmatpush.msra.mxu0 %v697
    %v699 = vand.u32 %v556, 4294901760
    %700 = vmatmul.f32.gmra.mxu0 %v699
    %v701 = vpop.f32.mrf.mxu0
    %v702 = vadd.f32 %v680, %v701
    %703 = vdwg.mxu0
    %v704 = vmul.f32 %v517, 0.125
    %v705 = vmul.f32 %v702, 0.125
    %706 = vrot.lane.b32.xlu0 %v331, 120
    %v707 = vpop.permute.xlu0 %706
    %709 = vxpose.xlu0.b32.start [1/16] %v707, 128
    %710 = vxpose.xlu0.b32.cont [2/16] 0.0, 128
    %711 = vxpose.xlu0.b32.cont [3/16] 0.0, 128
    %712 = vxpose.xlu0.b32.cont [4/16] 0.0, 128
    %713 = vxpose.xlu0.b32.cont [5/16] 0.0, 128
    %714 = vxpose.xlu0.b32.cont [6/16] 0.0, 128
    %715 = vxpose.xlu0.b32.cont [7/16] 0.0, 128
    %716 = vxpose.xlu0.b32.cont [8/16] 0.0, 128
    %717 = vxpose.xlu0.b32.cont [9/16] 0.0, 128
    %718 = vxpose.xlu0.b32.cont [10/16] 0.0, 128
    %719 = vxpose.xlu0.b32.cont [11/16] 0.0, 128
    %720 = vxpose.xlu0.b32.cont [12/16] 0.0, 128
    %721 = vxpose.xlu0.b32.cont [13/16] 0.0, 128
    %722 = vxpose.xlu0.b32.cont [14/16] 0.0, 128
    %723 = vxpose.xlu0.b32.cont [15/16] 0.0, 128
    %724 = vxpose.xlu0.b32.end [16/16] 0.0, 128
    %v725 = vpop.trf.xlu0
    %v726 = vpop.trf.xlu0
    %v727 = vpop.trf.xlu0
    %v728 = vpop.trf.xlu0
    %v729 = vpop.trf.xlu0
    %v730 = vpop.trf.xlu0
    %v731 = vpop.trf.xlu0
    %v732 = vpop.trf.xlu0
    %v733 = vpop.trf.xlu0
    %v734 = vpop.trf.xlu0
    %v735 = vpop.trf.xlu0
    %v736 = vpop.trf.xlu0
    %v737 = vpop.trf.xlu0
    %v738 = vpop.trf.xlu0
    %v739 = vpop.trf.xlu0
    %v740 = vpop.trf.xlu0
    %741 = vrot.lane.b32.xlu0 %v331, 56
    %v742 = vpop.permute.xlu0 %741
    %v745 = vsel %vm369, %v725, 0
    %747 = vmatpush.msra.mxu0 0.0
    %748 = vmatpush.msra.mxu0 0.0
    %749 = vmatpush.msra.mxu0 0.0
    %750 = vmatpush.msra.mxu0 0.0
    %751 = vmatpush.msra.mxu0 0.0
    %752 = vmatpush.msra.mxu0 0.0
    %753 = vmatpush.msra.mxu0 0.0
    %754 = vmatpush.msra.mxu0 0.0
    %755 = vmatpush.msra.mxu0 0.0
    %756 = vmatpush.msra.mxu0 0.0
    %757 = vmatpush.msra.mxu0 0.0
    %758 = vmatpush.msra.mxu0 0.0
    %759 = vmatpush.msra.mxu0 0.0
    %760 = vmatpush.msra.mxu0 0.0
    %761 = vmatpush.msra.mxu0 0.0
    %v762 = vand.u32 %v742, 4294901760
    %763 = vmatpush.msra.mxu0 %v762
    %v764 = vand.u32 %v745, 4294901760
    %v765 = vsub.f32 %v745, %v764
    %v766 = vand.u32 %v765, 4294901760
    %v767 = vsub.f32 %v765, %v766
    %v768 = vand.u32 %v767, 4294901760
    %769 = vmatmul.f32.gmra.mxu0 %v768
    %v770 = vpop.f32.mrf.mxu0
    %v771 = vadd.f32 0.0, %v770
    %772 = vdwg.mxu0
    %773 = vmatpush.msra.mxu0 0.0
    %774 = vmatpush.msra.mxu0 0.0
    %775 = vmatpush.msra.mxu0 0.0
    %776 = vmatpush.msra.mxu0 0.0
    %777 = vmatpush.msra.mxu0 0.0
    %778 = vmatpush.msra.mxu0 0.0
    %779 = vmatpush.msra.mxu0 0.0
    %780 = vmatpush.msra.mxu0 0.0
    %781 = vmatpush.msra.mxu0 0.0
    %782 = vmatpush.msra.mxu0 0.0
    %783 = vmatpush.msra.mxu0 0.0
    %784 = vmatpush.msra.mxu0 0.0
    %785 = vmatpush.msra.mxu0 0.0
    %786 = vmatpush.msra.mxu0 0.0
    %787 = vmatpush.msra.mxu0 0.0
    %v788 = vand.u32 %v742, 4294901760
    %v789 = vsub.f32 %v742, %v788
    %v790 = vand.u32 %v789, 4294901760
    %v791 = vsub.f32 %v789, %v790
    %v792 = vand.u32 %v791, 4294901760
    %793 = vmatpush.msra.mxu0 %v792
    %v794 = vand.u32 %v745, 4294901760
    %795 = vmatmul.f32.gmra.mxu0 %v794
    %v796 = vpop.f32.mrf.mxu0
    %v797 = vadd.f32 %v771, %v796
    %798 = vdwg.mxu0
    %799 = vmatpush.msra.mxu0 0.0
    %800 = vmatpush.msra.mxu0 0.0
    %801 = vmatpush.msra.mxu0 0.0
    %802 = vmatpush.msra.mxu0 0.0
    %803 = vmatpush.msra.mxu0 0.0
    %804 = vmatpush.msra.mxu0 0.0
    %805 = vmatpush.msra.mxu0 0.0
    %806 = vmatpush.msra.mxu0 0.0
    %807 = vmatpush.msra.mxu0 0.0
    %808 = vmatpush.msra.mxu0 0.0
    %809 = vmatpush.msra.mxu0 0.0
    %810 = vmatpush.msra.mxu0 0.0
    %811 = vmatpush.msra.mxu0 0.0
    %812 = vmatpush.msra.mxu0 0.0
    %813 = vmatpush.msra.mxu0 0.0
    %v814 = vand.u32 %v742, 4294901760
    %v815 = vsub.f32 %v742, %v814
    %816 = vmatpush.msra.mxu0 %v815
    %v817 = vand.u32 %v745, 4294901760
    %v818 = vsub.f32 %v745, %v817
    %819 = vmatmul.f32.gmra.mxu0 %v818
    %v820 = vpop.f32.mrf.mxu0
    %v821 = vadd.f32 %v797, %v820
    %822 = vdwg.mxu0
    %823 = vmatpush.msra.mxu0 0.0
    %824 = vmatpush.msra.mxu0 0.0
    %825 = vmatpush.msra.mxu0 0.0
    %826 = vmatpush.msra.mxu0 0.0
    %827 = vmatpush.msra.mxu0 0.0
    %828 = vmatpush.msra.mxu0 0.0
    %829 = vmatpush.msra.mxu0 0.0
    %830 = vmatpush.msra.mxu0 0.0
    %831 = vmatpush.msra.mxu0 0.0
    %832 = vmatpush.msra.mxu0 0.0
    %833 = vmatpush.msra.mxu0 0.0
    %834 = vmatpush.msra.mxu0 0.0
    %835 = vmatpush.msra.mxu0 0.0
    %836 = vmatpush.msra.mxu0 0.0
    %837 = vmatpush.msra.mxu0 0.0
    %v838 = vand.u32 %v742, 4294901760
    %839 = vmatpush.msra.mxu0 %v838
    %v840 = vand.u32 %v745, 4294901760
    %v841 = vsub.f32 %v745, %v840
    %v842 = vand.u32 %v841, 4294901760
    %843 = vmatmul.f32.gmra.mxu0 %v842
    %v844 = vpop.f32.mrf.mxu0
    %v845 = vadd.f32 %v821, %v844
    %846 = vdwg.mxu0
    %847 = vmatpush.msra.mxu0 0.0
    %848 = vmatpush.msra.mxu0 0.0
    %849 = vmatpush.msra.mxu0 0.0
    %850 = vmatpush.msra.mxu0 0.0
    %851 = vmatpush.msra.mxu0 0.0
    %852 = vmatpush.msra.mxu0 0.0
    %853 = vmatpush.msra.mxu0 0.0
    %854 = vmatpush.msra.mxu0 0.0
    %855 = vmatpush.msra.mxu0 0.0
    %856 = vmatpush.msra.mxu0 0.0
    %857 = vmatpush.msra.mxu0 0.0
    %858 = vmatpush.msra.mxu0 0.0
    %859 = vmatpush.msra.mxu0 0.0
    %860 = vmatpush.msra.mxu0 0.0
    %861 = vmatpush.msra.mxu0 0.0
    %v862 = vand.u32 %v742, 4294901760
    %v863 = vsub.f32 %v742, %v862
    %v864 = vand.u32 %v863, 4294901760
    %865 = vmatpush.msra.mxu0 %v864
    %v866 = vand.u32 %v745, 4294901760
    %867 = vmatmul.f32.gmra.mxu0 %v866
    %v868 = vpop.f32.mrf.mxu0
    %v869 = vadd.f32 %v845, %v868
    %870 = vdwg.mxu0
    %871 = vmatpush.msra.mxu0 0.0
    %872 = vmatpush.msra.mxu0 0.0
    %873 = vmatpush.msra.mxu0 0.0
    %874 = vmatpush.msra.mxu0 0.0
    %875 = vmatpush.msra.mxu0 0.0
    %876 = vmatpush.msra.mxu0 0.0
    %877 = vmatpush.msra.mxu0 0.0
    %878 = vmatpush.msra.mxu0 0.0
    %879 = vmatpush.msra.mxu0 0.0
    %880 = vmatpush.msra.mxu0 0.0
    %881 = vmatpush.msra.mxu0 0.0
    %882 = vmatpush.msra.mxu0 0.0
    %883 = vmatpush.msra.mxu0 0.0
    %884 = vmatpush.msra.mxu0 0.0
    %885 = vmatpush.msra.mxu0 0.0
    %v886 = vand.u32 %v742, 4294901760
    %887 = vmatpush.msra.mxu0 %v886
    %v888 = vand.u32 %v745, 4294901760
    %889 = vmatmul.f32.gmra.mxu0 %v888
    %v890 = vpop.f32.mrf.mxu0
    %v891 = vadd.f32 %v869, %v890
    %892 = vdwg.mxu0
    %893 = vrot.lane.b32.xlu0 %v332, 120
    %v894 = vpop.permute.xlu0 %893
    %896 = vxpose.xlu0.b32.start [1/16] %v894, 128
    %897 = vxpose.xlu0.b32.cont [2/16] 0.0, 128
    %898 = vxpose.xlu0.b32.cont [3/16] 0.0, 128
    %899 = vxpose.xlu0.b32.cont [4/16] 0.0, 128
    %900 = vxpose.xlu0.b32.cont [5/16] 0.0, 128
    %901 = vxpose.xlu0.b32.cont [6/16] 0.0, 128
    %902 = vxpose.xlu0.b32.cont [7/16] 0.0, 128
    %903 = vxpose.xlu0.b32.cont [8/16] 0.0, 128
    %904 = vxpose.xlu0.b32.cont [9/16] 0.0, 128
    %905 = vxpose.xlu0.b32.cont [10/16] 0.0, 128
    %906 = vxpose.xlu0.b32.cont [11/16] 0.0, 128
    %907 = vxpose.xlu0.b32.cont [12/16] 0.0, 128
    %908 = vxpose.xlu0.b32.cont [13/16] 0.0, 128
    %909 = vxpose.xlu0.b32.cont [14/16] 0.0, 128
    %910 = vxpose.xlu0.b32.cont [15/16] 0.0, 128
    %911 = vxpose.xlu0.b32.end [16/16] 0.0, 128
    %v912 = vpop.trf.xlu0
    %v913 = vpop.trf.xlu0
    %v914 = vpop.trf.xlu0
    %v915 = vpop.trf.xlu0
    %v916 = vpop.trf.xlu0
    %v917 = vpop.trf.xlu0
    %v918 = vpop.trf.xlu0
    %v919 = vpop.trf.xlu0
    %v920 = vpop.trf.xlu0
    %v921 = vpop.trf.xlu0
    %v922 = vpop.trf.xlu0
    %v923 = vpop.trf.xlu0
    %v924 = vpop.trf.xlu0
    %v925 = vpop.trf.xlu0
    %v926 = vpop.trf.xlu0
    %v927 = vpop.trf.xlu0
    %928 = vrot.lane.b32.xlu0 %v332, 56
    %v929 = vpop.permute.xlu0 %928
    %v932 = vsel %vm369, %v912, 0
    %934 = vmatpush.msra.mxu0 0.0
    %935 = vmatpush.msra.mxu0 0.0
    %936 = vmatpush.msra.mxu0 0.0
    %937 = vmatpush.msra.mxu0 0.0
    %938 = vmatpush.msra.mxu0 0.0
    %939 = vmatpush.msra.mxu0 0.0
    %940 = vmatpush.msra.mxu0 0.0
    %941 = vmatpush.msra.mxu0 0.0
    %942 = vmatpush.msra.mxu0 0.0
    %943 = vmatpush.msra.mxu0 0.0
    %944 = vmatpush.msra.mxu0 0.0
    %945 = vmatpush.msra.mxu0 0.0
    %946 = vmatpush.msra.mxu0 0.0
    %947 = vmatpush.msra.mxu0 0.0
    %948 = vmatpush.msra.mxu0 0.0
    %v949 = vand.u32 %v929, 4294901760
    %950 = vmatpush.msra.mxu0 %v949
    %v951 = vand.u32 %v932, 4294901760
    %v952 = vsub.f32 %v932, %v951
    %v953 = vand.u32 %v952, 4294901760
    %v954 = vsub.f32 %v952, %v953
    %v955 = vand.u32 %v954, 4294901760
    %956 = vmatmul.f32.gmra.mxu0 %v955
    %v957 = vpop.f32.mrf.mxu0
    %v958 = vadd.f32 0.0, %v957
    %959 = vdwg.mxu0
    %960 = vmatpush.msra.mxu0 0.0
    %961 = vmatpush.msra.mxu0 0.0
    %962 = vmatpush.msra.mxu0 0.0
    %963 = vmatpush.msra.mxu0 0.0
    %964 = vmatpush.msra.mxu0 0.0
    %965 = vmatpush.msra.mxu0 0.0
    %966 = vmatpush.msra.mxu0 0.0
    %967 = vmatpush.msra.mxu0 0.0
    %968 = vmatpush.msra.mxu0 0.0
    %969 = vmatpush.msra.mxu0 0.0
    %970 = vmatpush.msra.mxu0 0.0
    %971 = vmatpush.msra.mxu0 0.0
    %972 = vmatpush.msra.mxu0 0.0
    %973 = vmatpush.msra.mxu0 0.0
    %974 = vmatpush.msra.mxu0 0.0
    %v975 = vand.u32 %v929, 4294901760
    %v976 = vsub.f32 %v929, %v975
    %v977 = vand.u32 %v976, 4294901760
    %v978 = vsub.f32 %v976, %v977
    %v979 = vand.u32 %v978, 4294901760
    %980 = vmatpush.msra.mxu0 %v979
    %v981 = vand.u32 %v932, 4294901760
    %982 = vmatmul.f32.gmra.mxu0 %v981
    %v983 = vpop.f32.mrf.mxu0
    %v984 = vadd.f32 %v958, %v983
    %985 = vdwg.mxu0
    %986 = vmatpush.msra.mxu0 0.0
    %987 = vmatpush.msra.mxu0 0.0
    %988 = vmatpush.msra.mxu0 0.0
    %989 = vmatpush.msra.mxu0 0.0
    %990 = vmatpush.msra.mxu0 0.0
    %991 = vmatpush.msra.mxu0 0.0
    %992 = vmatpush.msra.mxu0 0.0
    %993 = vmatpush.msra.mxu0 0.0
    %994 = vmatpush.msra.mxu0 0.0
    %995 = vmatpush.msra.mxu0 0.0
    %996 = vmatpush.msra.mxu0 0.0
    %997 = vmatpush.msra.mxu0 0.0
    %998 = vmatpush.msra.mxu0 0.0
    %999 = vmatpush.msra.mxu0 0.0
    %1000 = vmatpush.msra.mxu0 0.0
    %v1001 = vand.u32 %v929, 4294901760
    %v1002 = vsub.f32 %v929, %v1001
    %1003 = vmatpush.msra.mxu0 %v1002
    %v1004 = vand.u32 %v932, 4294901760
    %v1005 = vsub.f32 %v932, %v1004
    %1006 = vmatmul.f32.gmra.mxu0 %v1005
    %v1007 = vpop.f32.mrf.mxu0
    %v1008 = vadd.f32 %v984, %v1007
    %1009 = vdwg.mxu0
    %1010 = vmatpush.msra.mxu0 0.0
    %1011 = vmatpush.msra.mxu0 0.0
    %1012 = vmatpush.msra.mxu0 0.0
    %1013 = vmatpush.msra.mxu0 0.0
    %1014 = vmatpush.msra.mxu0 0.0
    %1015 = vmatpush.msra.mxu0 0.0
    %1016 = vmatpush.msra.mxu0 0.0
    %1017 = vmatpush.msra.mxu0 0.0
    %1018 = vmatpush.msra.mxu0 0.0
    %1019 = vmatpush.msra.mxu0 0.0
    %1020 = vmatpush.msra.mxu0 0.0
    %1021 = vmatpush.msra.mxu0 0.0
    %1022 = vmatpush.msra.mxu0 0.0
    %1023 = vmatpush.msra.mxu0 0.0
    %1024 = vmatpush.msra.mxu0 0.0
    %v1025 = vand.u32 %v929, 4294901760
    %1026 = vmatpush.msra.mxu0 %v1025
    %v1027 = vand.u32 %v932, 4294901760
    %v1028 = vsub.f32 %v932, %v1027
    %v1029 = vand.u32 %v1028, 4294901760
    %1030 = vmatmul.f32.gmra.mxu0 %v1029
    %v1031 = vpop.f32.mrf.mxu0
    %v1032 = vadd.f32 %v1008, %v1031
    %1033 = vdwg.mxu0
    %1034 = vmatpush.msra.mxu0 0.0
    %1035 = vmatpush.msra.mxu0 0.0
    %1036 = vmatpush.msra.mxu0 0.0
    %1037 = vmatpush.msra.mxu0 0.0
    %1038 = vmatpush.msra.mxu0 0.0
    %1039 = vmatpush.msra.mxu0 0.0
    %1040 = vmatpush.msra.mxu0 0.0
    %1041 = vmatpush.msra.mxu0 0.0
    %1042 = vmatpush.msra.mxu0 0.0
    %1043 = vmatpush.msra.mxu0 0.0
    %1044 = vmatpush.msra.mxu0 0.0
    %1045 = vmatpush.msra.mxu0 0.0
    %1046 = vmatpush.msra.mxu0 0.0
    %1047 = vmatpush.msra.mxu0 0.0
    %1048 = vmatpush.msra.mxu0 0.0
    %v1049 = vand.u32 %v929, 4294901760
    %v1050 = vsub.f32 %v929, %v1049
    %v1051 = vand.u32 %v1050, 4294901760
    %1052 = vmatpush.msra.mxu0 %v1051
    %v1053 = vand.u32 %v932, 4294901760
    %1054 = vmatmul.f32.gmra.mxu0 %v1053
    %v1055 = vpop.f32.mrf.mxu0
    %v1056 = vadd.f32 %v1032, %v1055
    %1057 = vdwg.mxu0
    %1058 = vmatpush.msra.mxu0 0.0
    %1059 = vmatpush.msra.mxu0 0.0
    %1060 = vmatpush.msra.mxu0 0.0
    %1061 = vmatpush.msra.mxu0 0.0
    %1062 = vmatpush.msra.mxu0 0.0
    %1063 = vmatpush.msra.mxu0 0.0
    %1064 = vmatpush.msra.mxu0 0.0
    %1065 = vmatpush.msra.mxu0 0.0
    %1066 = vmatpush.msra.mxu0 0.0
    %1067 = vmatpush.msra.mxu0 0.0
    %1068 = vmatpush.msra.mxu0 0.0
    %1069 = vmatpush.msra.mxu0 0.0
    %1070 = vmatpush.msra.mxu0 0.0
    %1071 = vmatpush.msra.mxu0 0.0
    %1072 = vmatpush.msra.mxu0 0.0
    %v1073 = vand.u32 %v929, 4294901760
    %1074 = vmatpush.msra.mxu0 %v1073
    %v1075 = vand.u32 %v932, 4294901760
    %1076 = vmatmul.f32.gmra.mxu0 %v1075
    %v1077 = vpop.f32.mrf.mxu0
    %v1078 = vadd.f32 %v1056, %v1077
    %1079 = vdwg.mxu0
    %v1080 = vmul.f32 %v891, 0.125
    %v1081 = vmul.f32 %v1078, 0.125
    %1082 = vrot.lane.b32.xlu0 %v331, 116
    %v1083 = vpop.permute.xlu0 %1082
    %1085 = vxpose.xlu0.b32.start [1/16] %v1083, 128
    %1086 = vxpose.xlu0.b32.cont [2/16] 0.0, 128
    %1087 = vxpose.xlu0.b32.cont [3/16] 0.0, 128
    %1088 = vxpose.xlu0.b32.cont [4/16] 0.0, 128
    %1089 = vxpose.xlu0.b32.cont [5/16] 0.0, 128
    %1090 = vxpose.xlu0.b32.cont [6/16] 0.0, 128
    %1091 = vxpose.xlu0.b32.cont [7/16] 0.0, 128
    %1092 = vxpose.xlu0.b32.cont [8/16] 0.0, 128
    %1093 = vxpose.xlu0.b32.cont [9/16] 0.0, 128
    %1094 = vxpose.xlu0.b32.cont [10/16] 0.0, 128
    %1095 = vxpose.xlu0.b32.cont [11/16] 0.0, 128
    %1096 = vxpose.xlu0.b32.cont [12/16] 0.0, 128
    %1097 = vxpose.xlu0.b32.cont [13/16] 0.0, 128
    %1098 = vxpose.xlu0.b32.cont [14/16] 0.0, 128
    %1099 = vxpose.xlu0.b32.cont [15/16] 0.0, 128
    %1100 = vxpose.xlu0.b32.end [16/16] 0.0, 128
    %v1101 = vpop.trf.xlu0
    %v1102 = vpop.trf.xlu0
    %v1103 = vpop.trf.xlu0
    %v1104 = vpop.trf.xlu0
    %v1105 = vpop.trf.xlu0
    %v1106 = vpop.trf.xlu0
    %v1107 = vpop.trf.xlu0
    %v1108 = vpop.trf.xlu0
    %v1109 = vpop.trf.xlu0
    %v1110 = vpop.trf.xlu0
    %v1111 = vpop.trf.xlu0
    %v1112 = vpop.trf.xlu0
    %v1113 = vpop.trf.xlu0
    %v1114 = vpop.trf.xlu0
    %v1115 = vpop.trf.xlu0
    %v1116 = vpop.trf.xlu0
    %1117 = vrot.lane.b32.xlu0 %v331, 48
    %v1118 = vpop.permute.xlu0 %1117
    %v1121 = vsel %vm369, %v1101, 0
    %v1124 = vsel %vm369, %v1102, 0
    %1126 = vmatpush.msra.mxu0 0.0
    %1127 = vmatpush.msra.mxu0 0.0
    %1128 = vmatpush.msra.mxu0 0.0
    %1129 = vmatpush.msra.mxu0 0.0
    %1130 = vmatpush.msra.mxu0 0.0
    %1131 = vmatpush.msra.mxu0 0.0
    %1132 = vmatpush.msra.mxu0 0.0
    %1133 = vmatpush.msra.mxu0 0.0
    %1134 = vmatpush.msra.mxu0 0.0
    %1135 = vmatpush.msra.mxu0 0.0
    %1136 = vmatpush.msra.mxu0 0.0
    %1137 = vmatpush.msra.mxu0 0.0
    %1138 = vmatpush.msra.mxu0 0.0
    %1139 = vmatpush.msra.mxu0 0.0
    %1140 = vmatpush.msra.mxu0 0.0
    %v1141 = vand.u32 %v1118, 4294901760
    %1142 = vmatpush.msra.mxu0 %v1141
    %v1143 = vand.u32 %v1121, 4294901760
    %v1144 = vsub.f32 %v1121, %v1143
    %v1145 = vand.u32 %v1144, 4294901760
    %v1146 = vsub.f32 %v1144, %v1145
    %v1147 = vand.u32 %v1146, 4294901760
    %1148 = vmatmul.f32.gmra.mxu0 %v1147
    %v1149 = vpop.f32.mrf.mxu0
    %v1150 = vadd.f32 0.0, %v1149
    %v1151 = vand.u32 %v1124, 4294901760
    %v1152 = vsub.f32 %v1124, %v1151
    %v1153 = vand.u32 %v1152, 4294901760
    %v1154 = vsub.f32 %v1152, %v1153
    %v1155 = vand.u32 %v1154, 4294901760
    %1156 = vmatmul.f32.gmra.mxu0 %v1155
    %v1157 = vpop.f32.mrf.mxu0
    %v1158 = vadd.f32 0.0, %v1157
    %1159 = vdwg.mxu0
    %1160 = vmatpush.msra.mxu0 0.0
    %1161 = vmatpush.msra.mxu0 0.0
    %1162 = vmatpush.msra.mxu0 0.0
    %1163 = vmatpush.msra.mxu0 0.0
    %1164 = vmatpush.msra.mxu0 0.0
    %1165 = vmatpush.msra.mxu0 0.0
    %1166 = vmatpush.msra.mxu0 0.0
    %1167 = vmatpush.msra.mxu0 0.0
    %1168 = vmatpush.msra.mxu0 0.0
    %1169 = vmatpush.msra.mxu0 0.0
    %1170 = vmatpush.msra.mxu0 0.0
    %1171 = vmatpush.msra.mxu0 0.0
    %1172 = vmatpush.msra.mxu0 0.0
    %1173 = vmatpush.msra.mxu0 0.0
    %1174 = vmatpush.msra.mxu0 0.0
    %v1175 = vand.u32 %v1118, 4294901760
    %v1176 = vsub.f32 %v1118, %v1175
    %v1177 = vand.u32 %v1176, 4294901760
    %v1178 = vsub.f32 %v1176, %v1177
    %v1179 = vand.u32 %v1178, 4294901760
    %1180 = vmatpush.msra.mxu0 %v1179
    %v1181 = vand.u32 %v1121, 4294901760
    %1182 = vmatmul.f32.gmra.mxu0 %v1181
    %v1183 = vpop.f32.mrf.mxu0
    %v1184 = vadd.f32 %v1150, %v1183
    %v1185 = vand.u32 %v1124, 4294901760
    %1186 = vmatmul.f32.gmra.mxu0 %v1185
    %v1187 = vpop.f32.mrf.mxu0
    %v1188 = vadd.f32 %v1158, %v1187
    %1189 = vdwg.mxu0
    %1190 = vmatpush.msra.mxu0 0.0
    %1191 = vmatpush.msra.mxu0 0.0
    %1192 = vmatpush.msra.mxu0 0.0
    %1193 = vmatpush.msra.mxu0 0.0
    %1194 = vmatpush.msra.mxu0 0.0
    %1195 = vmatpush.msra.mxu0 0.0
    %1196 = vmatpush.msra.mxu0 0.0
    %1197 = vmatpush.msra.mxu0 0.0
    %1198 = vmatpush.msra.mxu0 0.0
    %1199 = vmatpush.msra.mxu0 0.0
    %1200 = vmatpush.msra.mxu0 0.0
    %1201 = vmatpush.msra.mxu0 0.0
    %1202 = vmatpush.msra.mxu0 0.0
    %1203 = vmatpush.msra.mxu0 0.0
    %1204 = vmatpush.msra.mxu0 0.0
    %v1205 = vand.u32 %v1118, 4294901760
    %v1206 = vsub.f32 %v1118, %v1205
    %1207 = vmatpush.msra.mxu0 %v1206
    %v1208 = vand.u32 %v1121, 4294901760
    %v1209 = vsub.f32 %v1121, %v1208
    %1210 = vmatmul.f32.gmra.mxu0 %v1209
    %v1211 = vpop.f32.mrf.mxu0
    %v1212 = vadd.f32 %v1184, %v1211
    %v1213 = vand.u32 %v1124, 4294901760
    %v1214 = vsub.f32 %v1124, %v1213
    %1215 = vmatmul.f32.gmra.mxu0 %v1214
    %v1216 = vpop.f32.mrf.mxu0
    %v1217 = vadd.f32 %v1188, %v1216
    %1218 = vdwg.mxu0
    %1219 = vmatpush.msra.mxu0 0.0
    %1220 = vmatpush.msra.mxu0 0.0
    %1221 = vmatpush.msra.mxu0 0.0
    %1222 = vmatpush.msra.mxu0 0.0
    %1223 = vmatpush.msra.mxu0 0.0
    %1224 = vmatpush.msra.mxu0 0.0
    %1225 = vmatpush.msra.mxu0 0.0
    %1226 = vmatpush.msra.mxu0 0.0
    %1227 = vmatpush.msra.mxu0 0.0
    %1228 = vmatpush.msra.mxu0 0.0
    %1229 = vmatpush.msra.mxu0 0.0
    %1230 = vmatpush.msra.mxu0 0.0
    %1231 = vmatpush.msra.mxu0 0.0
    %1232 = vmatpush.msra.mxu0 0.0
    %1233 = vmatpush.msra.mxu0 0.0
    %v1234 = vand.u32 %v1118, 4294901760
    %1235 = vmatpush.msra.mxu0 %v1234
    %v1236 = vand.u32 %v1121, 4294901760
    %v1237 = vsub.f32 %v1121, %v1236
    %v1238 = vand.u32 %v1237, 4294901760
    %1239 = vmatmul.f32.gmra.mxu0 %v1238
    %v1240 = vpop.f32.mrf.mxu0
    %v1241 = vadd.f32 %v1212, %v1240
    %v1242 = vand.u32 %v1124, 4294901760
    %v1243 = vsub.f32 %v1124, %v1242
    %v1244 = vand.u32 %v1243, 4294901760
    %1245 = vmatmul.f32.gmra.mxu0 %v1244
    %v1246 = vpop.f32.mrf.mxu0
    %v1247 = vadd.f32 %v1217, %v1246
    %1248 = vdwg.mxu0
    %1249 = vmatpush.msra.mxu0 0.0
    %1250 = vmatpush.msra.mxu0 0.0
    %1251 = vmatpush.msra.mxu0 0.0
    %1252 = vmatpush.msra.mxu0 0.0
    %1253 = vmatpush.msra.mxu0 0.0
    %1254 = vmatpush.msra.mxu0 0.0
    %1255 = vmatpush.msra.mxu0 0.0
    %1256 = vmatpush.msra.mxu0 0.0
    %1257 = vmatpush.msra.mxu0 0.0
    %1258 = vmatpush.msra.mxu0 0.0
    %1259 = vmatpush.msra.mxu0 0.0
    %1260 = vmatpush.msra.mxu0 0.0
    %1261 = vmatpush.msra.mxu0 0.0
    %1262 = vmatpush.msra.mxu0 0.0
    %1263 = vmatpush.msra.mxu0 0.0
    %v1264 = vand.u32 %v1118, 4294901760
    %v1265 = vsub.f32 %v1118, %v1264
    %v1266 = vand.u32 %v1265, 4294901760
    %1267 = vmatpush.msra.mxu0 %v1266
    %v1268 = vand.u32 %v1121, 4294901760
    %1269 = vmatmul.f32.gmra.mxu0 %v1268
    %v1270 = vpop.f32.mrf.mxu0
    %v1271 = vadd.f32 %v1241, %v1270
    %v1272 = vand.u32 %v1124, 4294901760
    %1273 = vmatmul.f32.gmra.mxu0 %v1272
    %v1274 = vpop.f32.mrf.mxu0
    %v1275 = vadd.f32 %v1247, %v1274
    %1276 = vdwg.mxu0
    %1277 = vmatpush.msra.mxu0 0.0
    %1278 = vmatpush.msra.mxu0 0.0
    %1279 = vmatpush.msra.mxu0 0.0
    %1280 = vmatpush.msra.mxu0 0.0
    %1281 = vmatpush.msra.mxu0 0.0
    %1282 = vmatpush.msra.mxu0 0.0
    %1283 = vmatpush.msra.mxu0 0.0
    %1284 = vmatpush.msra.mxu0 0.0
    %1285 = vmatpush.msra.mxu0 0.0
    %1286 = vmatpush.msra.mxu0 0.0
    %1287 = vmatpush.msra.mxu0 0.0
    %1288 = vmatpush.msra.mxu0 0.0
    %1289 = vmatpush.msra.mxu0 0.0
    %1290 = vmatpush.msra.mxu0 0.0
    %1291 = vmatpush.msra.mxu0 0.0
    %v1292 = vand.u32 %v1118, 4294901760
    %1293 = vmatpush.msra.mxu0 %v1292
    %v1294 = vand.u32 %v1121, 4294901760
    %1295 = vmatmul.f32.gmra.mxu0 %v1294
    %v1296 = vpop.f32.mrf.mxu0
    %v1297 = vadd.f32 %v1271, %v1296
    %v1298 = vand.u32 %v1124, 4294901760
    %1299 = vmatmul.f32.gmra.mxu0 %v1298
    %v1300 = vpop.f32.mrf.mxu0
    %v1301 = vadd.f32 %v1275, %v1300
    %1302 = vdwg.mxu0
    %1303 = vrot.lane.b32.xlu0 %v332, 116
    %v1304 = vpop.permute.xlu0 %1303
    %1306 = vxpose.xlu0.b32.start [1/16] %v1304, 128
    %1307 = vxpose.xlu0.b32.cont [2/16] 0.0, 128
    %1308 = vxpose.xlu0.b32.cont [3/16] 0.0, 128
    %1309 = vxpose.xlu0.b32.cont [4/16] 0.0, 128
    %1310 = vxpose.xlu0.b32.cont [5/16] 0.0, 128
    %1311 = vxpose.xlu0.b32.cont [6/16] 0.0, 128
    %1312 = vxpose.xlu0.b32.cont [7/16] 0.0, 128
    %1313 = vxpose.xlu0.b32.cont [8/16] 0.0, 128
    %1314 = vxpose.xlu0.b32.cont [9/16] 0.0, 128
    %1315 = vxpose.xlu0.b32.cont [10/16] 0.0, 128
    %1316 = vxpose.xlu0.b32.cont [11/16] 0.0, 128
    %1317 = vxpose.xlu0.b32.cont [12/16] 0.0, 128
    %1318 = vxpose.xlu0.b32.cont [13/16] 0.0, 128
    %1319 = vxpose.xlu0.b32.cont [14/16] 0.0, 128
    %1320 = vxpose.xlu0.b32.cont [15/16] 0.0, 128
    %1321 = vxpose.xlu0.b32.end [16/16] 0.0, 128
    %v1322 = vpop.trf.xlu0
    %v1323 = vpop.trf.xlu0
    %v1324 = vpop.trf.xlu0
    %v1325 = vpop.trf.xlu0
    %v1326 = vpop.trf.xlu0
    %v1327 = vpop.trf.xlu0
    %v1328 = vpop.trf.xlu0
    %v1329 = vpop.trf.xlu0
    %v1330 = vpop.trf.xlu0
    %v1331 = vpop.trf.xlu0
    %v1332 = vpop.trf.xlu0
    %v1333 = vpop.trf.xlu0
    %v1334 = vpop.trf.xlu0
    %v1335 = vpop.trf.xlu0
    %v1336 = vpop.trf.xlu0
    %v1337 = vpop.trf.xlu0
    %1338 = vrot.lane.b32.xlu0 %v332, 48
    %v1339 = vpop.permute.xlu0 %1338
    %v1342 = vsel %vm369, %v1322, 0
    %v1345 = vsel %vm369, %v1323, 0
    %1347 = vmatpush.msra.mxu0 0.0
    %1348 = vmatpush.msra.mxu0 0.0
    %1349 = vmatpush.msra.mxu0 0.0
    %1350 = vmatpush.msra.mxu0 0.0
    %1351 = vmatpush.msra.mxu0 0.0
    %1352 = vmatpush.msra.mxu0 0.0
    %1353 = vmatpush.msra.mxu0 0.0
    %1354 = vmatpush.msra.mxu0 0.0
    %1355 = vmatpush.msra.mxu0 0.0
    %1356 = vmatpush.msra.mxu0 0.0
    %1357 = vmatpush.msra.mxu0 0.0
    %1358 = vmatpush.msra.mxu0 0.0
    %1359 = vmatpush.msra.mxu0 0.0
    %1360 = vmatpush.msra.mxu0 0.0
    %1361 = vmatpush.msra.mxu0 0.0
    %v1362 = vand.u32 %v1339, 4294901760
    %1363 = vmatpush.msra.mxu0 %v1362
    %v1364 = vand.u32 %v1342, 4294901760
    %v1365 = vsub.f32 %v1342, %v1364
    %v1366 = vand.u32 %v1365, 4294901760
    %v1367 = vsub.f32 %v1365, %v1366
    %v1368 = vand.u32 %v1367, 4294901760
    %1369 = vmatmul.f32.gmra.mxu0 %v1368
    %v1370 = vpop.f32.mrf.mxu0
    %v1371 = vadd.f32 0.0, %v1370
    %v1372 = vand.u32 %v1345, 4294901760
    %v1373 = vsub.f32 %v1345, %v1372
    %v1374 = vand.u32 %v1373, 4294901760
    %v1375 = vsub.f32 %v1373, %v1374
    %v1376 = vand.u32 %v1375, 4294901760
    %1377 = vmatmul.f32.gmra.mxu0 %v1376
    %v1378 = vpop.f32.mrf.mxu0
    %v1379 = vadd.f32 0.0, %v1378
    %1380 = vdwg.mxu0
    %1381 = vmatpush.msra.mxu0 0.0
    %1382 = vmatpush.msra.mxu0 0.0
    %1383 = vmatpush.msra.mxu0 0.0
    %1384 = vmatpush.msra.mxu0 0.0
    %1385 = vmatpush.msra.mxu0 0.0
    %1386 = vmatpush.msra.mxu0 0.0
    %1387 = vmatpush.msra.mxu0 0.0
    %1388 = vmatpush.msra.mxu0 0.0
    %1389 = vmatpush.msra.mxu0 0.0
    %1390 = vmatpush.msra.mxu0 0.0
    %1391 = vmatpush.msra.mxu0 0.0
    %1392 = vmatpush.msra.mxu0 0.0
    %1393 = vmatpush.msra.mxu0 0.0
    %1394 = vmatpush.msra.mxu0 0.0
    %1395 = vmatpush.msra.mxu0 0.0
    %v1396 = vand.u32 %v1339, 4294901760
    %v1397 = vsub.f32 %v1339, %v1396
    %v1398 = vand.u32 %v1397, 4294901760
    %v1399 = vsub.f32 %v1397, %v1398
    %v1400 = vand.u32 %v1399, 4294901760
    %1401 = vmatpush.msra.mxu0 %v1400
    %v1402 = vand.u32 %v1342, 4294901760
    %1403 = vmatmul.f32.gmra.mxu0 %v1402
    %v1404 = vpop.f32.mrf.mxu0
    %v1405 = vadd.f32 %v1371, %v1404
    %v1406 = vand.u32 %v1345, 4294901760
    %1407 = vmatmul.f32.gmra.mxu0 %v1406
    %v1408 = vpop.f32.mrf.mxu0
    %v1409 = vadd.f32 %v1379, %v1408
    %1410 = vdwg.mxu0
    %1411 = vmatpush.msra.mxu0 0.0
    %1412 = vmatpush.msra.mxu0 0.0
    %1413 = vmatpush.msra.mxu0 0.0
    %1414 = vmatpush.msra.mxu0 0.0
    %1415 = vmatpush.msra.mxu0 0.0
    %1416 = vmatpush.msra.mxu0 0.0
    %1417 = vmatpush.msra.mxu0 0.0
    %1418 = vmatpush.msra.mxu0 0.0
    %1419 = vmatpush.msra.mxu0 0.0
    %1420 = vmatpush.msra.mxu0 0.0
    %1421 = vmatpush.msra.mxu0 0.0
    %1422 = vmatpush.msra.mxu0 0.0
    %1423 = vmatpush.msra.mxu0 0.0
    %1424 = vmatpush.msra.mxu0 0.0
    %1425 = vmatpush.msra.mxu0 0.0
    %v1426 = vand.u32 %v1339, 4294901760
    %v1427 = vsub.f32 %v1339, %v1426
    %1428 = vmatpush.msra.mxu0 %v1427
    %v1429 = vand.u32 %v1342, 4294901760
    %v1430 = vsub.f32 %v1342, %v1429
    %1431 = vmatmul.f32.gmra.mxu0 %v1430
    %v1432 = vpop.f32.mrf.mxu0
    %v1433 = vadd.f32 %v1405, %v1432
    %v1434 = vand.u32 %v1345, 4294901760
    %v1435 = vsub.f32 %v1345, %v1434
    %1436 = vmatmul.f32.gmra.mxu0 %v1435
    %v1437 = vpop.f32.mrf.mxu0
    %v1438 = vadd.f32 %v1409, %v1437
    %1439 = vdwg.mxu0
    %1440 = vmatpush.msra.mxu0 0.0
    %1441 = vmatpush.msra.mxu0 0.0
    %1442 = vmatpush.msra.mxu0 0.0
    %1443 = vmatpush.msra.mxu0 0.0
    %1444 = vmatpush.msra.mxu0 0.0
    %1445 = vmatpush.msra.mxu0 0.0
    %1446 = vmatpush.msra.mxu0 0.0
    %1447 = vmatpush.msra.mxu0 0.0
    %1448 = vmatpush.msra.mxu0 0.0
    %1449 = vmatpush.msra.mxu0 0.0
    %1450 = vmatpush.msra.mxu0 0.0
    %1451 = vmatpush.msra.mxu0 0.0
    %1452 = vmatpush.msra.mxu0 0.0
    %1453 = vmatpush.msra.mxu0 0.0
    %1454 = vmatpush.msra.mxu0 0.0
    %v1455 = vand.u32 %v1339, 4294901760
    %1456 = vmatpush.msra.mxu0 %v1455
    %v1457 = vand.u32 %v1342, 4294901760
    %v1458 = vsub.f32 %v1342, %v1457
    %v1459 = vand.u32 %v1458, 4294901760
    %1460 = vmatmul.f32.gmra.mxu0 %v1459
    %v1461 = vpop.f32.mrf.mxu0
    %v1462 = vadd.f32 %v1433, %v1461
    %v1463 = vand.u32 %v1345, 4294901760
    %v1464 = vsub.f32 %v1345, %v1463
    %v1465 = vand.u32 %v1464, 4294901760
    %1466 = vmatmul.f32.gmra.mxu0 %v1465
    %v1467 = vpop.f32.mrf.mxu0
    %v1468 = vadd.f32 %v1438, %v1467
    %1469 = vdwg.mxu0
    %1470 = vmatpush.msra.mxu0 0.0
    %1471 = vmatpush.msra.mxu0 0.0
    %1472 = vmatpush.msra.mxu0 0.0
    %1473 = vmatpush.msra.mxu0 0.0
    %1474 = vmatpush.msra.mxu0 0.0
    %1475 = vmatpush.msra.mxu0 0.0
    %1476 = vmatpush.msra.mxu0 0.0
    %1477 = vmatpush.msra.mxu0 0.0
    %1478 = vmatpush.msra.mxu0 0.0
    %1479 = vmatpush.msra.mxu0 0.0
    %1480 = vmatpush.msra.mxu0 0.0
    %1481 = vmatpush.msra.mxu0 0.0
    %1482 = vmatpush.msra.mxu0 0.0
    %1483 = vmatpush.msra.mxu0 0.0
    %1484 = vmatpush.msra.mxu0 0.0
    %v1485 = vand.u32 %v1339, 4294901760
    %v1486 = vsub.f32 %v1339, %v1485
    %v1487 = vand.u32 %v1486, 4294901760
    %1488 = vmatpush.msra.mxu0 %v1487
    %v1489 = vand.u32 %v1342, 4294901760
    %1490 = vmatmul.f32.gmra.mxu0 %v1489
    %v1491 = vpop.f32.mrf.mxu0
    %v1492 = vadd.f32 %v1462, %v1491
    %v1493 = vand.u32 %v1345, 4294901760
    %1494 = vmatmul.f32.gmra.mxu0 %v1493
    %v1495 = vpop.f32.mrf.mxu0
    %v1496 = vadd.f32 %v1468, %v1495
    %1497 = vdwg.mxu0
    %1498 = vmatpush.msra.mxu0 0.0
    %1499 = vmatpush.msra.mxu0 0.0
    %1500 = vmatpush.msra.mxu0 0.0
    %1501 = vmatpush.msra.mxu0 0.0
    %1502 = vmatpush.msra.mxu0 0.0
    %1503 = vmatpush.msra.mxu0 0.0
    %1504 = vmatpush.msra.mxu0 0.0
    %1505 = vmatpush.msra.mxu0 0.0
    %1506 = vmatpush.msra.mxu0 0.0
    %1507 = vmatpush.msra.mxu0 0.0
    %1508 = vmatpush.msra.mxu0 0.0
    %1509 = vmatpush.msra.mxu0 0.0
    %1510 = vmatpush.msra.mxu0 0.0
    %1511 = vmatpush.msra.mxu0 0.0
    %1512 = vmatpush.msra.mxu0 0.0
    %v1513 = vand.u32 %v1339, 4294901760
    %1514 = vmatpush.msra.mxu0 %v1513
    %v1515 = vand.u32 %v1342, 4294901760
    %1516 = vmatmul.f32.gmra.mxu0 %v1515
    %v1517 = vpop.f32.mrf.mxu0
    %v1518 = vadd.f32 %v1492, %v1517
    %v1519 = vand.u32 %v1345, 4294901760
    %1520 = vmatmul.f32.gmra.mxu0 %v1519
    %v1521 = vpop.f32.mrf.mxu0
    %v1522 = vadd.f32 %v1496, %v1521
    %1523 = vdwg.mxu0
    %v1524 = vmul.f32 %v1297, 0.125
    %v1525 = vmul.f32 %v1301, 0.125
    %v1526 = vmul.f32 %v1518, 0.125
    %v1527 = vmul.f32 %v1522, 0.125
    %vm1528 = vcmask 31744
    %v1530 = vsel %vm1528, %v1524, 0
    %v1533 = vsel %vm1528, %v1525, 0
    %vm1535 = vcmask 1043456
    %v1537 = vsel %vm1535, %v1080, 0
    %1539 = vmatpush.msra.mxu0 0.0
    %1540 = vmatpush.msra.mxu0 0.0
    %1541 = vmatpush.msra.mxu0 0.0
    %1542 = vmatpush.msra.mxu0 0.0
    %1543 = vmatpush.msra.mxu0 0.0
    %1544 = vmatpush.msra.mxu0 0.0
    %1545 = vmatpush.msra.mxu0 0.0
    %1546 = vmatpush.msra.mxu0 0.0
    %1547 = vmatpush.msra.mxu0 0.0
    %1548 = vmatpush.msra.mxu0 0.0
    %1549 = vmatpush.msra.mxu0 0.0
    %1550 = vmatpush.msra.mxu0 0.0
    %1551 = vmatpush.msra.mxu0 0.0
    %1552 = vmatpush.msra.mxu0 0.0
    %1553 = vmatpush.msra.mxu0 0.0
    %v1554 = vand.u32 %v1537, 4294901760
    %1555 = vmatpush.msra.mxu0 %v1554
    %v1556 = vand.u32 %v1530, 4294901760
    %v1557 = vsub.f32 %v1530, %v1556
    %v1558 = vand.u32 %v1557, 4294901760
    %v1559 = vsub.f32 %v1557, %v1558
    %v1560 = vand.u32 %v1559, 4294901760
    %1561 = vmatmul.f32.gmra.mxu0 %v1560
    %v1562 = vpop.f32.mrf.mxu0
    %v1563 = vadd.f32 0.0, %v1562
    %v1564 = vand.u32 %v1533, 4294901760
    %v1565 = vsub.f32 %v1533, %v1564
    %v1566 = vand.u32 %v1565, 4294901760
    %v1567 = vsub.f32 %v1565, %v1566
    %v1568 = vand.u32 %v1567, 4294901760
    %1569 = vmatmul.f32.gmra.mxu0 %v1568
    %v1570 = vpop.f32.mrf.mxu0
    %v1571 = vadd.f32 0.0, %v1570
    %1572 = vdwg.mxu0
    %1573 = vmatpush.msra.mxu0 0.0
    %1574 = vmatpush.msra.mxu0 0.0
    %1575 = vmatpush.msra.mxu0 0.0
    %1576 = vmatpush.msra.mxu0 0.0
    %1577 = vmatpush.msra.mxu0 0.0
    %1578 = vmatpush.msra.mxu0 0.0
    %1579 = vmatpush.msra.mxu0 0.0
    %1580 = vmatpush.msra.mxu0 0.0
    %1581 = vmatpush.msra.mxu0 0.0
    %1582 = vmatpush.msra.mxu0 0.0
    %1583 = vmatpush.msra.mxu0 0.0
    %1584 = vmatpush.msra.mxu0 0.0
    %1585 = vmatpush.msra.mxu0 0.0
    %1586 = vmatpush.msra.mxu0 0.0
    %1587 = vmatpush.msra.mxu0 0.0
    %v1588 = vand.u32 %v1537, 4294901760
    %v1589 = vsub.f32 %v1537, %v1588
    %v1590 = vand.u32 %v1589, 4294901760
    %v1591 = vsub.f32 %v1589, %v1590
    %v1592 = vand.u32 %v1591, 4294901760
    %1593 = vmatpush.msra.mxu0 %v1592
    %v1594 = vand.u32 %v1530, 4294901760
    %1595 = vmatmul.f32.gmra.mxu0 %v1594
    %v1596 = vpop.f32.mrf.mxu0
    %v1597 = vadd.f32 %v1563, %v1596
    %v1598 = vand.u32 %v1533, 4294901760
    %1599 = vmatmul.f32.gmra.mxu0 %v1598
    %v1600 = vpop.f32.mrf.mxu0
    %v1601 = vadd.f32 %v1571, %v1600
    %1602 = vdwg.mxu0
    %1603 = vmatpush.msra.mxu0 0.0
    %1604 = vmatpush.msra.mxu0 0.0
    %1605 = vmatpush.msra.mxu0 0.0
    %1606 = vmatpush.msra.mxu0 0.0
    %1607 = vmatpush.msra.mxu0 0.0
    %1608 = vmatpush.msra.mxu0 0.0
    %1609 = vmatpush.msra.mxu0 0.0
    %1610 = vmatpush.msra.mxu0 0.0
    %1611 = vmatpush.msra.mxu0 0.0
    %1612 = vmatpush.msra.mxu0 0.0
    %1613 = vmatpush.msra.mxu0 0.0
    %1614 = vmatpush.msra.mxu0 0.0
    %1615 = vmatpush.msra.mxu0 0.0
    %1616 = vmatpush.msra.mxu0 0.0
    %1617 = vmatpush.msra.mxu0 0.0
    %v1618 = vand.u32 %v1537, 4294901760
    %v1619 = vsub.f32 %v1537, %v1618
    %1620 = vmatpush.msra.mxu0 %v1619
    %v1621 = vand.u32 %v1530, 4294901760
    %v1622 = vsub.f32 %v1530, %v1621
    %1623 = vmatmul.f32.gmra.mxu0 %v1622
    %v1624 = vpop.f32.mrf.mxu0
    %v1625 = vadd.f32 %v1597, %v1624
    %v1626 = vand.u32 %v1533, 4294901760
    %v1627 = vsub.f32 %v1533, %v1626
    %1628 = vmatmul.f32.gmra.mxu0 %v1627
    %v1629 = vpop.f32.mrf.mxu0
    %v1630 = vadd.f32 %v1601, %v1629
    %1631 = vdwg.mxu0
    %1632 = vmatpush.msra.mxu0 0.0
    %1633 = vmatpush.msra.mxu0 0.0
    %1634 = vmatpush.msra.mxu0 0.0
    %1635 = vmatpush.msra.mxu0 0.0
    %1636 = vmatpush.msra.mxu0 0.0
    %1637 = vmatpush.msra.mxu0 0.0
    %1638 = vmatpush.msra.mxu0 0.0
    %1639 = vmatpush.msra.mxu0 0.0
    %1640 = vmatpush.msra.mxu0 0.0
    %1641 = vmatpush.msra.mxu0 0.0
    %1642 = vmatpush.msra.mxu0 0.0
    %1643 = vmatpush.msra.mxu0 0.0
    %1644 = vmatpush.msra.mxu0 0.0
    %1645 = vmatpush.msra.mxu0 0.0
    %1646 = vmatpush.msra.mxu0 0.0
    %v1647 = vand.u32 %v1537, 4294901760
    %1648 = vmatpush.msra.mxu0 %v1647
    %v1649 = vand.u32 %v1530, 4294901760
    %v1650 = vsub.f32 %v1530, %v1649
    %v1651 = vand.u32 %v1650, 4294901760
    %1652 = vmatmul.f32.gmra.mxu0 %v1651
    %v1653 = vpop.f32.mrf.mxu0
    %v1654 = vadd.f32 %v1625, %v1653
    %v1655 = vand.u32 %v1533, 4294901760
    %v1656 = vsub.f32 %v1533, %v1655
    %v1657 = vand.u32 %v1656, 4294901760
    %1658 = vmatmul.f32.gmra.mxu0 %v1657
    %v1659 = vpop.f32.mrf.mxu0
    %v1660 = vadd.f32 %v1630, %v1659
    %1661 = vdwg.mxu0
    %1662 = vmatpush.msra.mxu0 0.0
    %1663 = vmatpush.msra.mxu0 0.0
    %1664 = vmatpush.msra.mxu0 0.0
    %1665 = vmatpush.msra.mxu0 0.0
    %1666 = vmatpush.msra.mxu0 0.0
    %1667 = vmatpush.msra.mxu0 0.0
    %1668 = vmatpush.msra.mxu0 0.0
    %1669 = vmatpush.msra.mxu0 0.0
    %1670 = vmatpush.msra.mxu0 0.0
    %1671 = vmatpush.msra.mxu0 0.0
    %1672 = vmatpush.msra.mxu0 0.0
    %1673 = vmatpush.msra.mxu0 0.0
    %1674 = vmatpush.msra.mxu0 0.0
    %1675 = vmatpush.msra.mxu0 0.0
    %1676 = vmatpush.msra.mxu0 0.0
    %v1677 = vand.u32 %v1537, 4294901760
    %v1678 = vsub.f32 %v1537, %v1677
    %v1679 = vand.u32 %v1678, 4294901760
    %1680 = vmatpush.msra.mxu0 %v1679
    %v1681 = vand.u32 %v1530, 4294901760
    %1682 = vmatmul.f32.gmra.mxu0 %v1681
    %v1683 = vpop.f32.mrf.mxu0
    %v1684 = vadd.f32 %v1654, %v1683
    %v1685 = vand.u32 %v1533, 4294901760
    %1686 = vmatmul.f32.gmra.mxu0 %v1685
    %v1687 = vpop.f32.mrf.mxu0
    %v1688 = vadd.f32 %v1660, %v1687
    %1689 = vdwg.mxu0
    %1690 = vmatpush.msra.mxu0 0.0
    %1691 = vmatpush.msra.mxu0 0.0
    %1692 = vmatpush.msra.mxu0 0.0
    %1693 = vmatpush.msra.mxu0 0.0
    %1694 = vmatpush.msra.mxu0 0.0
    %1695 = vmatpush.msra.mxu0 0.0
    %1696 = vmatpush.msra.mxu0 0.0
    %1697 = vmatpush.msra.mxu0 0.0
    %1698 = vmatpush.msra.mxu0 0.0
    %1699 = vmatpush.msra.mxu0 0.0
    %1700 = vmatpush.msra.mxu0 0.0
    %1701 = vmatpush.msra.mxu0 0.0
    %1702 = vmatpush.msra.mxu0 0.0
    %1703 = vmatpush.msra.mxu0 0.0
    %1704 = vmatpush.msra.mxu0 0.0
    %v1705 = vand.u32 %v1537, 4294901760
    %1706 = vmatpush.msra.mxu0 %v1705
    %v1707 = vand.u32 %v1530, 4294901760
    %1708 = vmatmul.f32.gmra.mxu0 %v1707
    %v1709 = vpop.f32.mrf.mxu0
    %v1710 = vadd.f32 %v1684, %v1709
    %v1711 = vand.u32 %v1533, 4294901760
    %1712 = vmatmul.f32.gmra.mxu0 %v1711
    %v1713 = vpop.f32.mrf.mxu0
    %v1714 = vadd.f32 %v1688, %v1713
    %1715 = vdwg.mxu0
    %v1717 = vsel %vm1528, %v1526, 0
    %v1720 = vsel %vm1528, %v1527, 0
    %v1723 = vsel %vm1535, %v1081, 0
    %1725 = vmatpush.msra.mxu0 0.0
    %1726 = vmatpush.msra.mxu0 0.0
    %1727 = vmatpush.msra.mxu0 0.0
    %1728 = vmatpush.msra.mxu0 0.0
    %1729 = vmatpush.msra.mxu0 0.0
    %1730 = vmatpush.msra.mxu0 0.0
    %1731 = vmatpush.msra.mxu0 0.0
    %1732 = vmatpush.msra.mxu0 0.0
    %1733 = vmatpush.msra.mxu0 0.0
    %1734 = vmatpush.msra.mxu0 0.0
    %1735 = vmatpush.msra.mxu0 0.0
    %1736 = vmatpush.msra.mxu0 0.0
    %1737 = vmatpush.msra.mxu0 0.0
    %1738 = vmatpush.msra.mxu0 0.0
    %1739 = vmatpush.msra.mxu0 0.0
    %v1740 = vand.u32 %v1723, 4294901760
    %1741 = vmatpush.msra.mxu0 %v1740
    %v1742 = vand.u32 %v1717, 4294901760
    %v1743 = vsub.f32 %v1717, %v1742
    %v1744 = vand.u32 %v1743, 4294901760
    %v1745 = vsub.f32 %v1743, %v1744
    %v1746 = vand.u32 %v1745, 4294901760
    %1747 = vmatmul.f32.gmra.mxu0 %v1746
    %v1748 = vpop.f32.mrf.mxu0
    %v1749 = vadd.f32 0.0, %v1748
    %v1750 = vand.u32 %v1720, 4294901760
    %v1751 = vsub.f32 %v1720, %v1750
    %v1752 = vand.u32 %v1751, 4294901760
    %v1753 = vsub.f32 %v1751, %v1752
    %v1754 = vand.u32 %v1753, 4294901760
    %1755 = vmatmul.f32.gmra.mxu0 %v1754
    %v1756 = vpop.f32.mrf.mxu0
    %v1757 = vadd.f32 0.0, %v1756
    %1758 = vdwg.mxu0
    %1759 = vmatpush.msra.mxu0 0.0
    %1760 = vmatpush.msra.mxu0 0.0
    %1761 = vmatpush.msra.mxu0 0.0
    %1762 = vmatpush.msra.mxu0 0.0
    %1763 = vmatpush.msra.mxu0 0.0
    %1764 = vmatpush.msra.mxu0 0.0
    %1765 = vmatpush.msra.mxu0 0.0
    %1766 = vmatpush.msra.mxu0 0.0
    %1767 = vmatpush.msra.mxu0 0.0
    %1768 = vmatpush.msra.mxu0 0.0
    %1769 = vmatpush.msra.mxu0 0.0
    %1770 = vmatpush.msra.mxu0 0.0
    %1771 = vmatpush.msra.mxu0 0.0
    %1772 = vmatpush.msra.mxu0 0.0
    %1773 = vmatpush.msra.mxu0 0.0
    %v1774 = vand.u32 %v1723, 4294901760
    %v1775 = vsub.f32 %v1723, %v1774
    %v1776 = vand.u32 %v1775, 4294901760
    %v1777 = vsub.f32 %v1775, %v1776
    %v1778 = vand.u32 %v1777, 4294901760
    %1779 = vmatpush.msra.mxu0 %v1778
    %v1780 = vand.u32 %v1717, 4294901760
    %1781 = vmatmul.f32.gmra.mxu0 %v1780
    %v1782 = vpop.f32.mrf.mxu0
    %v1783 = vadd.f32 %v1749, %v1782
    %v1784 = vand.u32 %v1720, 4294901760
    %1785 = vmatmul.f32.gmra.mxu0 %v1784
    %v1786 = vpop.f32.mrf.mxu0
    %v1787 = vadd.f32 %v1757, %v1786
    %1788 = vdwg.mxu0
    %1789 = vmatpush.msra.mxu0 0.0
    %1790 = vmatpush.msra.mxu0 0.0
    %1791 = vmatpush.msra.mxu0 0.0
    %1792 = vmatpush.msra.mxu0 0.0
    %1793 = vmatpush.msra.mxu0 0.0
    %1794 = vmatpush.msra.mxu0 0.0
    %1795 = vmatpush.msra.mxu0 0.0
    %1796 = vmatpush.msra.mxu0 0.0
    %1797 = vmatpush.msra.mxu0 0.0
    %1798 = vmatpush.msra.mxu0 0.0
    %1799 = vmatpush.msra.mxu0 0.0
    %1800 = vmatpush.msra.mxu0 0.0
    %1801 = vmatpush.msra.mxu0 0.0
    %1802 = vmatpush.msra.mxu0 0.0
    %1803 = vmatpush.msra.mxu0 0.0
    %v1804 = vand.u32 %v1723, 4294901760
    %v1805 = vsub.f32 %v1723, %v1804
    %1806 = vmatpush.msra.mxu0 %v1805
    %v1807 = vand.u32 %v1717, 4294901760
    %v1808 = vsub.f32 %v1717, %v1807
    %1809 = vmatmul.f32.gmra.mxu0 %v1808
    %v1810 = vpop.f32.mrf.mxu0
    %v1811 = vadd.f32 %v1783, %v1810
    %v1812 = vand.u32 %v1720, 4294901760
    %v1813 = vsub.f32 %v1720, %v1812
    %1814 = vmatmul.f32.gmra.mxu0 %v1813
    %v1815 = vpop.f32.mrf.mxu0
    %v1816 = vadd.f32 %v1787, %v1815
    %1817 = vdwg.mxu0
    %1818 = vmatpush.msra.mxu0 0.0
    %1819 = vmatpush.msra.mxu0 0.0
    %1820 = vmatpush.msra.mxu0 0.0
    %1821 = vmatpush.msra.mxu0 0.0
    %1822 = vmatpush.msra.mxu0 0.0
    %1823 = vmatpush.msra.mxu0 0.0
    %1824 = vmatpush.msra.mxu0 0.0
    %1825 = vmatpush.msra.mxu0 0.0
    %1826 = vmatpush.msra.mxu0 0.0
    %1827 = vmatpush.msra.mxu0 0.0
    %1828 = vmatpush.msra.mxu0 0.0
    %1829 = vmatpush.msra.mxu0 0.0
    %1830 = vmatpush.msra.mxu0 0.0
    %1831 = vmatpush.msra.mxu0 0.0
    %1832 = vmatpush.msra.mxu0 0.0
    %v1833 = vand.u32 %v1723, 4294901760
    %1834 = vmatpush.msra.mxu0 %v1833
    %v1835 = vand.u32 %v1717, 4294901760
    %v1836 = vsub.f32 %v1717, %v1835
    %v1837 = vand.u32 %v1836, 4294901760
    %1838 = vmatmul.f32.gmra.mxu0 %v1837
    %v1839 = vpop.f32.mrf.mxu0
    %v1840 = vadd.f32 %v1811, %v1839
    %v1841 = vand.u32 %v1720, 4294901760
    %v1842 = vsub.f32 %v1720, %v1841
    %v1843 = vand.u32 %v1842, 4294901760
    %1844 = vmatmul.f32.gmra.mxu0 %v1843
    %v1845 = vpop.f32.mrf.mxu0
    %v1846 = vadd.f32 %v1816, %v1845
    %1847 = vdwg.mxu0
    %1848 = vmatpush.msra.mxu0 0.0
    %1849 = vmatpush.msra.mxu0 0.0
    %1850 = vmatpush.msra.mxu0 0.0
    %1851 = vmatpush.msra.mxu0 0.0
    %1852 = vmatpush.msra.mxu0 0.0
    %1853 = vmatpush.msra.mxu0 0.0
    %1854 = vmatpush.msra.mxu0 0.0
    %1855 = vmatpush.msra.mxu0 0.0
    %1856 = vmatpush.msra.mxu0 0.0
    %1857 = vmatpush.msra.mxu0 0.0
    %1858 = vmatpush.msra.mxu0 0.0
    %1859 = vmatpush.msra.mxu0 0.0
    %1860 = vmatpush.msra.mxu0 0.0
    %1861 = vmatpush.msra.mxu0 0.0
    %1862 = vmatpush.msra.mxu0 0.0
    %v1863 = vand.u32 %v1723, 4294901760
    %v1864 = vsub.f32 %v1723, %v1863
    %v1865 = vand.u32 %v1864, 4294901760
    %1866 = vmatpush.msra.mxu0 %v1865
    %v1867 = vand.u32 %v1717, 4294901760
    %1868 = vmatmul.f32.gmra.mxu0 %v1867
    %v1869 = vpop.f32.mrf.mxu0
    %v1870 = vadd.f32 %v1840, %v1869
    %v1871 = vand.u32 %v1720, 4294901760
    %1872 = vmatmul.f32.gmra.mxu0 %v1871
    %v1873 = vpop.f32.mrf.mxu0
    %v1874 = vadd.f32 %v1846, %v1873
    %1875 = vdwg.mxu0
    %1876 = vmatpush.msra.mxu0 0.0
    %1877 = vmatpush.msra.mxu0 0.0
    %1878 = vmatpush.msra.mxu0 0.0
    %1879 = vmatpush.msra.mxu0 0.0
    %1880 = vmatpush.msra.mxu0 0.0
    %1881 = vmatpush.msra.mxu0 0.0
    %1882 = vmatpush.msra.mxu0 0.0
    %1883 = vmatpush.msra.mxu0 0.0
    %1884 = vmatpush.msra.mxu0 0.0
    %1885 = vmatpush.msra.mxu0 0.0
    %1886 = vmatpush.msra.mxu0 0.0
    %1887 = vmatpush.msra.mxu0 0.0
    %1888 = vmatpush.msra.mxu0 0.0
    %1889 = vmatpush.msra.mxu0 0.0
    %1890 = vmatpush.msra.mxu0 0.0
    %v1891 = vand.u32 %v1723, 4294901760
    %1892 = vmatpush.msra.mxu0 %v1891
    %v1893 = vand.u32 %v1717, 4294901760
    %1894 = vmatmul.f32.gmra.mxu0 %v1893
    %v1895 = vpop.f32.mrf.mxu0
    %v1896 = vadd.f32 %v1870, %v1895
    %v1897 = vand.u32 %v1720, 4294901760
    %1898 = vmatmul.f32.gmra.mxu0 %v1897
    %v1899 = vpop.f32.mrf.mxu0
    %v1900 = vadd.f32 %v1874, %v1899
    %1901 = vdwg.mxu0
    %vm1902 = vcmask 130048
    %v1904 = vsel %vm1902, %v704, 0
    %1906 = vmatpush.msra.mxu0 0.0
    %1907 = vmatpush.msra.mxu0 0.0
    %1908 = vmatpush.msra.mxu0 0.0
    %1909 = vmatpush.msra.mxu0 0.0
    %1910 = vmatpush.msra.mxu0 0.0
    %1911 = vmatpush.msra.mxu0 0.0
    %1912 = vmatpush.msra.mxu0 0.0
    %1913 = vmatpush.msra.mxu0 0.0
    %1914 = vmatpush.msra.mxu0 0.0
    %1915 = vmatpush.msra.mxu0 0.0
    %1916 = vmatpush.msra.mxu0 0.0
    %1917 = vmatpush.msra.mxu0 0.0
    %1918 = vmatpush.msra.mxu0 0.0
    %1919 = vmatpush.msra.mxu0 0.0
    %v1920 = vand.u32 %v1525, 4294901760
    %1921 = vmatpush.msra.mxu0 %v1920
    %v1922 = vand.u32 %v1524, 4294901760
    %1923 = vmatpush.msra.mxu0 %v1922
    %v1924 = vand.u32 %v1904, 4294901760
    %v1925 = vsub.f32 %v1904, %v1924
    %v1926 = vand.u32 %v1925, 4294901760
    %v1927 = vsub.f32 %v1925, %v1926
    %v1928 = vand.u32 %v1927, 4294901760
    %1929 = vmatmul.f32.gmra.mxu0 %v1928
    %v1930 = vpop.f32.mrf.mxu0
    %v1931 = vadd.f32 0.0, %v1930
    %1932 = vdwg.mxu0
    %1933 = vmatpush.msra.mxu0 0.0
    %1934 = vmatpush.msra.mxu0 0.0
    %1935 = vmatpush.msra.mxu0 0.0
    %1936 = vmatpush.msra.mxu0 0.0
    %1937 = vmatpush.msra.mxu0 0.0
    %1938 = vmatpush.msra.mxu0 0.0
    %1939 = vmatpush.msra.mxu0 0.0
    %1940 = vmatpush.msra.mxu0 0.0
    %1941 = vmatpush.msra.mxu0 0.0
    %1942 = vmatpush.msra.mxu0 0.0
    %1943 = vmatpush.msra.mxu0 0.0
    %1944 = vmatpush.msra.mxu0 0.0
    %1945 = vmatpush.msra.mxu0 0.0
    %1946 = vmatpush.msra.mxu0 0.0
    %v1947 = vand.u32 %v1525, 4294901760
    %v1948 = vsub.f32 %v1525, %v1947
    %v1949 = vand.u32 %v1948, 4294901760
    %v1950 = vsub.f32 %v1948, %v1949
    %v1951 = vand.u32 %v1950, 4294901760
    %1952 = vmatpush.msra.mxu0 %v1951
    %v1953 = vand.u32 %v1524, 4294901760
    %v1954 = vsub.f32 %v1524, %v1953
    %v1955 = vand.u32 %v1954, 4294901760
    %v1956 = vsub.f32 %v1954, %v1955
    %v1957 = vand.u32 %v1956, 4294901760
    %1958 = vmatpush.msra.mxu0 %v1957
    %v1959 = vand.u32 %v1904, 4294901760
    %1960 = vmatmul.f32.gmra.mxu0 %v1959
    %v1961 = vpop.f32.mrf.mxu0
    %v1962 = vadd.f32 %v1931, %v1961
    %1963 = vdwg.mxu0
    %1964 = vmatpush.msra.mxu0 0.0
    %1965 = vmatpush.msra.mxu0 0.0
    %1966 = vmatpush.msra.mxu0 0.0
    %1967 = vmatpush.msra.mxu0 0.0
    %1968 = vmatpush.msra.mxu0 0.0
    %1969 = vmatpush.msra.mxu0 0.0
    %1970 = vmatpush.msra.mxu0 0.0
    %1971 = vmatpush.msra.mxu0 0.0
    %1972 = vmatpush.msra.mxu0 0.0
    %1973 = vmatpush.msra.mxu0 0.0
    %1974 = vmatpush.msra.mxu0 0.0
    %1975 = vmatpush.msra.mxu0 0.0
    %1976 = vmatpush.msra.mxu0 0.0
    %1977 = vmatpush.msra.mxu0 0.0
    %v1978 = vand.u32 %v1525, 4294901760
    %v1979 = vsub.f32 %v1525, %v1978
    %1980 = vmatpush.msra.mxu0 %v1979
    %v1981 = vand.u32 %v1524, 4294901760
    %v1982 = vsub.f32 %v1524, %v1981
    %1983 = vmatpush.msra.mxu0 %v1982
    %v1984 = vand.u32 %v1904, 4294901760
    %v1985 = vsub.f32 %v1904, %v1984
    %1986 = vmatmul.f32.gmra.mxu0 %v1985
    %v1987 = vpop.f32.mrf.mxu0
    %v1988 = vadd.f32 %v1962, %v1987
    %1989 = vdwg.mxu0
    %1990 = vmatpush.msra.mxu0 0.0
    %1991 = vmatpush.msra.mxu0 0.0
    %1992 = vmatpush.msra.mxu0 0.0
    %1993 = vmatpush.msra.mxu0 0.0
    %1994 = vmatpush.msra.mxu0 0.0
    %1995 = vmatpush.msra.mxu0 0.0
    %1996 = vmatpush.msra.mxu0 0.0
    %1997 = vmatpush.msra.mxu0 0.0
    %1998 = vmatpush.msra.mxu0 0.0
    %1999 = vmatpush.msra.mxu0 0.0
    %2000 = vmatpush.msra.mxu0 0.0
    %2001 = vmatpush.msra.mxu0 0.0
    %2002 = vmatpush.msra.mxu0 0.0
    %2003 = vmatpush.msra.mxu0 0.0
    %v2004 = vand.u32 %v1525, 4294901760
    %2005 = vmatpush.msra.mxu0 %v2004
    %v2006 = vand.u32 %v1524, 4294901760
    %2007 = vmatpush.msra.mxu0 %v2006
    %v2008 = vand.u32 %v1904, 4294901760
    %v2009 = vsub.f32 %v1904, %v2008
    %v2010 = vand.u32 %v2009, 4294901760
    %2011 = vmatmul.f32.gmra.mxu0 %v2010
    %v2012 = vpop.f32.mrf.mxu0
    %v2013 = vadd.f32 %v1988, %v2012
    %2014 = vdwg.mxu0
    %2015 = vmatpush.msra.mxu0 0.0
    %2016 = vmatpush.msra.mxu0 0.0
    %2017 = vmatpush.msra.mxu0 0.0
    %2018 = vmatpush.msra.mxu0 0.0
    %2019 = vmatpush.msra.mxu0 0.0
    %2020 = vmatpush.msra.mxu0 0.0
    %2021 = vmatpush.msra.mxu0 0.0
    %2022 = vmatpush.msra.mxu0 0.0
    %2023 = vmatpush.msra.mxu0 0.0
    %2024 = vmatpush.msra.mxu0 0.0
    %2025 = vmatpush.msra.mxu0 0.0
    %2026 = vmatpush.msra.mxu0 0.0
    %2027 = vmatpush.msra.mxu0 0.0
    %2028 = vmatpush.msra.mxu0 0.0
    %v2029 = vand.u32 %v1525, 4294901760
    %v2030 = vsub.f32 %v1525, %v2029
    %v2031 = vand.u32 %v2030, 4294901760
    %2032 = vmatpush.msra.mxu0 %v2031
    %v2033 = vand.u32 %v1524, 4294901760
    %v2034 = vsub.f32 %v1524, %v2033
    %v2035 = vand.u32 %v2034, 4294901760
    %2036 = vmatpush.msra.mxu0 %v2035
    %v2037 = vand.u32 %v1904, 4294901760
    %2038 = vmatmul.f32.gmra.mxu0 %v2037
    %v2039 = vpop.f32.mrf.mxu0
    %v2040 = vadd.f32 %v2013, %v2039
    %2041 = vdwg.mxu0
    %2042 = vmatpush.msra.mxu0 0.0
    %2043 = vmatpush.msra.mxu0 0.0
    %2044 = vmatpush.msra.mxu0 0.0
    %2045 = vmatpush.msra.mxu0 0.0
    %2046 = vmatpush.msra.mxu0 0.0
    %2047 = vmatpush.msra.mxu0 0.0
    %2048 = vmatpush.msra.mxu0 0.0
    %2049 = vmatpush.msra.mxu0 0.0
    %2050 = vmatpush.msra.mxu0 0.0
    %2051 = vmatpush.msra.mxu0 0.0
    %2052 = vmatpush.msra.mxu0 0.0
    %2053 = vmatpush.msra.mxu0 0.0
    %2054 = vmatpush.msra.mxu0 0.0
    %2055 = vmatpush.msra.mxu0 0.0
    %v2056 = vand.u32 %v1525, 4294901760
    %2057 = vmatpush.msra.mxu0 %v2056
    %v2058 = vand.u32 %v1524, 4294901760
    %2059 = vmatpush.msra.mxu0 %v2058
    %v2060 = vand.u32 %v1904, 4294901760
    %2061 = vmatmul.f32.gmra.mxu0 %v2060
    %v2062 = vpop.f32.mrf.mxu0
    %v2063 = vadd.f32 %v2040, %v2062
    %2064 = vdwg.mxu0
    %v2066 = vsel %vm1902, %v705, 0
    %2068 = vmatpush.msra.mxu0 0.0
    %2069 = vmatpush.msra.mxu0 0.0
    %2070 = vmatpush.msra.mxu0 0.0
    %2071 = vmatpush.msra.mxu0 0.0
    %2072 = vmatpush.msra.mxu0 0.0
    %2073 = vmatpush.msra.mxu0 0.0
    %2074 = vmatpush.msra.mxu0 0.0
    %2075 = vmatpush.msra.mxu0 0.0
    %2076 = vmatpush.msra.mxu0 0.0
    %2077 = vmatpush.msra.mxu0 0.0
    %2078 = vmatpush.msra.mxu0 0.0
    %2079 = vmatpush.msra.mxu0 0.0
    %2080 = vmatpush.msra.mxu0 0.0
    %2081 = vmatpush.msra.mxu0 0.0
    %v2082 = vand.u32 %v1527, 4294901760
    %2083 = vmatpush.msra.mxu0 %v2082
    %v2084 = vand.u32 %v1526, 4294901760
    %2085 = vmatpush.msra.mxu0 %v2084
    %v2086 = vand.u32 %v2066, 4294901760
    %v2087 = vsub.f32 %v2066, %v2086
    %v2088 = vand.u32 %v2087, 4294901760
    %v2089 = vsub.f32 %v2087, %v2088
    %v2090 = vand.u32 %v2089, 4294901760
    %2091 = vmatmul.f32.gmra.mxu0 %v2090
    %v2092 = vpop.f32.mrf.mxu0
    %v2093 = vadd.f32 0.0, %v2092
    %2094 = vdwg.mxu0
    %2095 = vmatpush.msra.mxu0 0.0
    %2096 = vmatpush.msra.mxu0 0.0
    %2097 = vmatpush.msra.mxu0 0.0
    %2098 = vmatpush.msra.mxu0 0.0
    %2099 = vmatpush.msra.mxu0 0.0
    %2100 = vmatpush.msra.mxu0 0.0
    %2101 = vmatpush.msra.mxu0 0.0
    %2102 = vmatpush.msra.mxu0 0.0
    %2103 = vmatpush.msra.mxu0 0.0
    %2104 = vmatpush.msra.mxu0 0.0
    %2105 = vmatpush.msra.mxu0 0.0
    %2106 = vmatpush.msra.mxu0 0.0
    %2107 = vmatpush.msra.mxu0 0.0
    %2108 = vmatpush.msra.mxu0 0.0
    %v2109 = vand.u32 %v1527, 4294901760
    %v2110 = vsub.f32 %v1527, %v2109
    %v2111 = vand.u32 %v2110, 4294901760
    %v2112 = vsub.f32 %v2110, %v2111
    %v2113 = vand.u32 %v2112, 4294901760
    %2114 = vmatpush.msra.mxu0 %v2113
    %v2115 = vand.u32 %v1526, 4294901760
    %v2116 = vsub.f32 %v1526, %v2115
    %v2117 = vand.u32 %v2116, 4294901760
    %v2118 = vsub.f32 %v2116, %v2117
    %v2119 = vand.u32 %v2118, 4294901760
    %2120 = vmatpush.msra.mxu0 %v2119
    %v2121 = vand.u32 %v2066, 4294901760
    %2122 = vmatmul.f32.gmra.mxu0 %v2121
    %v2123 = vpop.f32.mrf.mxu0
    %v2124 = vadd.f32 %v2093, %v2123
    %2125 = vdwg.mxu0
    %2126 = vmatpush.msra.mxu0 0.0
    %2127 = vmatpush.msra.mxu0 0.0
    %2128 = vmatpush.msra.mxu0 0.0
    %2129 = vmatpush.msra.mxu0 0.0
    %2130 = vmatpush.msra.mxu0 0.0
    %2131 = vmatpush.msra.mxu0 0.0
    %2132 = vmatpush.msra.mxu0 0.0
    %2133 = vmatpush.msra.mxu0 0.0
    %2134 = vmatpush.msra.mxu0 0.0
    %2135 = vmatpush.msra.mxu0 0.0
    %2136 = vmatpush.msra.mxu0 0.0
    %2137 = vmatpush.msra.mxu0 0.0
    %2138 = vmatpush.msra.mxu0 0.0
    %2139 = vmatpush.msra.mxu0 0.0
    %v2140 = vand.u32 %v1527, 4294901760
    %v2141 = vsub.f32 %v1527, %v2140
    %2142 = vmatpush.msra.mxu0 %v2141
    %v2143 = vand.u32 %v1526, 4294901760
    %v2144 = vsub.f32 %v1526, %v2143
    %2145 = vmatpush.msra.mxu0 %v2144
    %v2146 = vand.u32 %v2066, 4294901760
    %v2147 = vsub.f32 %v2066, %v2146
    %2148 = vmatmul.f32.gmra.mxu0 %v2147
    %v2149 = vpop.f32.mrf.mxu0
    %v2150 = vadd.f32 %v2124, %v2149
    %2151 = vdwg.mxu0
    %2152 = vmatpush.msra.mxu0 0.0
    %2153 = vmatpush.msra.mxu0 0.0
    %2154 = vmatpush.msra.mxu0 0.0
    %2155 = vmatpush.msra.mxu0 0.0
    %2156 = vmatpush.msra.mxu0 0.0
    %2157 = vmatpush.msra.mxu0 0.0
    %2158 = vmatpush.msra.mxu0 0.0
    %2159 = vmatpush.msra.mxu0 0.0
    %2160 = vmatpush.msra.mxu0 0.0
    %2161 = vmatpush.msra.mxu0 0.0
    %2162 = vmatpush.msra.mxu0 0.0
    %2163 = vmatpush.msra.mxu0 0.0
    %2164 = vmatpush.msra.mxu0 0.0
    %2165 = vmatpush.msra.mxu0 0.0
    %v2166 = vand.u32 %v1527, 4294901760
    %2167 = vmatpush.msra.mxu0 %v2166
    %v2168 = vand.u32 %v1526, 4294901760
    %2169 = vmatpush.msra.mxu0 %v2168
    %v2170 = vand.u32 %v2066, 4294901760
    %v2171 = vsub.f32 %v2066, %v2170
    %v2172 = vand.u32 %v2171, 4294901760
    %2173 = vmatmul.f32.gmra.mxu0 %v2172
    %v2174 = vpop.f32.mrf.mxu0
    %v2175 = vadd.f32 %v2150, %v2174
    %2176 = vdwg.mxu0
    %2177 = vmatpush.msra.mxu0 0.0
    %2178 = vmatpush.msra.mxu0 0.0
    %2179 = vmatpush.msra.mxu0 0.0
    %2180 = vmatpush.msra.mxu0 0.0
    %2181 = vmatpush.msra.mxu0 0.0
    %2182 = vmatpush.msra.mxu0 0.0
    %2183 = vmatpush.msra.mxu0 0.0
    %2184 = vmatpush.msra.mxu0 0.0
    %2185 = vmatpush.msra.mxu0 0.0
    %2186 = vmatpush.msra.mxu0 0.0
    %2187 = vmatpush.msra.mxu0 0.0
    %2188 = vmatpush.msra.mxu0 0.0
    %2189 = vmatpush.msra.mxu0 0.0
    %2190 = vmatpush.msra.mxu0 0.0
    %v2191 = vand.u32 %v1527, 4294901760
    %v2192 = vsub.f32 %v1527, %v2191
    %v2193 = vand.u32 %v2192, 4294901760
    %2194 = vmatpush.msra.mxu0 %v2193
    %v2195 = vand.u32 %v1526, 4294901760
    %v2196 = vsub.f32 %v1526, %v2195
    %v2197 = vand.u32 %v2196, 4294901760
    %2198 = vmatpush.msra.mxu0 %v2197
    %v2199 = vand.u32 %v2066, 4294901760
    %2200 = vmatmul.f32.gmra.mxu0 %v2199
    %v2201 = vpop.f32.mrf.mxu0
    %v2202 = vadd.f32 %v2175, %v2201
    %2203 = vdwg.mxu0
    %2204 = vmatpush.msra.mxu0 0.0
    %2205 = vmatpush.msra.mxu0 0.0
    %2206 = vmatpush.msra.mxu0 0.0
    %2207 = vmatpush.msra.mxu0 0.0
    %2208 = vmatpush.msra.mxu0 0.0
    %2209 = vmatpush.msra.mxu0 0.0
    %2210 = vmatpush.msra.mxu0 0.0
    %2211 = vmatpush.msra.mxu0 0.0
    %2212 = vmatpush.msra.mxu0 0.0
    %2213 = vmatpush.msra.mxu0 0.0
    %2214 = vmatpush.msra.mxu0 0.0
    %2215 = vmatpush.msra.mxu0 0.0
    %2216 = vmatpush.msra.mxu0 0.0
    %2217 = vmatpush.msra.mxu0 0.0
    %v2218 = vand.u32 %v1527, 4294901760
    %2219 = vmatpush.msra.mxu0 %v2218
    %v2220 = vand.u32 %v1526, 4294901760
    %2221 = vmatpush.msra.mxu0 %v2220
    %v2222 = vand.u32 %v2066, 4294901760
    %2223 = vmatmul.f32.gmra.mxu0 %v2222
    %v2224 = vpop.f32.mrf.mxu0
    %v2225 = vadd.f32 %v2202, %v2224
    %2226 = vdwg.mxu0
    %v2227 = vsel %vm369, %v1080, 0
    %2229 = vmatpush.msra.mxu0 0.0
    %2230 = vmatpush.msra.mxu0 0.0
    %2231 = vmatpush.msra.mxu0 0.0
    %2232 = vmatpush.msra.mxu0 0.0
    %2233 = vmatpush.msra.mxu0 0.0
    %2234 = vmatpush.msra.mxu0 0.0
    %2235 = vmatpush.msra.mxu0 0.0
    %2236 = vmatpush.msra.mxu0 0.0
    %2237 = vmatpush.msra.mxu0 0.0
    %2238 = vmatpush.msra.mxu0 0.0
    %2239 = vmatpush.msra.mxu0 0.0
    %2240 = vmatpush.msra.mxu0 0.0
    %2241 = vmatpush.msra.mxu0 0.0
    %2242 = vmatpush.msra.mxu0 0.0
    %2243 = vmatpush.msra.mxu0 0.0
    %v2244 = vand.u32 %v704, 4294901760
    %2245 = vmatpush.msra.mxu0 %v2244
    %v2246 = vand.u32 %v2227, 4294901760
    %v2247 = vsub.f32 %v2227, %v2246
    %v2248 = vand.u32 %v2247, 4294901760
    %v2249 = vsub.f32 %v2247, %v2248
    %v2250 = vand.u32 %v2249, 4294901760
    %2251 = vmatmul.f32.gmra.mxu0 %v2250
    %v2252 = vpop.f32.mrf.mxu0
    %v2253 = vadd.f32 0.0, %v2252
    %2254 = vdwg.mxu0
    %2255 = vmatpush.msra.mxu0 0.0
    %2256 = vmatpush.msra.mxu0 0.0
    %2257 = vmatpush.msra.mxu0 0.0
    %2258 = vmatpush.msra.mxu0 0.0
    %2259 = vmatpush.msra.mxu0 0.0
    %2260 = vmatpush.msra.mxu0 0.0
    %2261 = vmatpush.msra.mxu0 0.0
    %2262 = vmatpush.msra.mxu0 0.0
    %2263 = vmatpush.msra.mxu0 0.0
    %2264 = vmatpush.msra.mxu0 0.0
    %2265 = vmatpush.msra.mxu0 0.0
    %2266 = vmatpush.msra.mxu0 0.0
    %2267 = vmatpush.msra.mxu0 0.0
    %2268 = vmatpush.msra.mxu0 0.0
    %2269 = vmatpush.msra.mxu0 0.0
    %v2270 = vand.u32 %v704, 4294901760
    %v2271 = vsub.f32 %v704, %v2270
    %v2272 = vand.u32 %v2271, 4294901760
    %v2273 = vsub.f32 %v2271, %v2272
    %v2274 = vand.u32 %v2273, 4294901760
    %2275 = vmatpush.msra.mxu0 %v2274
    %v2276 = vand.u32 %v2227, 4294901760
    %2277 = vmatmul.f32.gmra.mxu0 %v2276
    %v2278 = vpop.f32.mrf.mxu0
    %v2279 = vadd.f32 %v2253, %v2278
    %2280 = vdwg.mxu0
    %2281 = vmatpush.msra.mxu0 0.0
    %2282 = vmatpush.msra.mxu0 0.0
    %2283 = vmatpush.msra.mxu0 0.0
    %2284 = vmatpush.msra.mxu0 0.0
    %2285 = vmatpush.msra.mxu0 0.0
    %2286 = vmatpush.msra.mxu0 0.0
    %2287 = vmatpush.msra.mxu0 0.0
    %2288 = vmatpush.msra.mxu0 0.0
    %2289 = vmatpush.msra.mxu0 0.0
    %2290 = vmatpush.msra.mxu0 0.0
    %2291 = vmatpush.msra.mxu0 0.0
    %2292 = vmatpush.msra.mxu0 0.0
    %2293 = vmatpush.msra.mxu0 0.0
    %2294 = vmatpush.msra.mxu0 0.0
    %2295 = vmatpush.msra.mxu0 0.0
    %v2296 = vand.u32 %v704, 4294901760
    %v2297 = vsub.f32 %v704, %v2296
    %2298 = vmatpush.msra.mxu0 %v2297
    %v2299 = vand.u32 %v2227, 4294901760
    %v2300 = vsub.f32 %v2227, %v2299
    %2301 = vmatmul.f32.gmra.mxu0 %v2300
    %v2302 = vpop.f32.mrf.mxu0
    %v2303 = vadd.f32 %v2279, %v2302
    %2304 = vdwg.mxu0
    %2305 = vmatpush.msra.mxu0 0.0
    %2306 = vmatpush.msra.mxu0 0.0
    %2307 = vmatpush.msra.mxu0 0.0
    %2308 = vmatpush.msra.mxu0 0.0
    %2309 = vmatpush.msra.mxu0 0.0
    %2310 = vmatpush.msra.mxu0 0.0
    %2311 = vmatpush.msra.mxu0 0.0
    %2312 = vmatpush.msra.mxu0 0.0
    %2313 = vmatpush.msra.mxu0 0.0
    %2314 = vmatpush.msra.mxu0 0.0
    %2315 = vmatpush.msra.mxu0 0.0
    %2316 = vmatpush.msra.mxu0 0.0
    %2317 = vmatpush.msra.mxu0 0.0
    %2318 = vmatpush.msra.mxu0 0.0
    %2319 = vmatpush.msra.mxu0 0.0
    %v2320 = vand.u32 %v704, 4294901760
    %2321 = vmatpush.msra.mxu0 %v2320
    %v2322 = vand.u32 %v2227, 4294901760
    %v2323 = vsub.f32 %v2227, %v2322
    %v2324 = vand.u32 %v2323, 4294901760
    %2325 = vmatmul.f32.gmra.mxu0 %v2324
    %v2326 = vpop.f32.mrf.mxu0
    %v2327 = vadd.f32 %v2303, %v2326
    %2328 = vdwg.mxu0
    %2329 = vmatpush.msra.mxu0 0.0
    %2330 = vmatpush.msra.mxu0 0.0
    %2331 = vmatpush.msra.mxu0 0.0
    %2332 = vmatpush.msra.mxu0 0.0
    %2333 = vmatpush.msra.mxu0 0.0
    %2334 = vmatpush.msra.mxu0 0.0
    %2335 = vmatpush.msra.mxu0 0.0
    %2336 = vmatpush.msra.mxu0 0.0
    %2337 = vmatpush.msra.mxu0 0.0
    %2338 = vmatpush.msra.mxu0 0.0
    %2339 = vmatpush.msra.mxu0 0.0
    %2340 = vmatpush.msra.mxu0 0.0
    %2341 = vmatpush.msra.mxu0 0.0
    %2342 = vmatpush.msra.mxu0 0.0
    %2343 = vmatpush.msra.mxu0 0.0
    %v2344 = vand.u32 %v704, 4294901760
    %v2345 = vsub.f32 %v704, %v2344
    %v2346 = vand.u32 %v2345, 4294901760
    %2347 = vmatpush.msra.mxu0 %v2346
    %v2348 = vand.u32 %v2227, 4294901760
    %2349 = vmatmul.f32.gmra.mxu0 %v2348
    %v2350 = vpop.f32.mrf.mxu0
    %v2351 = vadd.f32 %v2327, %v2350
    %2352 = vdwg.mxu0
    %2353 = vmatpush.msra.mxu0 0.0
    %2354 = vmatpush.msra.mxu0 0.0
    %2355 = vmatpush.msra.mxu0 0.0
    %2356 = vmatpush.msra.mxu0 0.0
    %2357 = vmatpush.msra.mxu0 0.0
    %2358 = vmatpush.msra.mxu0 0.0
    %2359 = vmatpush.msra.mxu0 0.0
    %2360 = vmatpush.msra.mxu0 0.0
    %2361 = vmatpush.msra.mxu0 0.0
    %2362 = vmatpush.msra.mxu0 0.0
    %2363 = vmatpush.msra.mxu0 0.0
    %2364 = vmatpush.msra.mxu0 0.0
    %2365 = vmatpush.msra.mxu0 0.0
    %2366 = vmatpush.msra.mxu0 0.0
    %2367 = vmatpush.msra.mxu0 0.0
    %v2368 = vand.u32 %v704, 4294901760
    %2369 = vmatpush.msra.mxu0 %v2368
    %v2370 = vand.u32 %v2227, 4294901760
    %2371 = vmatmul.f32.gmra.mxu0 %v2370
    %v2372 = vpop.f32.mrf.mxu0
    %v2373 = vadd.f32 %v2351, %v2372
    %2374 = vdwg.mxu0
    %v2375 = vsel %vm369, %v1081, 0
    %2377 = vmatpush.msra.mxu0 0.0
    %2378 = vmatpush.msra.mxu0 0.0
    %2379 = vmatpush.msra.mxu0 0.0
    %2380 = vmatpush.msra.mxu0 0.0
    %2381 = vmatpush.msra.mxu0 0.0
    %2382 = vmatpush.msra.mxu0 0.0
    %2383 = vmatpush.msra.mxu0 0.0
    %2384 = vmatpush.msra.mxu0 0.0
    %2385 = vmatpush.msra.mxu0 0.0
    %2386 = vmatpush.msra.mxu0 0.0
    %2387 = vmatpush.msra.mxu0 0.0
    %2388 = vmatpush.msra.mxu0 0.0
    %2389 = vmatpush.msra.mxu0 0.0
    %2390 = vmatpush.msra.mxu0 0.0
    %2391 = vmatpush.msra.mxu0 0.0
    %v2392 = vand.u32 %v705, 4294901760
    %2393 = vmatpush.msra.mxu0 %v2392
    %v2394 = vand.u32 %v2375, 4294901760
    %v2395 = vsub.f32 %v2375, %v2394
    %v2396 = vand.u32 %v2395, 4294901760
    %v2397 = vsub.f32 %v2395, %v2396
    %v2398 = vand.u32 %v2397, 4294901760
    %2399 = vmatmul.f32.gmra.mxu0 %v2398
    %v2400 = vpop.f32.mrf.mxu0
    %v2401 = vadd.f32 0.0, %v2400
    %2402 = vdwg.mxu0
    %2403 = vmatpush.msra.mxu0 0.0
    %2404 = vmatpush.msra.mxu0 0.0
    %2405 = vmatpush.msra.mxu0 0.0
    %2406 = vmatpush.msra.mxu0 0.0
    %2407 = vmatpush.msra.mxu0 0.0
    %2408 = vmatpush.msra.mxu0 0.0
    %2409 = vmatpush.msra.mxu0 0.0
    %2410 = vmatpush.msra.mxu0 0.0
    %2411 = vmatpush.msra.mxu0 0.0
    %2412 = vmatpush.msra.mxu0 0.0
    %2413 = vmatpush.msra.mxu0 0.0
    %2414 = vmatpush.msra.mxu0 0.0
    %2415 = vmatpush.msra.mxu0 0.0
    %2416 = vmatpush.msra.mxu0 0.0
    %2417 = vmatpush.msra.mxu0 0.0
    %v2418 = vand.u32 %v705, 4294901760
    %v2419 = vsub.f32 %v705, %v2418
    %v2420 = vand.u32 %v2419, 4294901760
    %v2421 = vsub.f32 %v2419, %v2420
    %v2422 = vand.u32 %v2421, 4294901760
    %2423 = vmatpush.msra.mxu0 %v2422
    %v2424 = vand.u32 %v2375, 4294901760
    %2425 = vmatmul.f32.gmra.mxu0 %v2424
    %v2426 = vpop.f32.mrf.mxu0
    %v2427 = vadd.f32 %v2401, %v2426
    %2428 = vdwg.mxu0
    %2429 = vmatpush.msra.mxu0 0.0
    %2430 = vmatpush.msra.mxu0 0.0
    %2431 = vmatpush.msra.mxu0 0.0
    %2432 = vmatpush.msra.mxu0 0.0
    %2433 = vmatpush.msra.mxu0 0.0
    %2434 = vmatpush.msra.mxu0 0.0
    %2435 = vmatpush.msra.mxu0 0.0
    %2436 = vmatpush.msra.mxu0 0.0
    %2437 = vmatpush.msra.mxu0 0.0
    %2438 = vmatpush.msra.mxu0 0.0
    %2439 = vmatpush.msra.mxu0 0.0
    %2440 = vmatpush.msra.mxu0 0.0
    %2441 = vmatpush.msra.mxu0 0.0
    %2442 = vmatpush.msra.mxu0 0.0
    %2443 = vmatpush.msra.mxu0 0.0
    %v2444 = vand.u32 %v705, 4294901760
    %v2445 = vsub.f32 %v705, %v2444
    %2446 = vmatpush.msra.mxu0 %v2445
    %v2447 = vand.u32 %v2375, 4294901760
    %v2448 = vsub.f32 %v2375, %v2447
    %2449 = vmatmul.f32.gmra.mxu0 %v2448
    %v2450 = vpop.f32.mrf.mxu0
    %v2451 = vadd.f32 %v2427, %v2450
    %2452 = vdwg.mxu0
    %2453 = vmatpush.msra.mxu0 0.0
    %2454 = vmatpush.msra.mxu0 0.0
    %2455 = vmatpush.msra.mxu0 0.0
    %2456 = vmatpush.msra.mxu0 0.0
    %2457 = vmatpush.msra.mxu0 0.0
    %2458 = vmatpush.msra.mxu0 0.0
    %2459 = vmatpush.msra.mxu0 0.0
    %2460 = vmatpush.msra.mxu0 0.0
    %2461 = vmatpush.msra.mxu0 0.0
    %2462 = vmatpush.msra.mxu0 0.0
    %2463 = vmatpush.msra.mxu0 0.0
    %2464 = vmatpush.msra.mxu0 0.0
    %2465 = vmatpush.msra.mxu0 0.0
    %2466 = vmatpush.msra.mxu0 0.0
    %2467 = vmatpush.msra.mxu0 0.0
    %v2468 = vand.u32 %v705, 4294901760
    %2469 = vmatpush.msra.mxu0 %v2468
    %v2470 = vand.u32 %v2375, 4294901760
    %v2471 = vsub.f32 %v2375, %v2470
    %v2472 = vand.u32 %v2471, 4294901760
    %2473 = vmatmul.f32.gmra.mxu0 %v2472
    %v2474 = vpop.f32.mrf.mxu0
    %v2475 = vadd.f32 %v2451, %v2474
    %2476 = vdwg.mxu0
    %2477 = vmatpush.msra.mxu0 0.0
    %2478 = vmatpush.msra.mxu0 0.0
    %2479 = vmatpush.msra.mxu0 0.0
    %2480 = vmatpush.msra.mxu0 0.0
    %2481 = vmatpush.msra.mxu0 0.0
    %2482 = vmatpush.msra.mxu0 0.0
    %2483 = vmatpush.msra.mxu0 0.0
    %2484 = vmatpush.msra.mxu0 0.0
    %2485 = vmatpush.msra.mxu0 0.0
    %2486 = vmatpush.msra.mxu0 0.0
    %2487 = vmatpush.msra.mxu0 0.0
    %2488 = vmatpush.msra.mxu0 0.0
    %2489 = vmatpush.msra.mxu0 0.0
    %2490 = vmatpush.msra.mxu0 0.0
    %2491 = vmatpush.msra.mxu0 0.0
    %v2492 = vand.u32 %v705, 4294901760
    %v2493 = vsub.f32 %v705, %v2492
    %v2494 = vand.u32 %v2493, 4294901760
    %2495 = vmatpush.msra.mxu0 %v2494
    %v2496 = vand.u32 %v2375, 4294901760
    %2497 = vmatmul.f32.gmra.mxu0 %v2496
    %v2498 = vpop.f32.mrf.mxu0
    %v2499 = vadd.f32 %v2475, %v2498
    %2500 = vdwg.mxu0
    %2501 = vmatpush.msra.mxu0 0.0
    %2502 = vmatpush.msra.mxu0 0.0
    %2503 = vmatpush.msra.mxu0 0.0
    %2504 = vmatpush.msra.mxu0 0.0
    %2505 = vmatpush.msra.mxu0 0.0
    %2506 = vmatpush.msra.mxu0 0.0
    %2507 = vmatpush.msra.mxu0 0.0
    %2508 = vmatpush.msra.mxu0 0.0
    %2509 = vmatpush.msra.mxu0 0.0
    %2510 = vmatpush.msra.mxu0 0.0
    %2511 = vmatpush.msra.mxu0 0.0
    %2512 = vmatpush.msra.mxu0 0.0
    %2513 = vmatpush.msra.mxu0 0.0
    %2514 = vmatpush.msra.mxu0 0.0
    %2515 = vmatpush.msra.mxu0 0.0
    %v2516 = vand.u32 %v705, 4294901760
    %2517 = vmatpush.msra.mxu0 %v2516
    %v2518 = vand.u32 %v2375, 4294901760
    %2519 = vmatmul.f32.gmra.mxu0 %v2518
    %v2520 = vpop.f32.mrf.mxu0
    %v2521 = vadd.f32 %v2499, %v2520
    %2522 = vdwg.mxu0
    %v2523 = vsel %vm1902, %v367, 0
    %2525 = vmatpush.msra.mxu0 0.0
    %2526 = vmatpush.msra.mxu0 0.0
    %2527 = vmatpush.msra.mxu0 0.0
    %2528 = vmatpush.msra.mxu0 0.0
    %2529 = vmatpush.msra.mxu0 0.0
    %2530 = vmatpush.msra.mxu0 0.0
    %2531 = vmatpush.msra.mxu0 0.0
    %2532 = vmatpush.msra.mxu0 0.0
    %2533 = vmatpush.msra.mxu0 0.0
    %2534 = vmatpush.msra.mxu0 0.0
    %2535 = vmatpush.msra.mxu0 0.0
    %2536 = vmatpush.msra.mxu0 0.0
    %2537 = vmatpush.msra.mxu0 0.0
    %2538 = vmatpush.msra.mxu0 0.0
    %v2539 = vand.u32 %v1714, 4294901760
    %2540 = vmatpush.msra.mxu0 %v2539
    %v2541 = vand.u32 %v1710, 4294901760
    %2542 = vmatpush.msra.mxu0 %v2541
    %v2543 = vand.u32 %v2523, 4294901760
    %v2544 = vsub.f32 %v2523, %v2543
    %v2545 = vand.u32 %v2544, 4294901760
    %v2546 = vsub.f32 %v2544, %v2545
    %v2547 = vand.u32 %v2546, 4294901760
    %2548 = vmatmul.f32.gmra.mxu0 %v2547
    %v2549 = vpop.f32.mrf.mxu0
    %v2550 = vadd.f32 0.0, %v2549
    %2551 = vdwg.mxu0
    %2552 = vmatpush.msra.mxu0 0.0
    %2553 = vmatpush.msra.mxu0 0.0
    %2554 = vmatpush.msra.mxu0 0.0
    %2555 = vmatpush.msra.mxu0 0.0
    %2556 = vmatpush.msra.mxu0 0.0
    %2557 = vmatpush.msra.mxu0 0.0
    %2558 = vmatpush.msra.mxu0 0.0
    %2559 = vmatpush.msra.mxu0 0.0
    %2560 = vmatpush.msra.mxu0 0.0
    %2561 = vmatpush.msra.mxu0 0.0
    %2562 = vmatpush.msra.mxu0 0.0
    %2563 = vmatpush.msra.mxu0 0.0
    %2564 = vmatpush.msra.mxu0 0.0
    %2565 = vmatpush.msra.mxu0 0.0
    %v2566 = vand.u32 %v1714, 4294901760
    %v2567 = vsub.f32 %v1714, %v2566
    %v2568 = vand.u32 %v2567, 4294901760
    %v2569 = vsub.f32 %v2567, %v2568
    %v2570 = vand.u32 %v2569, 4294901760
    %2571 = vmatpush.msra.mxu0 %v2570
    %v2572 = vand.u32 %v1710, 4294901760
    %v2573 = vsub.f32 %v1710, %v2572
    %v2574 = vand.u32 %v2573, 4294901760
    %v2575 = vsub.f32 %v2573, %v2574
    %v2576 = vand.u32 %v2575, 4294901760
    %2577 = vmatpush.msra.mxu0 %v2576
    %v2578 = vand.u32 %v2523, 4294901760
    %2579 = vmatmul.f32.gmra.mxu0 %v2578
    %v2580 = vpop.f32.mrf.mxu0
    %v2581 = vadd.f32 %v2550, %v2580
    %2582 = vdwg.mxu0
    %2583 = vmatpush.msra.mxu0 0.0
    %2584 = vmatpush.msra.mxu0 0.0
    %2585 = vmatpush.msra.mxu0 0.0
    %2586 = vmatpush.msra.mxu0 0.0
    %2587 = vmatpush.msra.mxu0 0.0
    %2588 = vmatpush.msra.mxu0 0.0
    %2589 = vmatpush.msra.mxu0 0.0
    %2590 = vmatpush.msra.mxu0 0.0
    %2591 = vmatpush.msra.mxu0 0.0
    %2592 = vmatpush.msra.mxu0 0.0
    %2593 = vmatpush.msra.mxu0 0.0
    %2594 = vmatpush.msra.mxu0 0.0
    %2595 = vmatpush.msra.mxu0 0.0
    %2596 = vmatpush.msra.mxu0 0.0
    %v2597 = vand.u32 %v1714, 4294901760
    %v2598 = vsub.f32 %v1714, %v2597
    %2599 = vmatpush.msra.mxu0 %v2598
    %v2600 = vand.u32 %v1710, 4294901760
    %v2601 = vsub.f32 %v1710, %v2600
    %2602 = vmatpush.msra.mxu0 %v2601
    %v2603 = vand.u32 %v2523, 4294901760
    %v2604 = vsub.f32 %v2523, %v2603
    %2605 = vmatmul.f32.gmra.mxu0 %v2604
    %v2606 = vpop.f32.mrf.mxu0
    %v2607 = vadd.f32 %v2581, %v2606
    %2608 = vdwg.mxu0
    %2609 = vmatpush.msra.mxu0 0.0
    %2610 = vmatpush.msra.mxu0 0.0
    %2611 = vmatpush.msra.mxu0 0.0
    %2612 = vmatpush.msra.mxu0 0.0
    %2613 = vmatpush.msra.mxu0 0.0
    %2614 = vmatpush.msra.mxu0 0.0
    %2615 = vmatpush.msra.mxu0 0.0
    %2616 = vmatpush.msra.mxu0 0.0
    %2617 = vmatpush.msra.mxu0 0.0
    %2618 = vmatpush.msra.mxu0 0.0
    %2619 = vmatpush.msra.mxu0 0.0
    %2620 = vmatpush.msra.mxu0 0.0
    %2621 = vmatpush.msra.mxu0 0.0
    %2622 = vmatpush.msra.mxu0 0.0
    %v2623 = vand.u32 %v1714, 4294901760
    %2624 = vmatpush.msra.mxu0 %v2623
    %v2625 = vand.u32 %v1710, 4294901760
    %2626 = vmatpush.msra.mxu0 %v2625
    %v2627 = vand.u32 %v2523, 4294901760
    %v2628 = vsub.f32 %v2523, %v2627
    %v2629 = vand.u32 %v2628, 4294901760
    %2630 = vmatmul.f32.gmra.mxu0 %v2629
    %v2631 = vpop.f32.mrf.mxu0
    %v2632 = vadd.f32 %v2607, %v2631
    %2633 = vdwg.mxu0
    %2634 = vmatpush.msra.mxu0 0.0
    %2635 = vmatpush.msra.mxu0 0.0
    %2636 = vmatpush.msra.mxu0 0.0
    %2637 = vmatpush.msra.mxu0 0.0
    %2638 = vmatpush.msra.mxu0 0.0
    %2639 = vmatpush.msra.mxu0 0.0
    %2640 = vmatpush.msra.mxu0 0.0
    %2641 = vmatpush.msra.mxu0 0.0
    %2642 = vmatpush.msra.mxu0 0.0
    %2643 = vmatpush.msra.mxu0 0.0
    %2644 = vmatpush.msra.mxu0 0.0
    %2645 = vmatpush.msra.mxu0 0.0
    %2646 = vmatpush.msra.mxu0 0.0
    %2647 = vmatpush.msra.mxu0 0.0
    %v2648 = vand.u32 %v1714, 4294901760
    %v2649 = vsub.f32 %v1714, %v2648
    %v2650 = vand.u32 %v2649, 4294901760
    %2651 = vmatpush.msra.mxu0 %v2650
    %v2652 = vand.u32 %v1710, 4294901760
    %v2653 = vsub.f32 %v1710, %v2652
    %v2654 = vand.u32 %v2653, 4294901760
    %2655 = vmatpush.msra.mxu0 %v2654
    %v2656 = vand.u32 %v2523, 4294901760
    %2657 = vmatmul.f32.gmra.mxu0 %v2656
    %v2658 = vpop.f32.mrf.mxu0
    %v2659 = vadd.f32 %v2632, %v2658
    %2660 = vdwg.mxu0
    %2661 = vmatpush.msra.mxu0 0.0
    %2662 = vmatpush.msra.mxu0 0.0
    %2663 = vmatpush.msra.mxu0 0.0
    %2664 = vmatpush.msra.mxu0 0.0
    %2665 = vmatpush.msra.mxu0 0.0
    %2666 = vmatpush.msra.mxu0 0.0
    %2667 = vmatpush.msra.mxu0 0.0
    %2668 = vmatpush.msra.mxu0 0.0
    %2669 = vmatpush.msra.mxu0 0.0
    %2670 = vmatpush.msra.mxu0 0.0
    %2671 = vmatpush.msra.mxu0 0.0
    %2672 = vmatpush.msra.mxu0 0.0
    %2673 = vmatpush.msra.mxu0 0.0
    %2674 = vmatpush.msra.mxu0 0.0
    %v2675 = vand.u32 %v1714, 4294901760
    %2676 = vmatpush.msra.mxu0 %v2675
    %v2677 = vand.u32 %v1710, 4294901760
    %2678 = vmatpush.msra.mxu0 %v2677
    %v2679 = vand.u32 %v2523, 4294901760
    %2680 = vmatmul.f32.gmra.mxu0 %v2679
    %v2681 = vpop.f32.mrf.mxu0
    %v2682 = vadd.f32 %v2659, %v2681
    %2683 = vdwg.mxu0
    %v2684 = vsel %vm1902, %v553, 0
    %2686 = vmatpush.msra.mxu0 0.0
    %2687 = vmatpush.msra.mxu0 0.0
    %2688 = vmatpush.msra.mxu0 0.0
    %2689 = vmatpush.msra.mxu0 0.0
    %2690 = vmatpush.msra.mxu0 0.0
    %2691 = vmatpush.msra.mxu0 0.0
    %2692 = vmatpush.msra.mxu0 0.0
    %2693 = vmatpush.msra.mxu0 0.0
    %2694 = vmatpush.msra.mxu0 0.0
    %2695 = vmatpush.msra.mxu0 0.0
    %2696 = vmatpush.msra.mxu0 0.0
    %2697 = vmatpush.msra.mxu0 0.0
    %2698 = vmatpush.msra.mxu0 0.0
    %2699 = vmatpush.msra.mxu0 0.0
    %v2700 = vand.u32 %v1900, 4294901760
    %2701 = vmatpush.msra.mxu0 %v2700
    %v2702 = vand.u32 %v1896, 4294901760
    %2703 = vmatpush.msra.mxu0 %v2702
    %v2704 = vand.u32 %v2684, 4294901760
    %v2705 = vsub.f32 %v2684, %v2704
    %v2706 = vand.u32 %v2705, 4294901760
    %v2707 = vsub.f32 %v2705, %v2706
    %v2708 = vand.u32 %v2707, 4294901760
    %2709 = vmatmul.f32.gmra.mxu0 %v2708
    %v2710 = vpop.f32.mrf.mxu0
    %v2711 = vadd.f32 0.0, %v2710
    %2712 = vdwg.mxu0
    %2713 = vmatpush.msra.mxu0 0.0
    %2714 = vmatpush.msra.mxu0 0.0
    %2715 = vmatpush.msra.mxu0 0.0
    %2716 = vmatpush.msra.mxu0 0.0
    %2717 = vmatpush.msra.mxu0 0.0
    %2718 = vmatpush.msra.mxu0 0.0
    %2719 = vmatpush.msra.mxu0 0.0
    %2720 = vmatpush.msra.mxu0 0.0
    %2721 = vmatpush.msra.mxu0 0.0
    %2722 = vmatpush.msra.mxu0 0.0
    %2723 = vmatpush.msra.mxu0 0.0
    %2724 = vmatpush.msra.mxu0 0.0
    %2725 = vmatpush.msra.mxu0 0.0
    %2726 = vmatpush.msra.mxu0 0.0
    %v2727 = vand.u32 %v1900, 4294901760
    %v2728 = vsub.f32 %v1900, %v2727
    %v2729 = vand.u32 %v2728, 4294901760
    %v2730 = vsub.f32 %v2728, %v2729
    %v2731 = vand.u32 %v2730, 4294901760
    %2732 = vmatpush.msra.mxu0 %v2731
    %v2733 = vand.u32 %v1896, 4294901760
    %v2734 = vsub.f32 %v1896, %v2733
    %v2735 = vand.u32 %v2734, 4294901760
    %v2736 = vsub.f32 %v2734, %v2735
    %v2737 = vand.u32 %v2736, 4294901760
    %2738 = vmatpush.msra.mxu0 %v2737
    %v2739 = vand.u32 %v2684, 4294901760
    %2740 = vmatmul.f32.gmra.mxu0 %v2739
    %v2741 = vpop.f32.mrf.mxu0
    %v2742 = vadd.f32 %v2711, %v2741
    %2743 = vdwg.mxu0
    %2744 = vmatpush.msra.mxu0 0.0
    %2745 = vmatpush.msra.mxu0 0.0
    %2746 = vmatpush.msra.mxu0 0.0
    %2747 = vmatpush.msra.mxu0 0.0
    %2748 = vmatpush.msra.mxu0 0.0
    %2749 = vmatpush.msra.mxu0 0.0
    %2750 = vmatpush.msra.mxu0 0.0
    %2751 = vmatpush.msra.mxu0 0.0
    %2752 = vmatpush.msra.mxu0 0.0
    %2753 = vmatpush.msra.mxu0 0.0
    %2754 = vmatpush.msra.mxu0 0.0
    %2755 = vmatpush.msra.mxu0 0.0
    %2756 = vmatpush.msra.mxu0 0.0
    %2757 = vmatpush.msra.mxu0 0.0
    %v2758 = vand.u32 %v1900, 4294901760
    %v2759 = vsub.f32 %v1900, %v2758
    %2760 = vmatpush.msra.mxu0 %v2759
    %v2761 = vand.u32 %v1896, 4294901760
    %v2762 = vsub.f32 %v1896, %v2761
    %2763 = vmatpush.msra.mxu0 %v2762
    %v2764 = vand.u32 %v2684, 4294901760
    %v2765 = vsub.f32 %v2684, %v2764
    %2766 = vmatmul.f32.gmra.mxu0 %v2765
    %v2767 = vpop.f32.mrf.mxu0
    %v2768 = vadd.f32 %v2742, %v2767
    %2769 = vdwg.mxu0
    %2770 = vmatpush.msra.mxu0 0.0
    %2771 = vmatpush.msra.mxu0 0.0
    %2772 = vmatpush.msra.mxu0 0.0
    %2773 = vmatpush.msra.mxu0 0.0
    %2774 = vmatpush.msra.mxu0 0.0
    %2775 = vmatpush.msra.mxu0 0.0
    %2776 = vmatpush.msra.mxu0 0.0
    %2777 = vmatpush.msra.mxu0 0.0
    %2778 = vmatpush.msra.mxu0 0.0
    %2779 = vmatpush.msra.mxu0 0.0
    %2780 = vmatpush.msra.mxu0 0.0
    %2781 = vmatpush.msra.mxu0 0.0
    %2782 = vmatpush.msra.mxu0 0.0
    %2783 = vmatpush.msra.mxu0 0.0
    %v2784 = vand.u32 %v1900, 4294901760
    %2785 = vmatpush.msra.mxu0 %v2784
    %v2786 = vand.u32 %v1896, 4294901760
    %2787 = vmatpush.msra.mxu0 %v2786
    %v2788 = vand.u32 %v2684, 4294901760
    %v2789 = vsub.f32 %v2684, %v2788
    %v2790 = vand.u32 %v2789, 4294901760
    %2791 = vmatmul.f32.gmra.mxu0 %v2790
    %v2792 = vpop.f32.mrf.mxu0
    %v2793 = vadd.f32 %v2768, %v2792
    %2794 = vdwg.mxu0
    %2795 = vmatpush.msra.mxu0 0.0
    %2796 = vmatpush.msra.mxu0 0.0
    %2797 = vmatpush.msra.mxu0 0.0
    %2798 = vmatpush.msra.mxu0 0.0
    %2799 = vmatpush.msra.mxu0 0.0
    %2800 = vmatpush.msra.mxu0 0.0
    %2801 = vmatpush.msra.mxu0 0.0
    %2802 = vmatpush.msra.mxu0 0.0
    %2803 = vmatpush.msra.mxu0 0.0
    %2804 = vmatpush.msra.mxu0 0.0
    %2805 = vmatpush.msra.mxu0 0.0
    %2806 = vmatpush.msra.mxu0 0.0
    %2807 = vmatpush.msra.mxu0 0.0
    %2808 = vmatpush.msra.mxu0 0.0
    %v2809 = vand.u32 %v1900, 4294901760
    %v2810 = vsub.f32 %v1900, %v2809
    %v2811 = vand.u32 %v2810, 4294901760
    %2812 = vmatpush.msra.mxu0 %v2811
    %v2813 = vand.u32 %v1896, 4294901760
    %v2814 = vsub.f32 %v1896, %v2813
    %v2815 = vand.u32 %v2814, 4294901760
    %2816 = vmatpush.msra.mxu0 %v2815
    %v2817 = vand.u32 %v2684, 4294901760
    %2818 = vmatmul.f32.gmra.mxu0 %v2817
    %v2819 = vpop.f32.mrf.mxu0
    %v2820 = vadd.f32 %v2793, %v2819
    %2821 = vdwg.mxu0
    %2822 = vmatpush.msra.mxu0 0.0
    %2823 = vmatpush.msra.mxu0 0.0
    %2824 = vmatpush.msra.mxu0 0.0
    %2825 = vmatpush.msra.mxu0 0.0
    %2826 = vmatpush.msra.mxu0 0.0
    %2827 = vmatpush.msra.mxu0 0.0
    %2828 = vmatpush.msra.mxu0 0.0
    %2829 = vmatpush.msra.mxu0 0.0
    %2830 = vmatpush.msra.mxu0 0.0
    %2831 = vmatpush.msra.mxu0 0.0
    %2832 = vmatpush.msra.mxu0 0.0
    %2833 = vmatpush.msra.mxu0 0.0
    %2834 = vmatpush.msra.mxu0 0.0
    %2835 = vmatpush.msra.mxu0 0.0
    %v2836 = vand.u32 %v1900, 4294901760
    %2837 = vmatpush.msra.mxu0 %v2836
    %v2838 = vand.u32 %v1896, 4294901760
    %2839 = vmatpush.msra.mxu0 %v2838
    %v2840 = vand.u32 %v2684, 4294901760
    %2841 = vmatmul.f32.gmra.mxu0 %v2840
    %v2842 = vpop.f32.mrf.mxu0
    %v2843 = vadd.f32 %v2820, %v2842
    %2844 = vdwg.mxu0
    %v2845 = vsel %vm369, %v742, 0
    %2847 = vmatpush.msra.mxu0 0.0
    %2848 = vmatpush.msra.mxu0 0.0
    %2849 = vmatpush.msra.mxu0 0.0
    %2850 = vmatpush.msra.mxu0 0.0
    %2851 = vmatpush.msra.mxu0 0.0
    %2852 = vmatpush.msra.mxu0 0.0
    %2853 = vmatpush.msra.mxu0 0.0
    %2854 = vmatpush.msra.mxu0 0.0
    %2855 = vmatpush.msra.mxu0 0.0
    %2856 = vmatpush.msra.mxu0 0.0
    %2857 = vmatpush.msra.mxu0 0.0
    %2858 = vmatpush.msra.mxu0 0.0
    %2859 = vmatpush.msra.mxu0 0.0
    %2860 = vmatpush.msra.mxu0 0.0
    %2861 = vmatpush.msra.mxu0 0.0
    %v2862 = vand.u32 %v2063, 4294901760
    %2863 = vmatpush.msra.mxu0 %v2862
    %v2864 = vand.u32 %v2845, 4294901760
    %v2865 = vsub.f32 %v2845, %v2864
    %v2866 = vand.u32 %v2865, 4294901760
    %v2867 = vsub.f32 %v2865, %v2866
    %v2868 = vand.u32 %v2867, 4294901760
    %2869 = vmatmul.f32.gmra.mxu0 %v2868
    %v2870 = vpop.f32.mrf.mxu0
    %v2871 = vadd.f32 0.0, %v2870
    %2872 = vdwg.mxu0
    %2873 = vmatpush.msra.mxu0 0.0
    %2874 = vmatpush.msra.mxu0 0.0
    %2875 = vmatpush.msra.mxu0 0.0
    %2876 = vmatpush.msra.mxu0 0.0
    %2877 = vmatpush.msra.mxu0 0.0
    %2878 = vmatpush.msra.mxu0 0.0
    %2879 = vmatpush.msra.mxu0 0.0
    %2880 = vmatpush.msra.mxu0 0.0
    %2881 = vmatpush.msra.mxu0 0.0
    %2882 = vmatpush.msra.mxu0 0.0
    %2883 = vmatpush.msra.mxu0 0.0
    %2884 = vmatpush.msra.mxu0 0.0
    %2885 = vmatpush.msra.mxu0 0.0
    %2886 = vmatpush.msra.mxu0 0.0
    %2887 = vmatpush.msra.mxu0 0.0
    %v2888 = vand.u32 %v2063, 4294901760
    %v2889 = vsub.f32 %v2063, %v2888
    %v2890 = vand.u32 %v2889, 4294901760
    %v2891 = vsub.f32 %v2889, %v2890
    %v2892 = vand.u32 %v2891, 4294901760
    %2893 = vmatpush.msra.mxu0 %v2892
    %v2894 = vand.u32 %v2845, 4294901760
    %2895 = vmatmul.f32.gmra.mxu0 %v2894
    %v2896 = vpop.f32.mrf.mxu0
    %v2897 = vadd.f32 %v2871, %v2896
    %2898 = vdwg.mxu0
    %2899 = vmatpush.msra.mxu0 0.0
    %2900 = vmatpush.msra.mxu0 0.0
    %2901 = vmatpush.msra.mxu0 0.0
    %2902 = vmatpush.msra.mxu0 0.0
    %2903 = vmatpush.msra.mxu0 0.0
    %2904 = vmatpush.msra.mxu0 0.0
    %2905 = vmatpush.msra.mxu0 0.0
    %2906 = vmatpush.msra.mxu0 0.0
    %2907 = vmatpush.msra.mxu0 0.0
    %2908 = vmatpush.msra.mxu0 0.0
    %2909 = vmatpush.msra.mxu0 0.0
    %2910 = vmatpush.msra.mxu0 0.0
    %2911 = vmatpush.msra.mxu0 0.0
    %2912 = vmatpush.msra.mxu0 0.0
    %2913 = vmatpush.msra.mxu0 0.0
    %v2914 = vand.u32 %v2063, 4294901760
    %v2915 = vsub.f32 %v2063, %v2914
    %2916 = vmatpush.msra.mxu0 %v2915
    %v2917 = vand.u32 %v2845, 4294901760
    %v2918 = vsub.f32 %v2845, %v2917
    %2919 = vmatmul.f32.gmra.mxu0 %v2918
    %v2920 = vpop.f32.mrf.mxu0
    %v2921 = vadd.f32 %v2897, %v2920
    %2922 = vdwg.mxu0
    %2923 = vmatpush.msra.mxu0 0.0
    %2924 = vmatpush.msra.mxu0 0.0
    %2925 = vmatpush.msra.mxu0 0.0
    %2926 = vmatpush.msra.mxu0 0.0
    %2927 = vmatpush.msra.mxu0 0.0
    %2928 = vmatpush.msra.mxu0 0.0
    %2929 = vmatpush.msra.mxu0 0.0
    %2930 = vmatpush.msra.mxu0 0.0
    %2931 = vmatpush.msra.mxu0 0.0
    %2932 = vmatpush.msra.mxu0 0.0
    %2933 = vmatpush.msra.mxu0 0.0
    %2934 = vmatpush.msra.mxu0 0.0
    %2935 = vmatpush.msra.mxu0 0.0
    %2936 = vmatpush.msra.mxu0 0.0
    %2937 = vmatpush.msra.mxu0 0.0
    %v2938 = vand.u32 %v2063, 4294901760
    %2939 = vmatpush.msra.mxu0 %v2938
    %v2940 = vand.u32 %v2845, 4294901760
    %v2941 = vsub.f32 %v2845, %v2940
    %v2942 = vand.u32 %v2941, 4294901760
    %2943 = vmatmul.f32.gmra.mxu0 %v2942
    %v2944 = vpop.f32.mrf.mxu0
    %v2945 = vadd.f32 %v2921, %v2944
    %2946 = vdwg.mxu0
    %2947 = vmatpush.msra.mxu0 0.0
    %2948 = vmatpush.msra.mxu0 0.0
    %2949 = vmatpush.msra.mxu0 0.0
    %2950 = vmatpush.msra.mxu0 0.0
    %2951 = vmatpush.msra.mxu0 0.0
    %2952 = vmatpush.msra.mxu0 0.0
    %2953 = vmatpush.msra.mxu0 0.0
    %2954 = vmatpush.msra.mxu0 0.0
    %2955 = vmatpush.msra.mxu0 0.0
    %2956 = vmatpush.msra.mxu0 0.0
    %2957 = vmatpush.msra.mxu0 0.0
    %2958 = vmatpush.msra.mxu0 0.0
    %2959 = vmatpush.msra.mxu0 0.0
    %2960 = vmatpush.msra.mxu0 0.0
    %2961 = vmatpush.msra.mxu0 0.0
    %v2962 = vand.u32 %v2063, 4294901760
    %v2963 = vsub.f32 %v2063, %v2962
    %v2964 = vand.u32 %v2963, 4294901760
    %2965 = vmatpush.msra.mxu0 %v2964
    %v2966 = vand.u32 %v2845, 4294901760
    %2967 = vmatmul.f32.gmra.mxu0 %v2966
    %v2968 = vpop.f32.mrf.mxu0
    %v2969 = vadd.f32 %v2945, %v2968
    %2970 = vdwg.mxu0
    %2971 = vmatpush.msra.mxu0 0.0
    %2972 = vmatpush.msra.mxu0 0.0
    %2973 = vmatpush.msra.mxu0 0.0
    %2974 = vmatpush.msra.mxu0 0.0
    %2975 = vmatpush.msra.mxu0 0.0
    %2976 = vmatpush.msra.mxu0 0.0
    %2977 = vmatpush.msra.mxu0 0.0
    %2978 = vmatpush.msra.mxu0 0.0
    %2979 = vmatpush.msra.mxu0 0.0
    %2980 = vmatpush.msra.mxu0 0.0
    %2981 = vmatpush.msra.mxu0 0.0
    %2982 = vmatpush.msra.mxu0 0.0
    %2983 = vmatpush.msra.mxu0 0.0
    %2984 = vmatpush.msra.mxu0 0.0
    %2985 = vmatpush.msra.mxu0 0.0
    %v2986 = vand.u32 %v2063, 4294901760
    %2987 = vmatpush.msra.mxu0 %v2986
    %v2988 = vand.u32 %v2845, 4294901760
    %2989 = vmatmul.f32.gmra.mxu0 %v2988
    %v2990 = vpop.f32.mrf.mxu0
    %v2991 = vadd.f32 %v2969, %v2990
    %2992 = vdwg.mxu0
    %v2993 = vsel %vm369, %v929, 0
    %2995 = vmatpush.msra.mxu0 0.0
    %2996 = vmatpush.msra.mxu0 0.0
    %2997 = vmatpush.msra.mxu0 0.0
    %2998 = vmatpush.msra.mxu0 0.0
    %2999 = vmatpush.msra.mxu0 0.0
    %3000 = vmatpush.msra.mxu0 0.0
    %3001 = vmatpush.msra.mxu0 0.0
    %3002 = vmatpush.msra.mxu0 0.0
    %3003 = vmatpush.msra.mxu0 0.0
    %3004 = vmatpush.msra.mxu0 0.0
    %3005 = vmatpush.msra.mxu0 0.0
    %3006 = vmatpush.msra.mxu0 0.0
    %3007 = vmatpush.msra.mxu0 0.0
    %3008 = vmatpush.msra.mxu0 0.0
    %3009 = vmatpush.msra.mxu0 0.0
    %v3010 = vand.u32 %v2225, 4294901760
    %3011 = vmatpush.msra.mxu0 %v3010
    %v3012 = vand.u32 %v2993, 4294901760
    %v3013 = vsub.f32 %v2993, %v3012
    %v3014 = vand.u32 %v3013, 4294901760
    %v3015 = vsub.f32 %v3013, %v3014
    %v3016 = vand.u32 %v3015, 4294901760
    %3017 = vmatmul.f32.gmra.mxu0 %v3016
    %v3018 = vpop.f32.mrf.mxu0
    %v3019 = vadd.f32 0.0, %v3018
    %3020 = vdwg.mxu0
    %3021 = vmatpush.msra.mxu0 0.0
    %3022 = vmatpush.msra.mxu0 0.0
    %3023 = vmatpush.msra.mxu0 0.0
    %3024 = vmatpush.msra.mxu0 0.0
    %3025 = vmatpush.msra.mxu0 0.0
    %3026 = vmatpush.msra.mxu0 0.0
    %3027 = vmatpush.msra.mxu0 0.0
    %3028 = vmatpush.msra.mxu0 0.0
    %3029 = vmatpush.msra.mxu0 0.0
    %3030 = vmatpush.msra.mxu0 0.0
    %3031 = vmatpush.msra.mxu0 0.0
    %3032 = vmatpush.msra.mxu0 0.0
    %3033 = vmatpush.msra.mxu0 0.0
    %3034 = vmatpush.msra.mxu0 0.0
    %3035 = vmatpush.msra.mxu0 0.0
    %v3036 = vand.u32 %v2225, 4294901760
    %v3037 = vsub.f32 %v2225, %v3036
    %v3038 = vand.u32 %v3037, 4294901760
    %v3039 = vsub.f32 %v3037, %v3038
    %v3040 = vand.u32 %v3039, 4294901760
    %3041 = vmatpush.msra.mxu0 %v3040
    %v3042 = vand.u32 %v2993, 4294901760
    %3043 = vmatmul.f32.gmra.mxu0 %v3042
    %v3044 = vpop.f32.mrf.mxu0
    %v3045 = vadd.f32 %v3019, %v3044
    %3046 = vdwg.mxu0
    %3047 = vmatpush.msra.mxu0 0.0
    %3048 = vmatpush.msra.mxu0 0.0
    %3049 = vmatpush.msra.mxu0 0.0
    %3050 = vmatpush.msra.mxu0 0.0
    %3051 = vmatpush.msra.mxu0 0.0
    %3052 = vmatpush.msra.mxu0 0.0
    %3053 = vmatpush.msra.mxu0 0.0
    %3054 = vmatpush.msra.mxu0 0.0
    %3055 = vmatpush.msra.mxu0 0.0
    %3056 = vmatpush.msra.mxu0 0.0
    %3057 = vmatpush.msra.mxu0 0.0
    %3058 = vmatpush.msra.mxu0 0.0
    %3059 = vmatpush.msra.mxu0 0.0
    %3060 = vmatpush.msra.mxu0 0.0
    %3061 = vmatpush.msra.mxu0 0.0
    %v3062 = vand.u32 %v2225, 4294901760
    %v3063 = vsub.f32 %v2225, %v3062
    %3064 = vmatpush.msra.mxu0 %v3063
    %v3065 = vand.u32 %v2993, 4294901760
    %v3066 = vsub.f32 %v2993, %v3065
    %3067 = vmatmul.f32.gmra.mxu0 %v3066
    %v3068 = vpop.f32.mrf.mxu0
    %v3069 = vadd.f32 %v3045, %v3068
    %3070 = vdwg.mxu0
    %3071 = vmatpush.msra.mxu0 0.0
    %3072 = vmatpush.msra.mxu0 0.0
    %3073 = vmatpush.msra.mxu0 0.0
    %3074 = vmatpush.msra.mxu0 0.0
    %3075 = vmatpush.msra.mxu0 0.0
    %3076 = vmatpush.msra.mxu0 0.0
    %3077 = vmatpush.msra.mxu0 0.0
    %3078 = vmatpush.msra.mxu0 0.0
    %3079 = vmatpush.msra.mxu0 0.0
    %3080 = vmatpush.msra.mxu0 0.0
    %3081 = vmatpush.msra.mxu0 0.0
    %3082 = vmatpush.msra.mxu0 0.0
    %3083 = vmatpush.msra.mxu0 0.0
    %3084 = vmatpush.msra.mxu0 0.0
    %3085 = vmatpush.msra.mxu0 0.0
    %v3086 = vand.u32 %v2225, 4294901760
    %3087 = vmatpush.msra.mxu0 %v3086
    %v3088 = vand.u32 %v2993, 4294901760
    %v3089 = vsub.f32 %v2993, %v3088
    %v3090 = vand.u32 %v3089, 4294901760
    %3091 = vmatmul.f32.gmra.mxu0 %v3090
    %v3092 = vpop.f32.mrf.mxu0
    %v3093 = vadd.f32 %v3069, %v3092
    %3094 = vdwg.mxu0
    %3095 = vmatpush.msra.mxu0 0.0
    %3096 = vmatpush.msra.mxu0 0.0
    %3097 = vmatpush.msra.mxu0 0.0
    %3098 = vmatpush.msra.mxu0 0.0
    %3099 = vmatpush.msra.mxu0 0.0
    %3100 = vmatpush.msra.mxu0 0.0
    %3101 = vmatpush.msra.mxu0 0.0
    %3102 = vmatpush.msra.mxu0 0.0
    %3103 = vmatpush.msra.mxu0 0.0
    %3104 = vmatpush.msra.mxu0 0.0
    %3105 = vmatpush.msra.mxu0 0.0
    %3106 = vmatpush.msra.mxu0 0.0
    %3107 = vmatpush.msra.mxu0 0.0
    %3108 = vmatpush.msra.mxu0 0.0
    %3109 = vmatpush.msra.mxu0 0.0
    %v3110 = vand.u32 %v2225, 4294901760
    %v3111 = vsub.f32 %v2225, %v3110
    %v3112 = vand.u32 %v3111, 4294901760
    %3113 = vmatpush.msra.mxu0 %v3112
    %v3114 = vand.u32 %v2993, 4294901760
    %3115 = vmatmul.f32.gmra.mxu0 %v3114
    %v3116 = vpop.f32.mrf.mxu0
    %v3117 = vadd.f32 %v3093, %v3116
    %3118 = vdwg.mxu0
    %3119 = vmatpush.msra.mxu0 0.0
    %3120 = vmatpush.msra.mxu0 0.0
    %3121 = vmatpush.msra.mxu0 0.0
    %3122 = vmatpush.msra.mxu0 0.0
    %3123 = vmatpush.msra.mxu0 0.0
    %3124 = vmatpush.msra.mxu0 0.0
    %3125 = vmatpush.msra.mxu0 0.0
    %3126 = vmatpush.msra.mxu0 0.0
    %3127 = vmatpush.msra.mxu0 0.0
    %3128 = vmatpush.msra.mxu0 0.0
    %3129 = vmatpush.msra.mxu0 0.0
    %3130 = vmatpush.msra.mxu0 0.0
    %3131 = vmatpush.msra.mxu0 0.0
    %3132 = vmatpush.msra.mxu0 0.0
    %3133 = vmatpush.msra.mxu0 0.0
    %v3134 = vand.u32 %v2225, 4294901760
    %3135 = vmatpush.msra.mxu0 %v3134
    %v3136 = vand.u32 %v2993, 4294901760
    %3137 = vmatmul.f32.gmra.mxu0 %v3136
    %v3138 = vpop.f32.mrf.mxu0
    %v3139 = vadd.f32 %v3117, %v3138
    %3140 = vdwg.mxu0
    %v3141 = vsel %vm1528, %v1118, 0
    %v3144 = vsel %vm1535, %v2373, 0
    %3146 = vmatpush.msra.mxu0 0.0
    %3147 = vmatpush.msra.mxu0 0.0
    %3148 = vmatpush.msra.mxu0 0.0
    %3149 = vmatpush.msra.mxu0 0.0
    %3150 = vmatpush.msra.mxu0 0.0
    %3151 = vmatpush.msra.mxu0 0.0
    %3152 = vmatpush.msra.mxu0 0.0
    %3153 = vmatpush.msra.mxu0 0.0
    %3154 = vmatpush.msra.mxu0 0.0
    %3155 = vmatpush.msra.mxu0 0.0
    %3156 = vmatpush.msra.mxu0 0.0
    %3157 = vmatpush.msra.mxu0 0.0
    %3158 = vmatpush.msra.mxu0 0.0
    %3159 = vmatpush.msra.mxu0 0.0
    %3160 = vmatpush.msra.mxu0 0.0
    %v3161 = vand.u32 %v3144, 4294901760
    %3162 = vmatpush.msra.mxu0 %v3161
    %v3163 = vand.u32 %v3141, 4294901760
    %v3164 = vsub.f32 %v3141, %v3163
    %v3165 = vand.u32 %v3164, 4294901760
    %v3166 = vsub.f32 %v3164, %v3165
    %v3167 = vand.u32 %v3166, 4294901760
    %3168 = vmatmul.f32.gmra.mxu0 %v3167
    %v3169 = vpop.f32.mrf.mxu0
    %v3170 = vadd.f32 0.0, %v3169
    %3171 = vdwg.mxu0
    %3172 = vmatpush.msra.mxu0 0.0
    %3173 = vmatpush.msra.mxu0 0.0
    %3174 = vmatpush.msra.mxu0 0.0
    %3175 = vmatpush.msra.mxu0 0.0
    %3176 = vmatpush.msra.mxu0 0.0
    %3177 = vmatpush.msra.mxu0 0.0
    %3178 = vmatpush.msra.mxu0 0.0
    %3179 = vmatpush.msra.mxu0 0.0
    %3180 = vmatpush.msra.mxu0 0.0
    %3181 = vmatpush.msra.mxu0 0.0
    %3182 = vmatpush.msra.mxu0 0.0
    %3183 = vmatpush.msra.mxu0 0.0
    %3184 = vmatpush.msra.mxu0 0.0
    %3185 = vmatpush.msra.mxu0 0.0
    %3186 = vmatpush.msra.mxu0 0.0
    %v3187 = vand.u32 %v3144, 4294901760
    %v3188 = vsub.f32 %v3144, %v3187
    %v3189 = vand.u32 %v3188, 4294901760
    %v3190 = vsub.f32 %v3188, %v3189
    %v3191 = vand.u32 %v3190, 4294901760
    %3192 = vmatpush.msra.mxu0 %v3191
    %v3193 = vand.u32 %v3141, 4294901760
    %3194 = vmatmul.f32.gmra.mxu0 %v3193
    %v3195 = vpop.f32.mrf.mxu0
    %v3196 = vadd.f32 %v3170, %v3195
    %3197 = vdwg.mxu0
    %3198 = vmatpush.msra.mxu0 0.0
    %3199 = vmatpush.msra.mxu0 0.0
    %3200 = vmatpush.msra.mxu0 0.0
    %3201 = vmatpush.msra.mxu0 0.0
    %3202 = vmatpush.msra.mxu0 0.0
    %3203 = vmatpush.msra.mxu0 0.0
    %3204 = vmatpush.msra.mxu0 0.0
    %3205 = vmatpush.msra.mxu0 0.0
    %3206 = vmatpush.msra.mxu0 0.0
    %3207 = vmatpush.msra.mxu0 0.0
    %3208 = vmatpush.msra.mxu0 0.0
    %3209 = vmatpush.msra.mxu0 0.0
    %3210 = vmatpush.msra.mxu0 0.0
    %3211 = vmatpush.msra.mxu0 0.0
    %3212 = vmatpush.msra.mxu0 0.0
    %v3213 = vand.u32 %v3144, 4294901760
    %v3214 = vsub.f32 %v3144, %v3213
    %3215 = vmatpush.msra.mxu0 %v3214
    %v3216 = vand.u32 %v3141, 4294901760
    %v3217 = vsub.f32 %v3141, %v3216
    %3218 = vmatmul.f32.gmra.mxu0 %v3217
    %v3219 = vpop.f32.mrf.mxu0
    %v3220 = vadd.f32 %v3196, %v3219
    %3221 = vdwg.mxu0
    %3222 = vmatpush.msra.mxu0 0.0
    %3223 = vmatpush.msra.mxu0 0.0
    %3224 = vmatpush.msra.mxu0 0.0
    %3225 = vmatpush.msra.mxu0 0.0
    %3226 = vmatpush.msra.mxu0 0.0
    %3227 = vmatpush.msra.mxu0 0.0
    %3228 = vmatpush.msra.mxu0 0.0
    %3229 = vmatpush.msra.mxu0 0.0
    %3230 = vmatpush.msra.mxu0 0.0
    %3231 = vmatpush.msra.mxu0 0.0
    %3232 = vmatpush.msra.mxu0 0.0
    %3233 = vmatpush.msra.mxu0 0.0
    %3234 = vmatpush.msra.mxu0 0.0
    %3235 = vmatpush.msra.mxu0 0.0
    %3236 = vmatpush.msra.mxu0 0.0
    %v3237 = vand.u32 %v3144, 4294901760
    %3238 = vmatpush.msra.mxu0 %v3237
    %v3239 = vand.u32 %v3141, 4294901760
    %v3240 = vsub.f32 %v3141, %v3239
    %v3241 = vand.u32 %v3240, 4294901760
    %3242 = vmatmul.f32.gmra.mxu0 %v3241
    %v3243 = vpop.f32.mrf.mxu0
    %v3244 = vadd.f32 %v3220, %v3243
    %3245 = vdwg.mxu0
    %3246 = vmatpush.msra.mxu0 0.0
    %3247 = vmatpush.msra.mxu0 0.0
    %3248 = vmatpush.msra.mxu0 0.0
    %3249 = vmatpush.msra.mxu0 0.0
    %3250 = vmatpush.msra.mxu0 0.0
    %3251 = vmatpush.msra.mxu0 0.0
    %3252 = vmatpush.msra.mxu0 0.0
    %3253 = vmatpush.msra.mxu0 0.0
    %3254 = vmatpush.msra.mxu0 0.0
    %3255 = vmatpush.msra.mxu0 0.0
    %3256 = vmatpush.msra.mxu0 0.0
    %3257 = vmatpush.msra.mxu0 0.0
    %3258 = vmatpush.msra.mxu0 0.0
    %3259 = vmatpush.msra.mxu0 0.0
    %3260 = vmatpush.msra.mxu0 0.0
    %v3261 = vand.u32 %v3144, 4294901760
    %v3262 = vsub.f32 %v3144, %v3261
    %v3263 = vand.u32 %v3262, 4294901760
    %3264 = vmatpush.msra.mxu0 %v3263
    %v3265 = vand.u32 %v3141, 4294901760
    %3266 = vmatmul.f32.gmra.mxu0 %v3265
    %v3267 = vpop.f32.mrf.mxu0
    %v3268 = vadd.f32 %v3244, %v3267
    %3269 = vdwg.mxu0
    %3270 = vmatpush.msra.mxu0 0.0
    %3271 = vmatpush.msra.mxu0 0.0
    %3272 = vmatpush.msra.mxu0 0.0
    %3273 = vmatpush.msra.mxu0 0.0
    %3274 = vmatpush.msra.mxu0 0.0
    %3275 = vmatpush.msra.mxu0 0.0
    %3276 = vmatpush.msra.mxu0 0.0
    %3277 = vmatpush.msra.mxu0 0.0
    %3278 = vmatpush.msra.mxu0 0.0
    %3279 = vmatpush.msra.mxu0 0.0
    %3280 = vmatpush.msra.mxu0 0.0
    %3281 = vmatpush.msra.mxu0 0.0
    %3282 = vmatpush.msra.mxu0 0.0
    %3283 = vmatpush.msra.mxu0 0.0
    %3284 = vmatpush.msra.mxu0 0.0
    %v3285 = vand.u32 %v3144, 4294901760
    %3286 = vmatpush.msra.mxu0 %v3285
    %v3287 = vand.u32 %v3141, 4294901760
    %3288 = vmatmul.f32.gmra.mxu0 %v3287
    %v3289 = vpop.f32.mrf.mxu0
    %v3290 = vadd.f32 %v3268, %v3289
    %3291 = vdwg.mxu0
    %v3292 = vsel %vm1528, %v1339, 0
    %v3295 = vsel %vm1535, %v2521, 0
    %3297 = vmatpush.msra.mxu0 0.0
    %3298 = vmatpush.msra.mxu0 0.0
    %3299 = vmatpush.msra.mxu0 0.0
    %3300 = vmatpush.msra.mxu0 0.0
    %3301 = vmatpush.msra.mxu0 0.0
    %3302 = vmatpush.msra.mxu0 0.0
    %3303 = vmatpush.msra.mxu0 0.0
    %3304 = vmatpush.msra.mxu0 0.0
    %3305 = vmatpush.msra.mxu0 0.0
    %3306 = vmatpush.msra.mxu0 0.0
    %3307 = vmatpush.msra.mxu0 0.0
    %3308 = vmatpush.msra.mxu0 0.0
    %3309 = vmatpush.msra.mxu0 0.0
    %3310 = vmatpush.msra.mxu0 0.0
    %3311 = vmatpush.msra.mxu0 0.0
    %v3312 = vand.u32 %v3295, 4294901760
    %3313 = vmatpush.msra.mxu0 %v3312
    %v3314 = vand.u32 %v3292, 4294901760
    %v3315 = vsub.f32 %v3292, %v3314
    %v3316 = vand.u32 %v3315, 4294901760
    %v3317 = vsub.f32 %v3315, %v3316
    %v3318 = vand.u32 %v3317, 4294901760
    %3319 = vmatmul.f32.gmra.mxu0 %v3318
    %v3320 = vpop.f32.mrf.mxu0
    %v3321 = vadd.f32 0.0, %v3320
    %3322 = vdwg.mxu0
    %3323 = vmatpush.msra.mxu0 0.0
    %3324 = vmatpush.msra.mxu0 0.0
    %3325 = vmatpush.msra.mxu0 0.0
    %3326 = vmatpush.msra.mxu0 0.0
    %3327 = vmatpush.msra.mxu0 0.0
    %3328 = vmatpush.msra.mxu0 0.0
    %3329 = vmatpush.msra.mxu0 0.0
    %3330 = vmatpush.msra.mxu0 0.0
    %3331 = vmatpush.msra.mxu0 0.0
    %3332 = vmatpush.msra.mxu0 0.0
    %3333 = vmatpush.msra.mxu0 0.0
    %3334 = vmatpush.msra.mxu0 0.0
    %3335 = vmatpush.msra.mxu0 0.0
    %3336 = vmatpush.msra.mxu0 0.0
    %3337 = vmatpush.msra.mxu0 0.0
    %v3338 = vand.u32 %v3295, 4294901760
    %v3339 = vsub.f32 %v3295, %v3338
    %v3340 = vand.u32 %v3339, 4294901760
    %v3341 = vsub.f32 %v3339, %v3340
    %v3342 = vand.u32 %v3341, 4294901760
    %3343 = vmatpush.msra.mxu0 %v3342
    %v3344 = vand.u32 %v3292, 4294901760
    %3345 = vmatmul.f32.gmra.mxu0 %v3344
    %v3346 = vpop.f32.mrf.mxu0
    %v3347 = vadd.f32 %v3321, %v3346
    %3348 = vdwg.mxu0
    %3349 = vmatpush.msra.mxu0 0.0
    %3350 = vmatpush.msra.mxu0 0.0
    %3351 = vmatpush.msra.mxu0 0.0
    %3352 = vmatpush.msra.mxu0 0.0
    %3353 = vmatpush.msra.mxu0 0.0
    %3354 = vmatpush.msra.mxu0 0.0
    %3355 = vmatpush.msra.mxu0 0.0
    %3356 = vmatpush.msra.mxu0 0.0
    %3357 = vmatpush.msra.mxu0 0.0
    %3358 = vmatpush.msra.mxu0 0.0
    %3359 = vmatpush.msra.mxu0 0.0
    %3360 = vmatpush.msra.mxu0 0.0
    %3361 = vmatpush.msra.mxu0 0.0
    %3362 = vmatpush.msra.mxu0 0.0
    %3363 = vmatpush.msra.mxu0 0.0
    %v3364 = vand.u32 %v3295, 4294901760
    %v3365 = vsub.f32 %v3295, %v3364
    %3366 = vmatpush.msra.mxu0 %v3365
    %v3367 = vand.u32 %v3292, 4294901760
    %v3368 = vsub.f32 %v3292, %v3367
    %3369 = vmatmul.f32.gmra.mxu0 %v3368
    %v3370 = vpop.f32.mrf.mxu0
    %v3371 = vadd.f32 %v3347, %v3370
    %3372 = vdwg.mxu0
    %3373 = vmatpush.msra.mxu0 0.0
    %3374 = vmatpush.msra.mxu0 0.0
    %3375 = vmatpush.msra.mxu0 0.0
    %3376 = vmatpush.msra.mxu0 0.0
    %3377 = vmatpush.msra.mxu0 0.0
    %3378 = vmatpush.msra.mxu0 0.0
    %3379 = vmatpush.msra.mxu0 0.0
    %3380 = vmatpush.msra.mxu0 0.0
    %3381 = vmatpush.msra.mxu0 0.0
    %3382 = vmatpush.msra.mxu0 0.0
    %3383 = vmatpush.msra.mxu0 0.0
    %3384 = vmatpush.msra.mxu0 0.0
    %3385 = vmatpush.msra.mxu0 0.0
    %3386 = vmatpush.msra.mxu0 0.0
    %3387 = vmatpush.msra.mxu0 0.0
    %v3388 = vand.u32 %v3295, 4294901760
    %3389 = vmatpush.msra.mxu0 %v3388
    %v3390 = vand.u32 %v3292, 4294901760
    %v3391 = vsub.f32 %v3292, %v3390
    %v3392 = vand.u32 %v3391, 4294901760
    %3393 = vmatmul.f32.gmra.mxu0 %v3392
    %v3394 = vpop.f32.mrf.mxu0
    %v3395 = vadd.f32 %v3371, %v3394
    %3396 = vdwg.mxu0
    %3397 = vmatpush.msra.mxu0 0.0
    %3398 = vmatpush.msra.mxu0 0.0
    %3399 = vmatpush.msra.mxu0 0.0
    %3400 = vmatpush.msra.mxu0 0.0
    %3401 = vmatpush.msra.mxu0 0.0
    %3402 = vmatpush.msra.mxu0 0.0
    %3403 = vmatpush.msra.mxu0 0.0
    %3404 = vmatpush.msra.mxu0 0.0
    %3405 = vmatpush.msra.mxu0 0.0
    %3406 = vmatpush.msra.mxu0 0.0
    %3407 = vmatpush.msra.mxu0 0.0
    %3408 = vmatpush.msra.mxu0 0.0
    %3409 = vmatpush.msra.mxu0 0.0
    %3410 = vmatpush.msra.mxu0 0.0
    %3411 = vmatpush.msra.mxu0 0.0
    %v3412 = vand.u32 %v3295, 4294901760
    %v3413 = vsub.f32 %v3295, %v3412
    %v3414 = vand.u32 %v3413, 4294901760
    %3415 = vmatpush.msra.mxu0 %v3414
    %v3416 = vand.u32 %v3292, 4294901760
    %3417 = vmatmul.f32.gmra.mxu0 %v3416
    %v3418 = vpop.f32.mrf.mxu0
    %v3419 = vadd.f32 %v3395, %v3418
    %3420 = vdwg.mxu0
    %3421 = vmatpush.msra.mxu0 0.0
    %3422 = vmatpush.msra.mxu0 0.0
    %3423 = vmatpush.msra.mxu0 0.0
    %3424 = vmatpush.msra.mxu0 0.0
    %3425 = vmatpush.msra.mxu0 0.0
    %3426 = vmatpush.msra.mxu0 0.0
    %3427 = vmatpush.msra.mxu0 0.0
    %3428 = vmatpush.msra.mxu0 0.0
    %3429 = vmatpush.msra.mxu0 0.0
    %3430 = vmatpush.msra.mxu0 0.0
    %3431 = vmatpush.msra.mxu0 0.0
    %3432 = vmatpush.msra.mxu0 0.0
    %3433 = vmatpush.msra.mxu0 0.0
    %3434 = vmatpush.msra.mxu0 0.0
    %3435 = vmatpush.msra.mxu0 0.0
    %v3436 = vand.u32 %v3295, 4294901760
    %3437 = vmatpush.msra.mxu0 %v3436
    %v3438 = vand.u32 %v3292, 4294901760
    %3439 = vmatmul.f32.gmra.mxu0 %v3438
    %v3440 = vpop.f32.mrf.mxu0
    %v3441 = vadd.f32 %v3419, %v3440
    %3442 = vdwg.mxu0
    %3445 = vrot.lane.b32.xlu0 %v2991, 8
    %v3446 = vpop.permute.xlu0 %3445
    %3447 = vrot.lane.b32.xlu0 %v3139, 8
    %v3448 = vpop.permute.xlu0 %3447
    %3453 = vrot.lane.b32.xlu0 %v3290, 12
    %v3454 = vpop.permute.xlu0 %3453
    %3455 = vrot.lane.b32.xlu0 %v3441, 12
    %v3456 = vpop.permute.xlu0 %3455
    %v3459 = vsel %vm369, %v2682, %v3446
    %v3460 = vsel %vm369, %v2843, %v3448
    %vm3461 = vcmask 97280
    %v3462 = vsel %vm3461, %v3459, %v3454
    %v3463 = vsel %vm3461, %v3460, %v3456
    %v3464 = vld [vmem:[%s4] sm:$0xff]
    %v3465 = vld [vmem:[%s4 + $0x8] sm:$0xff]
    %v3466 = vld [vmem:[%s4 + $0x10] sm:$0xff]
    %v3467 = vld [vmem:[%s4 + $0x18] sm:$0xff]
    %v3468 = vld [vmem:[%s4 + $0x20] sm:$0xff]
    %v3469 = vld [vmem:[%s4 + $0x28] sm:$0xff]
    %v3470 = vld [vmem:[%s4 + $0x30] sm:$0xff]
    %v3471 = vld [vmem:[%s4 + $0x38] sm:$0xff]
    %v3472 = vld [vmem:[%s4 + $0x40] sm:$0xff]
    %v3473 = vld [vmem:[%s4 + $0x48] sm:$0xf]
    %v3474 = vld [vmem:[%s4 + $0x50] sm:$0xf]
    %v3475 = vld [vmem:[%s4 + $0x58] sm:$0xf]
    %vm3476 = vcmask 228352
    %v3477 = vsel %vm3476, %v331, 0
    %v3479 = vsel %vm3476, %v332, 0
    %v3482 = vsel %vm1535, %v3473, 0
    %v3485 = vsel %vm1535, %v3474, 0
    %v3488 = vsel %vm1535, %v3475, 0
    %3490 = vmatpush.msra.mxu0 0.0
    %3491 = vmatpush.msra.mxu0 0.0
    %3492 = vmatpush.msra.mxu0 0.0
    %3493 = vmatpush.msra.mxu0 0.0
    %3494 = vmatpush.msra.mxu0 0.0
    %3495 = vmatpush.msra.mxu0 0.0
    %3496 = vmatpush.msra.mxu0 0.0
    %3497 = vmatpush.msra.mxu0 0.0
    %3498 = vmatpush.msra.mxu0 0.0
    %3499 = vmatpush.msra.mxu0 0.0
    %3500 = vmatpush.msra.mxu0 0.0
    %3501 = vmatpush.msra.mxu0 0.0
    %v3502 = vand.u32 %v3482, 4294901760
    %3503 = vmatpush.msra.mxu0 %v3502
    %v3504 = vand.u32 %v3470, 4294901760
    %3505 = vmatpush.msra.mxu0 %v3504
    %v3506 = vand.u32 %v3467, 4294901760
    %3507 = vmatpush.msra.mxu0 %v3506
    %v3508 = vand.u32 %v3464, 4294901760
    %3509 = vmatpush.msra.mxu0 %v3508
    %v3510 = vand.u32 %v3477, 4294901760
    %v3511 = vsub.f32 %v3477, %v3510
    %v3512 = vand.u32 %v3511, 4294901760
    %v3513 = vsub.f32 %v3511, %v3512
    %v3514 = vand.u32 %v3513, 4294901760
    %3515 = vmatmul.f32.gmra.mxu0 %v3514
    %v3516 = vpop.f32.mrf.mxu0
    %v3517 = vadd.f32 0.0, %v3516
    %v3518 = vand.u32 %v3479, 4294901760
    %v3519 = vsub.f32 %v3479, %v3518
    %v3520 = vand.u32 %v3519, 4294901760
    %v3521 = vsub.f32 %v3519, %v3520
    %v3522 = vand.u32 %v3521, 4294901760
    %3523 = vmatmul.f32.gmra.mxu0 %v3522
    %v3524 = vpop.f32.mrf.mxu0
    %v3525 = vadd.f32 0.0, %v3524
    %3526 = vdwg.mxu0
    %3527 = vmatpush.msra.mxu0 0.0
    %3528 = vmatpush.msra.mxu0 0.0
    %3529 = vmatpush.msra.mxu0 0.0
    %3530 = vmatpush.msra.mxu0 0.0
    %3531 = vmatpush.msra.mxu0 0.0
    %3532 = vmatpush.msra.mxu0 0.0
    %3533 = vmatpush.msra.mxu0 0.0
    %3534 = vmatpush.msra.mxu0 0.0
    %3535 = vmatpush.msra.mxu0 0.0
    %3536 = vmatpush.msra.mxu0 0.0
    %3537 = vmatpush.msra.mxu0 0.0
    %3538 = vmatpush.msra.mxu0 0.0
    %v3539 = vand.u32 %v3482, 4294901760
    %v3540 = vsub.f32 %v3482, %v3539
    %v3541 = vand.u32 %v3540, 4294901760
    %v3542 = vsub.f32 %v3540, %v3541
    %v3543 = vand.u32 %v3542, 4294901760
    %3544 = vmatpush.msra.mxu0 %v3543
    %v3545 = vand.u32 %v3470, 4294901760
    %v3546 = vsub.f32 %v3470, %v3545
    %v3547 = vand.u32 %v3546, 4294901760
    %v3548 = vsub.f32 %v3546, %v3547
    %v3549 = vand.u32 %v3548, 4294901760
    %3550 = vmatpush.msra.mxu0 %v3549
    %v3551 = vand.u32 %v3467, 4294901760
    %v3552 = vsub.f32 %v3467, %v3551
    %v3553 = vand.u32 %v3552, 4294901760
    %v3554 = vsub.f32 %v3552, %v3553
    %v3555 = vand.u32 %v3554, 4294901760
    %3556 = vmatpush.msra.mxu0 %v3555
    %v3557 = vand.u32 %v3464, 4294901760
    %v3558 = vsub.f32 %v3464, %v3557
    %v3559 = vand.u32 %v3558, 4294901760
    %v3560 = vsub.f32 %v3558, %v3559
    %v3561 = vand.u32 %v3560, 4294901760
    %3562 = vmatpush.msra.mxu0 %v3561
    %v3563 = vand.u32 %v3477, 4294901760
    %3564 = vmatmul.f32.gmra.mxu0 %v3563
    %v3565 = vpop.f32.mrf.mxu0
    %v3566 = vadd.f32 %v3517, %v3565
    %v3567 = vand.u32 %v3479, 4294901760
    %3568 = vmatmul.f32.gmra.mxu0 %v3567
    %v3569 = vpop.f32.mrf.mxu0
    %v3570 = vadd.f32 %v3525, %v3569
    %3571 = vdwg.mxu0
    %3572 = vmatpush.msra.mxu0 0.0
    %3573 = vmatpush.msra.mxu0 0.0
    %3574 = vmatpush.msra.mxu0 0.0
    %3575 = vmatpush.msra.mxu0 0.0
    %3576 = vmatpush.msra.mxu0 0.0
    %3577 = vmatpush.msra.mxu0 0.0
    %3578 = vmatpush.msra.mxu0 0.0
    %3579 = vmatpush.msra.mxu0 0.0
    %3580 = vmatpush.msra.mxu0 0.0
    %3581 = vmatpush.msra.mxu0 0.0
    %3582 = vmatpush.msra.mxu0 0.0
    %3583 = vmatpush.msra.mxu0 0.0
    %v3584 = vand.u32 %v3482, 4294901760
    %v3585 = vsub.f32 %v3482, %v3584
    %3586 = vmatpush.msra.mxu0 %v3585
    %v3587 = vand.u32 %v3470, 4294901760
    %v3588 = vsub.f32 %v3470, %v3587
    %3589 = vmatpush.msra.mxu0 %v3588
    %v3590 = vand.u32 %v3467, 4294901760
    %v3591 = vsub.f32 %v3467, %v3590
    %3592 = vmatpush.msra.mxu0 %v3591
    %v3593 = vand.u32 %v3464, 4294901760
    %v3594 = vsub.f32 %v3464, %v3593
    %3595 = vmatpush.msra.mxu0 %v3594
    %v3596 = vand.u32 %v3477, 4294901760
    %v3597 = vsub.f32 %v3477, %v3596
    %3598 = vmatmul.f32.gmra.mxu0 %v3597
    %v3599 = vpop.f32.mrf.mxu0
    %v3600 = vadd.f32 %v3566, %v3599
    %v3601 = vand.u32 %v3479, 4294901760
    %v3602 = vsub.f32 %v3479, %v3601
    %3603 = vmatmul.f32.gmra.mxu0 %v3602
    %v3604 = vpop.f32.mrf.mxu0
    %v3605 = vadd.f32 %v3570, %v3604
    %3606 = vdwg.mxu0
    %3607 = vmatpush.msra.mxu0 0.0
    %3608 = vmatpush.msra.mxu0 0.0
    %3609 = vmatpush.msra.mxu0 0.0
    %3610 = vmatpush.msra.mxu0 0.0
    %3611 = vmatpush.msra.mxu0 0.0
    %3612 = vmatpush.msra.mxu0 0.0
    %3613 = vmatpush.msra.mxu0 0.0
    %3614 = vmatpush.msra.mxu0 0.0
    %3615 = vmatpush.msra.mxu0 0.0
    %3616 = vmatpush.msra.mxu0 0.0
    %3617 = vmatpush.msra.mxu0 0.0
    %3618 = vmatpush.msra.mxu0 0.0
    %v3619 = vand.u32 %v3482, 4294901760
    %3620 = vmatpush.msra.mxu0 %v3619
    %v3621 = vand.u32 %v3470, 4294901760
    %3622 = vmatpush.msra.mxu0 %v3621
    %v3623 = vand.u32 %v3467, 4294901760
    %3624 = vmatpush.msra.mxu0 %v3623
    %v3625 = vand.u32 %v3464, 4294901760
    %3626 = vmatpush.msra.mxu0 %v3625
    %v3627 = vand.u32 %v3477, 4294901760
    %v3628 = vsub.f32 %v3477, %v3627
    %v3629 = vand.u32 %v3628, 4294901760
    %3630 = vmatmul.f32.gmra.mxu0 %v3629
    %v3631 = vpop.f32.mrf.mxu0
    %v3632 = vadd.f32 %v3600, %v3631
    %v3633 = vand.u32 %v3479, 4294901760
    %v3634 = vsub.f32 %v3479, %v3633
    %v3635 = vand.u32 %v3634, 4294901760
    %3636 = vmatmul.f32.gmra.mxu0 %v3635
    %v3637 = vpop.f32.mrf.mxu0
    %v3638 = vadd.f32 %v3605, %v3637
    %3639 = vdwg.mxu0
    %3640 = vmatpush.msra.mxu0 0.0
    %3641 = vmatpush.msra.mxu0 0.0
    %3642 = vmatpush.msra.mxu0 0.0
    %3643 = vmatpush.msra.mxu0 0.0
    %3644 = vmatpush.msra.mxu0 0.0
    %3645 = vmatpush.msra.mxu0 0.0
    %3646 = vmatpush.msra.mxu0 0.0
    %3647 = vmatpush.msra.mxu0 0.0
    %3648 = vmatpush.msra.mxu0 0.0
    %3649 = vmatpush.msra.mxu0 0.0
    %3650 = vmatpush.msra.mxu0 0.0
    %3651 = vmatpush.msra.mxu0 0.0
    %v3652 = vand.u32 %v3482, 4294901760
    %v3653 = vsub.f32 %v3482, %v3652
    %v3654 = vand.u32 %v3653, 4294901760
    %3655 = vmatpush.msra.mxu0 %v3654
    %v3656 = vand.u32 %v3470, 4294901760
    %v3657 = vsub.f32 %v3470, %v3656
    %v3658 = vand.u32 %v3657, 4294901760
    %3659 = vmatpush.msra.mxu0 %v3658
    %v3660 = vand.u32 %v3467, 4294901760
    %v3661 = vsub.f32 %v3467, %v3660
    %v3662 = vand.u32 %v3661, 4294901760
    %3663 = vmatpush.msra.mxu0 %v3662
    %v3664 = vand.u32 %v3464, 4294901760
    %v3665 = vsub.f32 %v3464, %v3664
    %v3666 = vand.u32 %v3665, 4294901760
    %3667 = vmatpush.msra.mxu0 %v3666
    %v3668 = vand.u32 %v3477, 4294901760
    %3669 = vmatmul.f32.gmra.mxu0 %v3668
    %v3670 = vpop.f32.mrf.mxu0
    %v3671 = vadd.f32 %v3632, %v3670
    %v3672 = vand.u32 %v3479, 4294901760
    %3673 = vmatmul.f32.gmra.mxu0 %v3672
    %v3674 = vpop.f32.mrf.mxu0
    %v3675 = vadd.f32 %v3638, %v3674
    %3676 = vdwg.mxu0
    %3677 = vmatpush.msra.mxu0 0.0
    %3678 = vmatpush.msra.mxu0 0.0
    %3679 = vmatpush.msra.mxu0 0.0
    %3680 = vmatpush.msra.mxu0 0.0
    %3681 = vmatpush.msra.mxu0 0.0
    %3682 = vmatpush.msra.mxu0 0.0
    %3683 = vmatpush.msra.mxu0 0.0
    %3684 = vmatpush.msra.mxu0 0.0
    %3685 = vmatpush.msra.mxu0 0.0
    %3686 = vmatpush.msra.mxu0 0.0
    %3687 = vmatpush.msra.mxu0 0.0
    %3688 = vmatpush.msra.mxu0 0.0
    %v3689 = vand.u32 %v3482, 4294901760
    %3690 = vmatpush.msra.mxu0 %v3689
    %v3691 = vand.u32 %v3470, 4294901760
    %3692 = vmatpush.msra.mxu0 %v3691
    %v3693 = vand.u32 %v3467, 4294901760
    %3694 = vmatpush.msra.mxu0 %v3693
    %v3695 = vand.u32 %v3464, 4294901760
    %3696 = vmatpush.msra.mxu0 %v3695
    %v3697 = vand.u32 %v3477, 4294901760
    %3698 = vmatmul.f32.gmra.mxu0 %v3697
    %v3699 = vpop.f32.mrf.mxu0
    %v3700 = vadd.f32 %v3671, %v3699
    %v3701 = vand.u32 %v3479, 4294901760
    %3702 = vmatmul.f32.gmra.mxu0 %v3701
    %v3703 = vpop.f32.mrf.mxu0
    %v3704 = vadd.f32 %v3675, %v3703
    %3705 = vdwg.mxu0
    %3706 = vmatpush.msra.mxu0 0.0
    %3707 = vmatpush.msra.mxu0 0.0
    %3708 = vmatpush.msra.mxu0 0.0
    %3709 = vmatpush.msra.mxu0 0.0
    %3710 = vmatpush.msra.mxu0 0.0
    %3711 = vmatpush.msra.mxu0 0.0
    %3712 = vmatpush.msra.mxu0 0.0
    %3713 = vmatpush.msra.mxu0 0.0
    %3714 = vmatpush.msra.mxu0 0.0
    %3715 = vmatpush.msra.mxu0 0.0
    %3716 = vmatpush.msra.mxu0 0.0
    %3717 = vmatpush.msra.mxu0 0.0
    %v3718 = vand.u32 %v3485, 4294901760
    %3719 = vmatpush.msra.mxu0 %v3718
    %v3720 = vand.u32 %v3471, 4294901760
    %3721 = vmatpush.msra.mxu0 %v3720
    %v3722 = vand.u32 %v3468, 4294901760
    %3723 = vmatpush.msra.mxu0 %v3722
    %v3724 = vand.u32 %v3465, 4294901760
    %3725 = vmatpush.msra.mxu0 %v3724
    %v3726 = vand.u32 %v3477, 4294901760
    %v3727 = vsub.f32 %v3477, %v3726
    %v3728 = vand.u32 %v3727, 4294901760
    %v3729 = vsub.f32 %v3727, %v3728
    %v3730 = vand.u32 %v3729, 4294901760
    %3731 = vmatmul.f32.gmra.mxu0 %v3730
    %v3732 = vpop.f32.mrf.mxu0
    %v3733 = vadd.f32 0.0, %v3732
    %v3734 = vand.u32 %v3479, 4294901760
    %v3735 = vsub.f32 %v3479, %v3734
    %v3736 = vand.u32 %v3735, 4294901760
    %v3737 = vsub.f32 %v3735, %v3736
    %v3738 = vand.u32 %v3737, 4294901760
    %3739 = vmatmul.f32.gmra.mxu0 %v3738
    %v3740 = vpop.f32.mrf.mxu0
    %v3741 = vadd.f32 0.0, %v3740
    %3742 = vdwg.mxu0
    %3743 = vmatpush.msra.mxu0 0.0
    %3744 = vmatpush.msra.mxu0 0.0
    %3745 = vmatpush.msra.mxu0 0.0
    %3746 = vmatpush.msra.mxu0 0.0
    %3747 = vmatpush.msra.mxu0 0.0
    %3748 = vmatpush.msra.mxu0 0.0
    %3749 = vmatpush.msra.mxu0 0.0
    %3750 = vmatpush.msra.mxu0 0.0
    %3751 = vmatpush.msra.mxu0 0.0
    %3752 = vmatpush.msra.mxu0 0.0
    %3753 = vmatpush.msra.mxu0 0.0
    %3754 = vmatpush.msra.mxu0 0.0
    %v3755 = vand.u32 %v3485, 4294901760
    %v3756 = vsub.f32 %v3485, %v3755
    %v3757 = vand.u32 %v3756, 4294901760
    %v3758 = vsub.f32 %v3756, %v3757
    %v3759 = vand.u32 %v3758, 4294901760
    %3760 = vmatpush.msra.mxu0 %v3759
    %v3761 = vand.u32 %v3471, 4294901760
    %v3762 = vsub.f32 %v3471, %v3761
    %v3763 = vand.u32 %v3762, 4294901760
    %v3764 = vsub.f32 %v3762, %v3763
    %v3765 = vand.u32 %v3764, 4294901760
    %3766 = vmatpush.msra.mxu0 %v3765
    %v3767 = vand.u32 %v3468, 4294901760
    %v3768 = vsub.f32 %v3468, %v3767
    %v3769 = vand.u32 %v3768, 4294901760
    %v3770 = vsub.f32 %v3768, %v3769
    %v3771 = vand.u32 %v3770, 4294901760
    %3772 = vmatpush.msra.mxu0 %v3771
    %v3773 = vand.u32 %v3465, 4294901760
    %v3774 = vsub.f32 %v3465, %v3773
    %v3775 = vand.u32 %v3774, 4294901760
    %v3776 = vsub.f32 %v3774, %v3775
    %v3777 = vand.u32 %v3776, 4294901760
    %3778 = vmatpush.msra.mxu0 %v3777
    %v3779 = vand.u32 %v3477, 4294901760
    %3780 = vmatmul.f32.gmra.mxu0 %v3779
    %v3781 = vpop.f32.mrf.mxu0
    %v3782 = vadd.f32 %v3733, %v3781
    %v3783 = vand.u32 %v3479, 4294901760
    %3784 = vmatmul.f32.gmra.mxu0 %v3783
    %v3785 = vpop.f32.mrf.mxu0
    %v3786 = vadd.f32 %v3741, %v3785
    %3787 = vdwg.mxu0
    %3788 = vmatpush.msra.mxu0 0.0
    %3789 = vmatpush.msra.mxu0 0.0
    %3790 = vmatpush.msra.mxu0 0.0
    %3791 = vmatpush.msra.mxu0 0.0
    %3792 = vmatpush.msra.mxu0 0.0
    %3793 = vmatpush.msra.mxu0 0.0
    %3794 = vmatpush.msra.mxu0 0.0
    %3795 = vmatpush.msra.mxu0 0.0
    %3796 = vmatpush.msra.mxu0 0.0
    %3797 = vmatpush.msra.mxu0 0.0
    %3798 = vmatpush.msra.mxu0 0.0
    %3799 = vmatpush.msra.mxu0 0.0
    %v3800 = vand.u32 %v3485, 4294901760
    %v3801 = vsub.f32 %v3485, %v3800
    %3802 = vmatpush.msra.mxu0 %v3801
    %v3803 = vand.u32 %v3471, 4294901760
    %v3804 = vsub.f32 %v3471, %v3803
    %3805 = vmatpush.msra.mxu0 %v3804
    %v3806 = vand.u32 %v3468, 4294901760
    %v3807 = vsub.f32 %v3468, %v3806
    %3808 = vmatpush.msra.mxu0 %v3807
    %v3809 = vand.u32 %v3465, 4294901760
    %v3810 = vsub.f32 %v3465, %v3809
    %3811 = vmatpush.msra.mxu0 %v3810
    %v3812 = vand.u32 %v3477, 4294901760
    %v3813 = vsub.f32 %v3477, %v3812
    %3814 = vmatmul.f32.gmra.mxu0 %v3813
    %v3815 = vpop.f32.mrf.mxu0
    %v3816 = vadd.f32 %v3782, %v3815
    %v3817 = vand.u32 %v3479, 4294901760
    %v3818 = vsub.f32 %v3479, %v3817
    %3819 = vmatmul.f32.gmra.mxu0 %v3818
    %v3820 = vpop.f32.mrf.mxu0
    %v3821 = vadd.f32 %v3786, %v3820
    %3822 = vdwg.mxu0
    %3823 = vmatpush.msra.mxu0 0.0
    %3824 = vmatpush.msra.mxu0 0.0
    %3825 = vmatpush.msra.mxu0 0.0
    %3826 = vmatpush.msra.mxu0 0.0
    %3827 = vmatpush.msra.mxu0 0.0
    %3828 = vmatpush.msra.mxu0 0.0
    %3829 = vmatpush.msra.mxu0 0.0
    %3830 = vmatpush.msra.mxu0 0.0
    %3831 = vmatpush.msra.mxu0 0.0
    %3832 = vmatpush.msra.mxu0 0.0
    %3833 = vmatpush.msra.mxu0 0.0
    %3834 = vmatpush.msra.mxu0 0.0
    %v3835 = vand.u32 %v3485, 4294901760
    %3836 = vmatpush.msra.mxu0 %v3835
    %v3837 = vand.u32 %v3471, 4294901760
    %3838 = vmatpush.msra.mxu0 %v3837
    %v3839 = vand.u32 %v3468, 4294901760
    %3840 = vmatpush.msra.mxu0 %v3839
    %v3841 = vand.u32 %v3465, 4294901760
    %3842 = vmatpush.msra.mxu0 %v3841
    %v3843 = vand.u32 %v3477, 4294901760
    %v3844 = vsub.f32 %v3477, %v3843
    %v3845 = vand.u32 %v3844, 4294901760
    %3846 = vmatmul.f32.gmra.mxu0 %v3845
    %v3847 = vpop.f32.mrf.mxu0
    %v3848 = vadd.f32 %v3816, %v3847
    %v3849 = vand.u32 %v3479, 4294901760
    %v3850 = vsub.f32 %v3479, %v3849
    %v3851 = vand.u32 %v3850, 4294901760
    %3852 = vmatmul.f32.gmra.mxu0 %v3851
    %v3853 = vpop.f32.mrf.mxu0
    %v3854 = vadd.f32 %v3821, %v3853
    %3855 = vdwg.mxu0
    %3856 = vmatpush.msra.mxu0 0.0
    %3857 = vmatpush.msra.mxu0 0.0
    %3858 = vmatpush.msra.mxu0 0.0
    %3859 = vmatpush.msra.mxu0 0.0
    %3860 = vmatpush.msra.mxu0 0.0
    %3861 = vmatpush.msra.mxu0 0.0
    %3862 = vmatpush.msra.mxu0 0.0
    %3863 = vmatpush.msra.mxu0 0.0
    %3864 = vmatpush.msra.mxu0 0.0
    %3865 = vmatpush.msra.mxu0 0.0
    %3866 = vmatpush.msra.mxu0 0.0
    %3867 = vmatpush.msra.mxu0 0.0
    %v3868 = vand.u32 %v3485, 4294901760
    %v3869 = vsub.f32 %v3485, %v3868
    %v3870 = vand.u32 %v3869, 4294901760
    %3871 = vmatpush.msra.mxu0 %v3870
    %v3872 = vand.u32 %v3471, 4294901760
    %v3873 = vsub.f32 %v3471, %v3872
    %v3874 = vand.u32 %v3873, 4294901760
    %3875 = vmatpush.msra.mxu0 %v3874
    %v3876 = vand.u32 %v3468, 4294901760
    %v3877 = vsub.f32 %v3468, %v3876
    %v3878 = vand.u32 %v3877, 4294901760
    %3879 = vmatpush.msra.mxu0 %v3878
    %v3880 = vand.u32 %v3465, 4294901760
    %v3881 = vsub.f32 %v3465, %v3880
    %v3882 = vand.u32 %v3881, 4294901760
    %3883 = vmatpush.msra.mxu0 %v3882
    %v3884 = vand.u32 %v3477, 4294901760
    %3885 = vmatmul.f32.gmra.mxu0 %v3884
    %v3886 = vpop.f32.mrf.mxu0
    %v3887 = vadd.f32 %v3848, %v3886
    %v3888 = vand.u32 %v3479, 4294901760
    %3889 = vmatmul.f32.gmra.mxu0 %v3888
    %v3890 = vpop.f32.mrf.mxu0
    %v3891 = vadd.f32 %v3854, %v3890
    %3892 = vdwg.mxu0
    %3893 = vmatpush.msra.mxu0 0.0
    %3894 = vmatpush.msra.mxu0 0.0
    %3895 = vmatpush.msra.mxu0 0.0
    %3896 = vmatpush.msra.mxu0 0.0
    %3897 = vmatpush.msra.mxu0 0.0
    %3898 = vmatpush.msra.mxu0 0.0
    %3899 = vmatpush.msra.mxu0 0.0
    %3900 = vmatpush.msra.mxu0 0.0
    %3901 = vmatpush.msra.mxu0 0.0
    %3902 = vmatpush.msra.mxu0 0.0
    %3903 = vmatpush.msra.mxu0 0.0
    %3904 = vmatpush.msra.mxu0 0.0
    %v3905 = vand.u32 %v3485, 4294901760
    %3906 = vmatpush.msra.mxu0 %v3905
    %v3907 = vand.u32 %v3471, 4294901760
    %3908 = vmatpush.msra.mxu0 %v3907
    %v3909 = vand.u32 %v3468, 4294901760
    %3910 = vmatpush.msra.mxu0 %v3909
    %v3911 = vand.u32 %v3465, 4294901760
    %3912 = vmatpush.msra.mxu0 %v3911
    %v3913 = vand.u32 %v3477, 4294901760
    %3914 = vmatmul.f32.gmra.mxu0 %v3913
    %v3915 = vpop.f32.mrf.mxu0
    %v3916 = vadd.f32 %v3887, %v3915
    %v3917 = vand.u32 %v3479, 4294901760
    %3918 = vmatmul.f32.gmra.mxu0 %v3917
    %v3919 = vpop.f32.mrf.mxu0
    %v3920 = vadd.f32 %v3891, %v3919
    %3921 = vdwg.mxu0
    %3922 = vmatpush.msra.mxu0 0.0
    %3923 = vmatpush.msra.mxu0 0.0
    %3924 = vmatpush.msra.mxu0 0.0
    %3925 = vmatpush.msra.mxu0 0.0
    %3926 = vmatpush.msra.mxu0 0.0
    %3927 = vmatpush.msra.mxu0 0.0
    %3928 = vmatpush.msra.mxu0 0.0
    %3929 = vmatpush.msra.mxu0 0.0
    %3930 = vmatpush.msra.mxu0 0.0
    %3931 = vmatpush.msra.mxu0 0.0
    %3932 = vmatpush.msra.mxu0 0.0
    %3933 = vmatpush.msra.mxu0 0.0
    %v3934 = vand.u32 %v3488, 4294901760
    %3935 = vmatpush.msra.mxu0 %v3934
    %v3936 = vand.u32 %v3472, 4294901760
    %3937 = vmatpush.msra.mxu0 %v3936
    %v3938 = vand.u32 %v3469, 4294901760
    %3939 = vmatpush.msra.mxu0 %v3938
    %v3940 = vand.u32 %v3466, 4294901760
    %3941 = vmatpush.msra.mxu0 %v3940
    %v3942 = vand.u32 %v3477, 4294901760
    %v3943 = vsub.f32 %v3477, %v3942
    %v3944 = vand.u32 %v3943, 4294901760
    %v3945 = vsub.f32 %v3943, %v3944
    %v3946 = vand.u32 %v3945, 4294901760
    %3947 = vmatmul.f32.gmra.mxu0 %v3946
    %v3948 = vpop.f32.mrf.mxu0
    %v3949 = vadd.f32 0.0, %v3948
    %v3950 = vand.u32 %v3479, 4294901760
    %v3951 = vsub.f32 %v3479, %v3950
    %v3952 = vand.u32 %v3951, 4294901760
    %v3953 = vsub.f32 %v3951, %v3952
    %v3954 = vand.u32 %v3953, 4294901760
    %3955 = vmatmul.f32.gmra.mxu0 %v3954
    %v3956 = vpop.f32.mrf.mxu0
    %v3957 = vadd.f32 0.0, %v3956
    %3958 = vdwg.mxu0
    %3959 = vmatpush.msra.mxu0 0.0
    %3960 = vmatpush.msra.mxu0 0.0
    %3961 = vmatpush.msra.mxu0 0.0
    %3962 = vmatpush.msra.mxu0 0.0
    %3963 = vmatpush.msra.mxu0 0.0
    %3964 = vmatpush.msra.mxu0 0.0
    %3965 = vmatpush.msra.mxu0 0.0
    %3966 = vmatpush.msra.mxu0 0.0
    %3967 = vmatpush.msra.mxu0 0.0
    %3968 = vmatpush.msra.mxu0 0.0
    %3969 = vmatpush.msra.mxu0 0.0
    %3970 = vmatpush.msra.mxu0 0.0
    %v3971 = vand.u32 %v3488, 4294901760
    %v3972 = vsub.f32 %v3488, %v3971
    %v3973 = vand.u32 %v3972, 4294901760
    %v3974 = vsub.f32 %v3972, %v3973
    %v3975 = vand.u32 %v3974, 4294901760
    %3976 = vmatpush.msra.mxu0 %v3975
    %v3977 = vand.u32 %v3472, 4294901760
    %v3978 = vsub.f32 %v3472, %v3977
    %v3979 = vand.u32 %v3978, 4294901760
    %v3980 = vsub.f32 %v3978, %v3979
    %v3981 = vand.u32 %v3980, 4294901760
    %3982 = vmatpush.msra.mxu0 %v3981
    %v3983 = vand.u32 %v3469, 4294901760
    %v3984 = vsub.f32 %v3469, %v3983
    %v3985 = vand.u32 %v3984, 4294901760
    %v3986 = vsub.f32 %v3984, %v3985
    %v3987 = vand.u32 %v3986, 4294901760
    %3988 = vmatpush.msra.mxu0 %v3987
    %v3989 = vand.u32 %v3466, 4294901760
    %v3990 = vsub.f32 %v3466, %v3989
    %v3991 = vand.u32 %v3990, 4294901760
    %v3992 = vsub.f32 %v3990, %v3991
    %v3993 = vand.u32 %v3992, 4294901760
    %3994 = vmatpush.msra.mxu0 %v3993
    %v3995 = vand.u32 %v3477, 4294901760
    %3996 = vmatmul.f32.gmra.mxu0 %v3995
    %v3997 = vpop.f32.mrf.mxu0
    %v3998 = vadd.f32 %v3949, %v3997
    %v3999 = vand.u32 %v3479, 4294901760
    %4000 = vmatmul.f32.gmra.mxu0 %v3999
    %v4001 = vpop.f32.mrf.mxu0
    %v4002 = vadd.f32 %v3957, %v4001
    %4003 = vdwg.mxu0
    %4004 = vmatpush.msra.mxu0 0.0
    %4005 = vmatpush.msra.mxu0 0.0
    %4006 = vmatpush.msra.mxu0 0.0
    %4007 = vmatpush.msra.mxu0 0.0
    %4008 = vmatpush.msra.mxu0 0.0
    %4009 = vmatpush.msra.mxu0 0.0
    %4010 = vmatpush.msra.mxu0 0.0
    %4011 = vmatpush.msra.mxu0 0.0
    %4012 = vmatpush.msra.mxu0 0.0
    %4013 = vmatpush.msra.mxu0 0.0
    %4014 = vmatpush.msra.mxu0 0.0
    %4015 = vmatpush.msra.mxu0 0.0
    %v4016 = vand.u32 %v3488, 4294901760
    %v4017 = vsub.f32 %v3488, %v4016
    %4018 = vmatpush.msra.mxu0 %v4017
    %v4019 = vand.u32 %v3472, 4294901760
    %v4020 = vsub.f32 %v3472, %v4019
    %4021 = vmatpush.msra.mxu0 %v4020
    %v4022 = vand.u32 %v3469, 4294901760
    %v4023 = vsub.f32 %v3469, %v4022
    %4024 = vmatpush.msra.mxu0 %v4023
    %v4025 = vand.u32 %v3466, 4294901760
    %v4026 = vsub.f32 %v3466, %v4025
    %4027 = vmatpush.msra.mxu0 %v4026
    %v4028 = vand.u32 %v3477, 4294901760
    %v4029 = vsub.f32 %v3477, %v4028
    %4030 = vmatmul.f32.gmra.mxu0 %v4029
    %v4031 = vpop.f32.mrf.mxu0
    %v4032 = vadd.f32 %v3998, %v4031
    %v4033 = vand.u32 %v3479, 4294901760
    %v4034 = vsub.f32 %v3479, %v4033
    %4035 = vmatmul.f32.gmra.mxu0 %v4034
    %v4036 = vpop.f32.mrf.mxu0
    %v4037 = vadd.f32 %v4002, %v4036
    %4038 = vdwg.mxu0
    %4039 = vmatpush.msra.mxu0 0.0
    %4040 = vmatpush.msra.mxu0 0.0
    %4041 = vmatpush.msra.mxu0 0.0
    %4042 = vmatpush.msra.mxu0 0.0
    %4043 = vmatpush.msra.mxu0 0.0
    %4044 = vmatpush.msra.mxu0 0.0
    %4045 = vmatpush.msra.mxu0 0.0
    %4046 = vmatpush.msra.mxu0 0.0
    %4047 = vmatpush.msra.mxu0 0.0
    %4048 = vmatpush.msra.mxu0 0.0
    %4049 = vmatpush.msra.mxu0 0.0
    %4050 = vmatpush.msra.mxu0 0.0
    %v4051 = vand.u32 %v3488, 4294901760
    %4052 = vmatpush.msra.mxu0 %v4051
    %v4053 = vand.u32 %v3472, 4294901760
    %4054 = vmatpush.msra.mxu0 %v4053
    %v4055 = vand.u32 %v3469, 4294901760
    %4056 = vmatpush.msra.mxu0 %v4055
    %v4057 = vand.u32 %v3466, 4294901760
    %4058 = vmatpush.msra.mxu0 %v4057
    %v4059 = vand.u32 %v3477, 4294901760
    %v4060 = vsub.f32 %v3477, %v4059
    %v4061 = vand.u32 %v4060, 4294901760
    %4062 = vmatmul.f32.gmra.mxu0 %v4061
    %v4063 = vpop.f32.mrf.mxu0
    %v4064 = vadd.f32 %v4032, %v4063
    %v4065 = vand.u32 %v3479, 4294901760
    %v4066 = vsub.f32 %v3479, %v4065
    %v4067 = vand.u32 %v4066, 4294901760
    %4068 = vmatmul.f32.gmra.mxu0 %v4067
    %v4069 = vpop.f32.mrf.mxu0
    %v4070 = vadd.f32 %v4037, %v4069
    %4071 = vdwg.mxu0
    %4072 = vmatpush.msra.mxu0 0.0
    %4073 = vmatpush.msra.mxu0 0.0
    %4074 = vmatpush.msra.mxu0 0.0
    %4075 = vmatpush.msra.mxu0 0.0
    %4076 = vmatpush.msra.mxu0 0.0
    %4077 = vmatpush.msra.mxu0 0.0
    %4078 = vmatpush.msra.mxu0 0.0
    %4079 = vmatpush.msra.mxu0 0.0
    %4080 = vmatpush.msra.mxu0 0.0
    %4081 = vmatpush.msra.mxu0 0.0
    %4082 = vmatpush.msra.mxu0 0.0
    %4083 = vmatpush.msra.mxu0 0.0
    %v4084 = vand.u32 %v3488, 4294901760
    %v4085 = vsub.f32 %v3488, %v4084
    %v4086 = vand.u32 %v4085, 4294901760
    %4087 = vmatpush.msra.mxu0 %v4086
    %v4088 = vand.u32 %v3472, 4294901760
    %v4089 = vsub.f32 %v3472, %v4088
    %v4090 = vand.u32 %v4089, 4294901760
    %4091 = vmatpush.msra.mxu0 %v4090
    %v4092 = vand.u32 %v3469, 4294901760
    %v4093 = vsub.f32 %v3469, %v4092
    %v4094 = vand.u32 %v4093, 4294901760
    %4095 = vmatpush.msra.mxu0 %v4094
    %v4096 = vand.u32 %v3466, 4294901760
    %v4097 = vsub.f32 %v3466, %v4096
    %v4098 = vand.u32 %v4097, 4294901760
    %4099 = vmatpush.msra.mxu0 %v4098
    %v4100 = vand.u32 %v3477, 4294901760
    %4101 = vmatmul.f32.gmra.mxu0 %v4100
    %v4102 = vpop.f32.mrf.mxu0
    %v4103 = vadd.f32 %v4064, %v4102
    %v4104 = vand.u32 %v3479, 4294901760
    %4105 = vmatmul.f32.gmra.mxu0 %v4104
    %v4106 = vpop.f32.mrf.mxu0
    %v4107 = vadd.f32 %v4070, %v4106
    %4108 = vdwg.mxu0
    %4109 = vmatpush.msra.mxu0 0.0
    %4110 = vmatpush.msra.mxu0 0.0
    %4111 = vmatpush.msra.mxu0 0.0
    %4112 = vmatpush.msra.mxu0 0.0
    %4113 = vmatpush.msra.mxu0 0.0
    %4114 = vmatpush.msra.mxu0 0.0
    %4115 = vmatpush.msra.mxu0 0.0
    %4116 = vmatpush.msra.mxu0 0.0
    %4117 = vmatpush.msra.mxu0 0.0
    %4118 = vmatpush.msra.mxu0 0.0
    %4119 = vmatpush.msra.mxu0 0.0
    %4120 = vmatpush.msra.mxu0 0.0
    %v4121 = vand.u32 %v3488, 4294901760
    %4122 = vmatpush.msra.mxu0 %v4121
    %v4123 = vand.u32 %v3472, 4294901760
    %4124 = vmatpush.msra.mxu0 %v4123
    %v4125 = vand.u32 %v3469, 4294901760
    %4126 = vmatpush.msra.mxu0 %v4125
    %v4127 = vand.u32 %v3466, 4294901760
    %4128 = vmatpush.msra.mxu0 %v4127
    %v4129 = vand.u32 %v3477, 4294901760
    %4130 = vmatmul.f32.gmra.mxu0 %v4129
    %v4131 = vpop.f32.mrf.mxu0
    %v4132 = vadd.f32 %v4103, %v4131
    %v4133 = vand.u32 %v3479, 4294901760
    %4134 = vmatmul.f32.gmra.mxu0 %v4133
    %v4135 = vpop.f32.mrf.mxu0
    %v4136 = vadd.f32 %v4107, %v4135
    %4137 = vdwg.mxu0
    %v4138 = vld [vmem:[%s5] sm:$0xff]
    %v4139 = vld [vmem:[%s5 + $0x8] sm:$0xff]
    %v4140 = vld [vmem:[%s5 + $0x10] sm:$0xff]
    %v4141 = vld [vmem:[%s5 + $0x18] sm:$0xff]
    %v4142 = vld [vmem:[%s5 + $0x20] sm:$0xff]
    %v4143 = vld [vmem:[%s5 + $0x28] sm:$0xff]
    %v4144 = vld [vmem:[%s5 + $0x30] sm:$0xff]
    %v4145 = vld [vmem:[%s5 + $0x38] sm:$0xff]
    %v4146 = vld [vmem:[%s5 + $0x40] sm:$0xff]
    %v4147 = vld [vmem:[%s5 + $0x48] sm:$0xf]
    %v4148 = vld [vmem:[%s5 + $0x50] sm:$0xf]
    %v4149 = vld [vmem:[%s5 + $0x58] sm:$0xf]
    %v4151 = vsel %vm3476, %v3462, 0
    %v4154 = vsel %vm3476, %v3463, 0
    %v4157 = vsel %vm1535, %v4147, 0
    %v4160 = vsel %vm1535, %v4148, 0
    %v4163 = vsel %vm1535, %v4149, 0
    %4165 = vmatpush.msra.mxu0 0.0
    %4166 = vmatpush.msra.mxu0 0.0
    %4167 = vmatpush.msra.mxu0 0.0
    %4168 = vmatpush.msra.mxu0 0.0
    %4169 = vmatpush.msra.mxu0 0.0
    %4170 = vmatpush.msra.mxu0 0.0
    %4171 = vmatpush.msra.mxu0 0.0
    %4172 = vmatpush.msra.mxu0 0.0
    %4173 = vmatpush.msra.mxu0 0.0
    %4174 = vmatpush.msra.mxu0 0.0
    %4175 = vmatpush.msra.mxu0 0.0
    %4176 = vmatpush.msra.mxu0 0.0
    %v4177 = vand.u32 %v4157, 4294901760
    %4178 = vmatpush.msra.mxu0 %v4177
    %v4179 = vand.u32 %v4144, 4294901760
    %4180 = vmatpush.msra.mxu0 %v4179
    %v4181 = vand.u32 %v4141, 4294901760
    %4182 = vmatpush.msra.mxu0 %v4181
    %v4183 = vand.u32 %v4138, 4294901760
    %4184 = vmatpush.msra.mxu0 %v4183
    %v4185 = vand.u32 %v4151, 4294901760
    %v4186 = vsub.f32 %v4151, %v4185
    %v4187 = vand.u32 %v4186, 4294901760
    %v4188 = vsub.f32 %v4186, %v4187
    %v4189 = vand.u32 %v4188, 4294901760
    %4190 = vmatmul.f32.gmra.mxu0 %v4189
    %v4191 = vpop.f32.mrf.mxu0
    %v4192 = vadd.f32 0.0, %v4191
    %v4193 = vand.u32 %v4154, 4294901760
    %v4194 = vsub.f32 %v4154, %v4193
    %v4195 = vand.u32 %v4194, 4294901760
    %v4196 = vsub.f32 %v4194, %v4195
    %v4197 = vand.u32 %v4196, 4294901760
    %4198 = vmatmul.f32.gmra.mxu0 %v4197
    %v4199 = vpop.f32.mrf.mxu0
    %v4200 = vadd.f32 0.0, %v4199
    %4201 = vdwg.mxu0
    %4202 = vmatpush.msra.mxu0 0.0
    %4203 = vmatpush.msra.mxu0 0.0
    %4204 = vmatpush.msra.mxu0 0.0
    %4205 = vmatpush.msra.mxu0 0.0
    %4206 = vmatpush.msra.mxu0 0.0
    %4207 = vmatpush.msra.mxu0 0.0
    %4208 = vmatpush.msra.mxu0 0.0
    %4209 = vmatpush.msra.mxu0 0.0
    %4210 = vmatpush.msra.mxu0 0.0
    %4211 = vmatpush.msra.mxu0 0.0
    %4212 = vmatpush.msra.mxu0 0.0
    %4213 = vmatpush.msra.mxu0 0.0
    %v4214 = vand.u32 %v4157, 4294901760
    %v4215 = vsub.f32 %v4157, %v4214
    %v4216 = vand.u32 %v4215, 4294901760
    %v4217 = vsub.f32 %v4215, %v4216
    %v4218 = vand.u32 %v4217, 4294901760
    %4219 = vmatpush.msra.mxu0 %v4218
    %v4220 = vand.u32 %v4144, 4294901760
    %v4221 = vsub.f32 %v4144, %v4220
    %v4222 = vand.u32 %v4221, 4294901760
    %v4223 = vsub.f32 %v4221, %v4222
    %v4224 = vand.u32 %v4223, 4294901760
    %4225 = vmatpush.msra.mxu0 %v4224
    %v4226 = vand.u32 %v4141, 4294901760
    %v4227 = vsub.f32 %v4141, %v4226
    %v4228 = vand.u32 %v4227, 4294901760
    %v4229 = vsub.f32 %v4227, %v4228
    %v4230 = vand.u32 %v4229, 4294901760
    %4231 = vmatpush.msra.mxu0 %v4230
    %v4232 = vand.u32 %v4138, 4294901760
    %v4233 = vsub.f32 %v4138, %v4232
    %v4234 = vand.u32 %v4233, 4294901760
    %v4235 = vsub.f32 %v4233, %v4234
    %v4236 = vand.u32 %v4235, 4294901760
    %4237 = vmatpush.msra.mxu0 %v4236
    %v4238 = vand.u32 %v4151, 4294901760
    %4239 = vmatmul.f32.gmra.mxu0 %v4238
    %v4240 = vpop.f32.mrf.mxu0
    %v4241 = vadd.f32 %v4192, %v4240
    %v4242 = vand.u32 %v4154, 4294901760
    %4243 = vmatmul.f32.gmra.mxu0 %v4242
    %v4244 = vpop.f32.mrf.mxu0
    %v4245 = vadd.f32 %v4200, %v4244
    %4246 = vdwg.mxu0
    %4247 = vmatpush.msra.mxu0 0.0
    %4248 = vmatpush.msra.mxu0 0.0
    %4249 = vmatpush.msra.mxu0 0.0
    %4250 = vmatpush.msra.mxu0 0.0
    %4251 = vmatpush.msra.mxu0 0.0
    %4252 = vmatpush.msra.mxu0 0.0
    %4253 = vmatpush.msra.mxu0 0.0
    %4254 = vmatpush.msra.mxu0 0.0
    %4255 = vmatpush.msra.mxu0 0.0
    %4256 = vmatpush.msra.mxu0 0.0
    %4257 = vmatpush.msra.mxu0 0.0
    %4258 = vmatpush.msra.mxu0 0.0
    %v4259 = vand.u32 %v4157, 4294901760
    %v4260 = vsub.f32 %v4157, %v4259
    %4261 = vmatpush.msra.mxu0 %v4260
    %v4262 = vand.u32 %v4144, 4294901760
    %v4263 = vsub.f32 %v4144, %v4262
    %4264 = vmatpush.msra.mxu0 %v4263
    %v4265 = vand.u32 %v4141, 4294901760
    %v4266 = vsub.f32 %v4141, %v4265
    %4267 = vmatpush.msra.mxu0 %v4266
    %v4268 = vand.u32 %v4138, 4294901760
    %v4269 = vsub.f32 %v4138, %v4268
    %4270 = vmatpush.msra.mxu0 %v4269
    %v4271 = vand.u32 %v4151, 4294901760
    %v4272 = vsub.f32 %v4151, %v4271
    %4273 = vmatmul.f32.gmra.mxu0 %v4272
    %v4274 = vpop.f32.mrf.mxu0
    %v4275 = vadd.f32 %v4241, %v4274
    %v4276 = vand.u32 %v4154, 4294901760
    %v4277 = vsub.f32 %v4154, %v4276
    %4278 = vmatmul.f32.gmra.mxu0 %v4277
    %v4279 = vpop.f32.mrf.mxu0
    %v4280 = vadd.f32 %v4245, %v4279
    %4281 = vdwg.mxu0
    %4282 = vmatpush.msra.mxu0 0.0
    %4283 = vmatpush.msra.mxu0 0.0
    %4284 = vmatpush.msra.mxu0 0.0
    %4285 = vmatpush.msra.mxu0 0.0
    %4286 = vmatpush.msra.mxu0 0.0
    %4287 = vmatpush.msra.mxu0 0.0
    %4288 = vmatpush.msra.mxu0 0.0
    %4289 = vmatpush.msra.mxu0 0.0
    %4290 = vmatpush.msra.mxu0 0.0
    %4291 = vmatpush.msra.mxu0 0.0
    %4292 = vmatpush.msra.mxu0 0.0
    %4293 = vmatpush.msra.mxu0 0.0
    %v4294 = vand.u32 %v4157, 4294901760
    %4295 = vmatpush.msra.mxu0 %v4294
    %v4296 = vand.u32 %v4144, 4294901760
    %4297 = vmatpush.msra.mxu0 %v4296
    %v4298 = vand.u32 %v4141, 4294901760
    %4299 = vmatpush.msra.mxu0 %v4298
    %v4300 = vand.u32 %v4138, 4294901760
    %4301 = vmatpush.msra.mxu0 %v4300
    %v4302 = vand.u32 %v4151, 4294901760
    %v4303 = vsub.f32 %v4151, %v4302
    %v4304 = vand.u32 %v4303, 4294901760
    %4305 = vmatmul.f32.gmra.mxu0 %v4304
    %v4306 = vpop.f32.mrf.mxu0
    %v4307 = vadd.f32 %v4275, %v4306
    %v4308 = vand.u32 %v4154, 4294901760
    %v4309 = vsub.f32 %v4154, %v4308
    %v4310 = vand.u32 %v4309, 4294901760
    %4311 = vmatmul.f32.gmra.mxu0 %v4310
    %v4312 = vpop.f32.mrf.mxu0
    %v4313 = vadd.f32 %v4280, %v4312
    %4314 = vdwg.mxu0
    %4315 = vmatpush.msra.mxu0 0.0
    %4316 = vmatpush.msra.mxu0 0.0
    %4317 = vmatpush.msra.mxu0 0.0
    %4318 = vmatpush.msra.mxu0 0.0
    %4319 = vmatpush.msra.mxu0 0.0
    %4320 = vmatpush.msra.mxu0 0.0
    %4321 = vmatpush.msra.mxu0 0.0
    %4322 = vmatpush.msra.mxu0 0.0
    %4323 = vmatpush.msra.mxu0 0.0
    %4324 = vmatpush.msra.mxu0 0.0
    %4325 = vmatpush.msra.mxu0 0.0
    %4326 = vmatpush.msra.mxu0 0.0
    %v4327 = vand.u32 %v4157, 4294901760
    %v4328 = vsub.f32 %v4157, %v4327
    %v4329 = vand.u32 %v4328, 4294901760
    %4330 = vmatpush.msra.mxu0 %v4329
    %v4331 = vand.u32 %v4144, 4294901760
    %v4332 = vsub.f32 %v4144, %v4331
    %v4333 = vand.u32 %v4332, 4294901760
    %4334 = vmatpush.msra.mxu0 %v4333
    %v4335 = vand.u32 %v4141, 4294901760
    %v4336 = vsub.f32 %v4141, %v4335
    %v4337 = vand.u32 %v4336, 4294901760
    %4338 = vmatpush.msra.mxu0 %v4337
    %v4339 = vand.u32 %v4138, 4294901760
    %v4340 = vsub.f32 %v4138, %v4339
    %v4341 = vand.u32 %v4340, 4294901760
    %4342 = vmatpush.msra.mxu0 %v4341
    %v4343 = vand.u32 %v4151, 4294901760
    %4344 = vmatmul.f32.gmra.mxu0 %v4343
    %v4345 = vpop.f32.mrf.mxu0
    %v4346 = vadd.f32 %v4307, %v4345
    %v4347 = vand.u32 %v4154, 4294901760
    %4348 = vmatmul.f32.gmra.mxu0 %v4347
    %v4349 = vpop.f32.mrf.mxu0
    %v4350 = vadd.f32 %v4313, %v4349
    %4351 = vdwg.mxu0
    %4352 = vmatpush.msra.mxu0 0.0
    %4353 = vmatpush.msra.mxu0 0.0
    %4354 = vmatpush.msra.mxu0 0.0
    %4355 = vmatpush.msra.mxu0 0.0
    %4356 = vmatpush.msra.mxu0 0.0
    %4357 = vmatpush.msra.mxu0 0.0
    %4358 = vmatpush.msra.mxu0 0.0
    %4359 = vmatpush.msra.mxu0 0.0
    %4360 = vmatpush.msra.mxu0 0.0
    %4361 = vmatpush.msra.mxu0 0.0
    %4362 = vmatpush.msra.mxu0 0.0
    %4363 = vmatpush.msra.mxu0 0.0
    %v4364 = vand.u32 %v4157, 4294901760
    %4365 = vmatpush.msra.mxu0 %v4364
    %v4366 = vand.u32 %v4144, 4294901760
    %4367 = vmatpush.msra.mxu0 %v4366
    %v4368 = vand.u32 %v4141, 4294901760
    %4369 = vmatpush.msra.mxu0 %v4368
    %v4370 = vand.u32 %v4138, 4294901760
    %4371 = vmatpush.msra.mxu0 %v4370
    %v4372 = vand.u32 %v4151, 4294901760
    %4373 = vmatmul.f32.gmra.mxu0 %v4372
    %v4374 = vpop.f32.mrf.mxu0
    %v4375 = vadd.f32 %v4346, %v4374
    %v4376 = vand.u32 %v4154, 4294901760
    %4377 = vmatmul.f32.gmra.mxu0 %v4376
    %v4378 = vpop.f32.mrf.mxu0
    %v4379 = vadd.f32 %v4350, %v4378
    %4380 = vdwg.mxu0
    %4381 = vmatpush.msra.mxu0 0.0
    %4382 = vmatpush.msra.mxu0 0.0
    %4383 = vmatpush.msra.mxu0 0.0
    %4384 = vmatpush.msra.mxu0 0.0
    %4385 = vmatpush.msra.mxu0 0.0
    %4386 = vmatpush.msra.mxu0 0.0
    %4387 = vmatpush.msra.mxu0 0.0
    %4388 = vmatpush.msra.mxu0 0.0
    %4389 = vmatpush.msra.mxu0 0.0
    %4390 = vmatpush.msra.mxu0 0.0
    %4391 = vmatpush.msra.mxu0 0.0
    %4392 = vmatpush.msra.mxu0 0.0
    %v4393 = vand.u32 %v4160, 4294901760
    %4394 = vmatpush.msra.mxu0 %v4393
    %v4395 = vand.u32 %v4145, 4294901760
    %4396 = vmatpush.msra.mxu0 %v4395
    %v4397 = vand.u32 %v4142, 4294901760
    %4398 = vmatpush.msra.mxu0 %v4397
    %v4399 = vand.u32 %v4139, 4294901760
    %4400 = vmatpush.msra.mxu0 %v4399
    %v4401 = vand.u32 %v4151, 4294901760
    %v4402 = vsub.f32 %v4151, %v4401
    %v4403 = vand.u32 %v4402, 4294901760
    %v4404 = vsub.f32 %v4402, %v4403
    %v4405 = vand.u32 %v4404, 4294901760
    %4406 = vmatmul.f32.gmra.mxu0 %v4405
    %v4407 = vpop.f32.mrf.mxu0
    %v4408 = vadd.f32 0.0, %v4407
    %v4409 = vand.u32 %v4154, 4294901760
    %v4410 = vsub.f32 %v4154, %v4409
    %v4411 = vand.u32 %v4410, 4294901760
    %v4412 = vsub.f32 %v4410, %v4411
    %v4413 = vand.u32 %v4412, 4294901760
    %4414 = vmatmul.f32.gmra.mxu0 %v4413
    %v4415 = vpop.f32.mrf.mxu0
    %v4416 = vadd.f32 0.0, %v4415
    %4417 = vdwg.mxu0
    %4418 = vmatpush.msra.mxu0 0.0
    %4419 = vmatpush.msra.mxu0 0.0
    %4420 = vmatpush.msra.mxu0 0.0
    %4421 = vmatpush.msra.mxu0 0.0
    %4422 = vmatpush.msra.mxu0 0.0
    %4423 = vmatpush.msra.mxu0 0.0
    %4424 = vmatpush.msra.mxu0 0.0
    %4425 = vmatpush.msra.mxu0 0.0
    %4426 = vmatpush.msra.mxu0 0.0
    %4427 = vmatpush.msra.mxu0 0.0
    %4428 = vmatpush.msra.mxu0 0.0
    %4429 = vmatpush.msra.mxu0 0.0
    %v4430 = vand.u32 %v4160, 4294901760
    %v4431 = vsub.f32 %v4160, %v4430
    %v4432 = vand.u32 %v4431, 4294901760
    %v4433 = vsub.f32 %v4431, %v4432
    %v4434 = vand.u32 %v4433, 4294901760
    %4435 = vmatpush.msra.mxu0 %v4434
    %v4436 = vand.u32 %v4145, 4294901760
    %v4437 = vsub.f32 %v4145, %v4436
    %v4438 = vand.u32 %v4437, 4294901760
    %v4439 = vsub.f32 %v4437, %v4438
    %v4440 = vand.u32 %v4439, 4294901760
    %4441 = vmatpush.msra.mxu0 %v4440
    %v4442 = vand.u32 %v4142, 4294901760
    %v4443 = vsub.f32 %v4142, %v4442
    %v4444 = vand.u32 %v4443, 4294901760
    %v4445 = vsub.f32 %v4443, %v4444
    %v4446 = vand.u32 %v4445, 4294901760
    %4447 = vmatpush.msra.mxu0 %v4446
    %v4448 = vand.u32 %v4139, 4294901760
    %v4449 = vsub.f32 %v4139, %v4448
    %v4450 = vand.u32 %v4449, 4294901760
    %v4451 = vsub.f32 %v4449, %v4450
    %v4452 = vand.u32 %v4451, 4294901760
    %4453 = vmatpush.msra.mxu0 %v4452
    %v4454 = vand.u32 %v4151, 4294901760
    %4455 = vmatmul.f32.gmra.mxu0 %v4454
    %v4456 = vpop.f32.mrf.mxu0
    %v4457 = vadd.f32 %v4408, %v4456
    %v4458 = vand.u32 %v4154, 4294901760
    %4459 = vmatmul.f32.gmra.mxu0 %v4458
    %v4460 = vpop.f32.mrf.mxu0
    %v4461 = vadd.f32 %v4416, %v4460
    %4462 = vdwg.mxu0
    %4463 = vmatpush.msra.mxu0 0.0
    %4464 = vmatpush.msra.mxu0 0.0
    %4465 = vmatpush.msra.mxu0 0.0
    %4466 = vmatpush.msra.mxu0 0.0
    %4467 = vmatpush.msra.mxu0 0.0
    %4468 = vmatpush.msra.mxu0 0.0
    %4469 = vmatpush.msra.mxu0 0.0
    %4470 = vmatpush.msra.mxu0 0.0
    %4471 = vmatpush.msra.mxu0 0.0
    %4472 = vmatpush.msra.mxu0 0.0
    %4473 = vmatpush.msra.mxu0 0.0
    %4474 = vmatpush.msra.mxu0 0.0
    %v4475 = vand.u32 %v4160, 4294901760
    %v4476 = vsub.f32 %v4160, %v4475
    %4477 = vmatpush.msra.mxu0 %v4476
    %v4478 = vand.u32 %v4145, 4294901760
    %v4479 = vsub.f32 %v4145, %v4478
    %4480 = vmatpush.msra.mxu0 %v4479
    %v4481 = vand.u32 %v4142, 4294901760
    %v4482 = vsub.f32 %v4142, %v4481
    %4483 = vmatpush.msra.mxu0 %v4482
    %v4484 = vand.u32 %v4139, 4294901760
    %v4485 = vsub.f32 %v4139, %v4484
    %4486 = vmatpush.msra.mxu0 %v4485
    %v4487 = vand.u32 %v4151, 4294901760
    %v4488 = vsub.f32 %v4151, %v4487
    %4489 = vmatmul.f32.gmra.mxu0 %v4488
    %v4490 = vpop.f32.mrf.mxu0
    %v4491 = vadd.f32 %v4457, %v4490
    %v4492 = vand.u32 %v4154, 4294901760
    %v4493 = vsub.f32 %v4154, %v4492
    %4494 = vmatmul.f32.gmra.mxu0 %v4493
    %v4495 = vpop.f32.mrf.mxu0
    %v4496 = vadd.f32 %v4461, %v4495
    %4497 = vdwg.mxu0
    %4498 = vmatpush.msra.mxu0 0.0
    %4499 = vmatpush.msra.mxu0 0.0
    %4500 = vmatpush.msra.mxu0 0.0
    %4501 = vmatpush.msra.mxu0 0.0
    %4502 = vmatpush.msra.mxu0 0.0
    %4503 = vmatpush.msra.mxu0 0.0
    %4504 = vmatpush.msra.mxu0 0.0
    %4505 = vmatpush.msra.mxu0 0.0
    %4506 = vmatpush.msra.mxu0 0.0
    %4507 = vmatpush.msra.mxu0 0.0
    %4508 = vmatpush.msra.mxu0 0.0
    %4509 = vmatpush.msra.mxu0 0.0
    %v4510 = vand.u32 %v4160, 4294901760
    %4511 = vmatpush.msra.mxu0 %v4510
    %v4512 = vand.u32 %v4145, 4294901760
    %4513 = vmatpush.msra.mxu0 %v4512
    %v4514 = vand.u32 %v4142, 4294901760
    %4515 = vmatpush.msra.mxu0 %v4514
    %v4516 = vand.u32 %v4139, 4294901760
    %4517 = vmatpush.msra.mxu0 %v4516
    %v4518 = vand.u32 %v4151, 4294901760
    %v4519 = vsub.f32 %v4151, %v4518
    %v4520 = vand.u32 %v4519, 4294901760
    %4521 = vmatmul.f32.gmra.mxu0 %v4520
    %v4522 = vpop.f32.mrf.mxu0
    %v4523 = vadd.f32 %v4491, %v4522
    %v4524 = vand.u32 %v4154, 4294901760
    %v4525 = vsub.f32 %v4154, %v4524
    %v4526 = vand.u32 %v4525, 4294901760
    %4527 = vmatmul.f32.gmra.mxu0 %v4526
    %v4528 = vpop.f32.mrf.mxu0
    %v4529 = vadd.f32 %v4496, %v4528
    %4530 = vdwg.mxu0
    %4531 = vmatpush.msra.mxu0 0.0
    %4532 = vmatpush.msra.mxu0 0.0
    %4533 = vmatpush.msra.mxu0 0.0
    %4534 = vmatpush.msra.mxu0 0.0
    %4535 = vmatpush.msra.mxu0 0.0
    %4536 = vmatpush.msra.mxu0 0.0
    %4537 = vmatpush.msra.mxu0 0.0
    %4538 = vmatpush.msra.mxu0 0.0
    %4539 = vmatpush.msra.mxu0 0.0
    %4540 = vmatpush.msra.mxu0 0.0
    %4541 = vmatpush.msra.mxu0 0.0
    %4542 = vmatpush.msra.mxu0 0.0
    %v4543 = vand.u32 %v4160, 4294901760
    %v4544 = vsub.f32 %v4160, %v4543
    %v4545 = vand.u32 %v4544, 4294901760
    %4546 = vmatpush.msra.mxu0 %v4545
    %v4547 = vand.u32 %v4145, 4294901760
    %v4548 = vsub.f32 %v4145, %v4547
    %v4549 = vand.u32 %v4548, 4294901760
    %4550 = vmatpush.msra.mxu0 %v4549
    %v4551 = vand.u32 %v4142, 4294901760
    %v4552 = vsub.f32 %v4142, %v4551
    %v4553 = vand.u32 %v4552, 4294901760
    %4554 = vmatpush.msra.mxu0 %v4553
    %v4555 = vand.u32 %v4139, 4294901760
    %v4556 = vsub.f32 %v4139, %v4555
    %v4557 = vand.u32 %v4556, 4294901760
    %4558 = vmatpush.msra.mxu0 %v4557
    %v4559 = vand.u32 %v4151, 4294901760
    %4560 = vmatmul.f32.gmra.mxu0 %v4559
    %v4561 = vpop.f32.mrf.mxu0
    %v4562 = vadd.f32 %v4523, %v4561
    %v4563 = vand.u32 %v4154, 4294901760
    %4564 = vmatmul.f32.gmra.mxu0 %v4563
    %v4565 = vpop.f32.mrf.mxu0
    %v4566 = vadd.f32 %v4529, %v4565
    %4567 = vdwg.mxu0
    %4568 = vmatpush.msra.mxu0 0.0
    %4569 = vmatpush.msra.mxu0 0.0
    %4570 = vmatpush.msra.mxu0 0.0
    %4571 = vmatpush.msra.mxu0 0.0
    %4572 = vmatpush.msra.mxu0 0.0
    %4573 = vmatpush.msra.mxu0 0.0
    %4574 = vmatpush.msra.mxu0 0.0
    %4575 = vmatpush.msra.mxu0 0.0
    %4576 = vmatpush.msra.mxu0 0.0
    %4577 = vmatpush.msra.mxu0 0.0
    %4578 = vmatpush.msra.mxu0 0.0
    %4579 = vmatpush.msra.mxu0 0.0
    %v4580 = vand.u32 %v4160, 4294901760
    %4581 = vmatpush.msra.mxu0 %v4580
    %v4582 = vand.u32 %v4145, 4294901760
    %4583 = vmatpush.msra.mxu0 %v4582
    %v4584 = vand.u32 %v4142, 4294901760
    %4585 = vmatpush.msra.mxu0 %v4584
    %v4586 = vand.u32 %v4139, 4294901760
    %4587 = vmatpush.msra.mxu0 %v4586
    %v4588 = vand.u32 %v4151, 4294901760
    %4589 = vmatmul.f32.gmra.mxu0 %v4588
    %v4590 = vpop.f32.mrf.mxu0
    %v4591 = vadd.f32 %v4562, %v4590
    %v4592 = vand.u32 %v4154, 4294901760
    %4593 = vmatmul.f32.gmra.mxu0 %v4592
    %v4594 = vpop.f32.mrf.mxu0
    %v4595 = vadd.f32 %v4566, %v4594
    %4596 = vdwg.mxu0
    %4597 = vmatpush.msra.mxu0 0.0
    %4598 = vmatpush.msra.mxu0 0.0
    %4599 = vmatpush.msra.mxu0 0.0
    %4600 = vmatpush.msra.mxu0 0.0
    %4601 = vmatpush.msra.mxu0 0.0
    %4602 = vmatpush.msra.mxu0 0.0
    %4603 = vmatpush.msra.mxu0 0.0
    %4604 = vmatpush.msra.mxu0 0.0
    %4605 = vmatpush.msra.mxu0 0.0
    %4606 = vmatpush.msra.mxu0 0.0
    %4607 = vmatpush.msra.mxu0 0.0
    %4608 = vmatpush.msra.mxu0 0.0
    %v4609 = vand.u32 %v4163, 4294901760
    %4610 = vmatpush.msra.mxu0 %v4609
    %v4611 = vand.u32 %v4146, 4294901760
    %4612 = vmatpush.msra.mxu0 %v4611
    %v4613 = vand.u32 %v4143, 4294901760
    %4614 = vmatpush.msra.mxu0 %v4613
    %v4615 = vand.u32 %v4140, 4294901760
    %4616 = vmatpush.msra.mxu0 %v4615
    %v4617 = vand.u32 %v4151, 4294901760
    %v4618 = vsub.f32 %v4151, %v4617
    %v4619 = vand.u32 %v4618, 4294901760
    %v4620 = vsub.f32 %v4618, %v4619
    %v4621 = vand.u32 %v4620, 4294901760
    %4622 = vmatmul.f32.gmra.mxu0 %v4621
    %v4623 = vpop.f32.mrf.mxu0
    %v4624 = vadd.f32 0.0, %v4623
    %v4625 = vand.u32 %v4154, 4294901760
    %v4626 = vsub.f32 %v4154, %v4625
    %v4627 = vand.u32 %v4626, 4294901760
    %v4628 = vsub.f32 %v4626, %v4627
    %v4629 = vand.u32 %v4628, 4294901760
    %4630 = vmatmul.f32.gmra.mxu0 %v4629
    %v4631 = vpop.f32.mrf.mxu0
    %v4632 = vadd.f32 0.0, %v4631
    %4633 = vdwg.mxu0
    %4634 = vmatpush.msra.mxu0 0.0
    %4635 = vmatpush.msra.mxu0 0.0
    %4636 = vmatpush.msra.mxu0 0.0
    %4637 = vmatpush.msra.mxu0 0.0
    %4638 = vmatpush.msra.mxu0 0.0
    %4639 = vmatpush.msra.mxu0 0.0
    %4640 = vmatpush.msra.mxu0 0.0
    %4641 = vmatpush.msra.mxu0 0.0
    %4642 = vmatpush.msra.mxu0 0.0
    %4643 = vmatpush.msra.mxu0 0.0
    %4644 = vmatpush.msra.mxu0 0.0
    %4645 = vmatpush.msra.mxu0 0.0
    %v4646 = vand.u32 %v4163, 4294901760
    %v4647 = vsub.f32 %v4163, %v4646
    %v4648 = vand.u32 %v4647, 4294901760
    %v4649 = vsub.f32 %v4647, %v4648
    %v4650 = vand.u32 %v4649, 4294901760
    %4651 = vmatpush.msra.mxu0 %v4650
    %v4652 = vand.u32 %v4146, 4294901760
    %v4653 = vsub.f32 %v4146, %v4652
    %v4654 = vand.u32 %v4653, 4294901760
    %v4655 = vsub.f32 %v4653, %v4654
    %v4656 = vand.u32 %v4655, 4294901760
    %4657 = vmatpush.msra.mxu0 %v4656
    %v4658 = vand.u32 %v4143, 4294901760
    %v4659 = vsub.f32 %v4143, %v4658
    %v4660 = vand.u32 %v4659, 4294901760
    %v4661 = vsub.f32 %v4659, %v4660
    %v4662 = vand.u32 %v4661, 4294901760
    %4663 = vmatpush.msra.mxu0 %v4662
    %v4664 = vand.u32 %v4140, 4294901760
    %v4665 = vsub.f32 %v4140, %v4664
    %v4666 = vand.u32 %v4665, 4294901760
    %v4667 = vsub.f32 %v4665, %v4666
    %v4668 = vand.u32 %v4667, 4294901760
    %4669 = vmatpush.msra.mxu0 %v4668
    %v4670 = vand.u32 %v4151, 4294901760
    %4671 = vmatmul.f32.gmra.mxu0 %v4670
    %v4672 = vpop.f32.mrf.mxu0
    %v4673 = vadd.f32 %v4624, %v4672
    %v4674 = vand.u32 %v4154, 4294901760
    %4675 = vmatmul.f32.gmra.mxu0 %v4674
    %v4676 = vpop.f32.mrf.mxu0
    %v4677 = vadd.f32 %v4632, %v4676
    %4678 = vdwg.mxu0
    %4679 = vmatpush.msra.mxu0 0.0
    %4680 = vmatpush.msra.mxu0 0.0
    %4681 = vmatpush.msra.mxu0 0.0
    %4682 = vmatpush.msra.mxu0 0.0
    %4683 = vmatpush.msra.mxu0 0.0
    %4684 = vmatpush.msra.mxu0 0.0
    %4685 = vmatpush.msra.mxu0 0.0
    %4686 = vmatpush.msra.mxu0 0.0
    %4687 = vmatpush.msra.mxu0 0.0
    %4688 = vmatpush.msra.mxu0 0.0
    %4689 = vmatpush.msra.mxu0 0.0
    %4690 = vmatpush.msra.mxu0 0.0
    %v4691 = vand.u32 %v4163, 4294901760
    %v4692 = vsub.f32 %v4163, %v4691
    %4693 = vmatpush.msra.mxu0 %v4692
    %v4694 = vand.u32 %v4146, 4294901760
    %v4695 = vsub.f32 %v4146, %v4694
    %4696 = vmatpush.msra.mxu0 %v4695
    %v4697 = vand.u32 %v4143, 4294901760
    %v4698 = vsub.f32 %v4143, %v4697
    %4699 = vmatpush.msra.mxu0 %v4698
    %v4700 = vand.u32 %v4140, 4294901760
    %v4701 = vsub.f32 %v4140, %v4700
    %4702 = vmatpush.msra.mxu0 %v4701
    %v4703 = vand.u32 %v4151, 4294901760
    %v4704 = vsub.f32 %v4151, %v4703
    %4705 = vmatmul.f32.gmra.mxu0 %v4704
    %v4706 = vpop.f32.mrf.mxu0
    %v4707 = vadd.f32 %v4673, %v4706
    %v4708 = vand.u32 %v4154, 4294901760
    %v4709 = vsub.f32 %v4154, %v4708
    %4710 = vmatmul.f32.gmra.mxu0 %v4709
    %v4711 = vpop.f32.mrf.mxu0
    %v4712 = vadd.f32 %v4677, %v4711
    %4713 = vdwg.mxu0
    %4714 = vmatpush.msra.mxu0 0.0
    %4715 = vmatpush.msra.mxu0 0.0
    %4716 = vmatpush.msra.mxu0 0.0
    %4717 = vmatpush.msra.mxu0 0.0
    %4718 = vmatpush.msra.mxu0 0.0
    %4719 = vmatpush.msra.mxu0 0.0
    %4720 = vmatpush.msra.mxu0 0.0
    %4721 = vmatpush.msra.mxu0 0.0
    %4722 = vmatpush.msra.mxu0 0.0
    %4723 = vmatpush.msra.mxu0 0.0
    %4724 = vmatpush.msra.mxu0 0.0
    %4725 = vmatpush.msra.mxu0 0.0
    %v4726 = vand.u32 %v4163, 4294901760
    %4727 = vmatpush.msra.mxu0 %v4726
    %v4728 = vand.u32 %v4146, 4294901760
    %4729 = vmatpush.msra.mxu0 %v4728
    %v4730 = vand.u32 %v4143, 4294901760
    %4731 = vmatpush.msra.mxu0 %v4730
    %v4732 = vand.u32 %v4140, 4294901760
    %4733 = vmatpush.msra.mxu0 %v4732
    %v4734 = vand.u32 %v4151, 4294901760
    %v4735 = vsub.f32 %v4151, %v4734
    %v4736 = vand.u32 %v4735, 4294901760
    %4737 = vmatmul.f32.gmra.mxu0 %v4736
    %v4738 = vpop.f32.mrf.mxu0
    %v4739 = vadd.f32 %v4707, %v4738
    %v4740 = vand.u32 %v4154, 4294901760
    %v4741 = vsub.f32 %v4154, %v4740
    %v4742 = vand.u32 %v4741, 4294901760
    %4743 = vmatmul.f32.gmra.mxu0 %v4742
    %v4744 = vpop.f32.mrf.mxu0
    %v4745 = vadd.f32 %v4712, %v4744
    %4746 = vdwg.mxu0
    %4747 = vmatpush.msra.mxu0 0.0
    %4748 = vmatpush.msra.mxu0 0.0
    %4749 = vmatpush.msra.mxu0 0.0
    %4750 = vmatpush.msra.mxu0 0.0
    %4751 = vmatpush.msra.mxu0 0.0
    %4752 = vmatpush.msra.mxu0 0.0
    %4753 = vmatpush.msra.mxu0 0.0
    %4754 = vmatpush.msra.mxu0 0.0
    %4755 = vmatpush.msra.mxu0 0.0
    %4756 = vmatpush.msra.mxu0 0.0
    %4757 = vmatpush.msra.mxu0 0.0
    %4758 = vmatpush.msra.mxu0 0.0
    %v4759 = vand.u32 %v4163, 4294901760
    %v4760 = vsub.f32 %v4163, %v4759
    %v4761 = vand.u32 %v4760, 4294901760
    %4762 = vmatpush.msra.mxu0 %v4761
    %v4763 = vand.u32 %v4146, 4294901760
    %v4764 = vsub.f32 %v4146, %v4763
    %v4765 = vand.u32 %v4764, 4294901760
    %4766 = vmatpush.msra.mxu0 %v4765
    %v4767 = vand.u32 %v4143, 4294901760
    %v4768 = vsub.f32 %v4143, %v4767
    %v4769 = vand.u32 %v4768, 4294901760
    %4770 = vmatpush.msra.mxu0 %v4769
    %v4771 = vand.u32 %v4140, 4294901760
    %v4772 = vsub.f32 %v4140, %v4771
    %v4773 = vand.u32 %v4772, 4294901760
    %4774 = vmatpush.msra.mxu0 %v4773
    %v4775 = vand.u32 %v4151, 4294901760
    %4776 = vmatmul.f32.gmra.mxu0 %v4775
    %v4777 = vpop.f32.mrf.mxu0
    %v4778 = vadd.f32 %v4739, %v4777
    %v4779 = vand.u32 %v4154, 4294901760
    %4780 = vmatmul.f32.gmra.mxu0 %v4779
    %v4781 = vpop.f32.mrf.mxu0
    %v4782 = vadd.f32 %v4745, %v4781
    %4783 = vdwg.mxu0
    %4784 = vmatpush.msra.mxu0 0.0
    %4785 = vmatpush.msra.mxu0 0.0
    %4786 = vmatpush.msra.mxu0 0.0
    %4787 = vmatpush.msra.mxu0 0.0
    %4788 = vmatpush.msra.mxu0 0.0
    %4789 = vmatpush.msra.mxu0 0.0
    %4790 = vmatpush.msra.mxu0 0.0
    %4791 = vmatpush.msra.mxu0 0.0
    %4792 = vmatpush.msra.mxu0 0.0
    %4793 = vmatpush.msra.mxu0 0.0
    %4794 = vmatpush.msra.mxu0 0.0
    %4795 = vmatpush.msra.mxu0 0.0
    %v4796 = vand.u32 %v4163, 4294901760
    %4797 = vmatpush.msra.mxu0 %v4796
    %v4798 = vand.u32 %v4146, 4294901760
    %4799 = vmatpush.msra.mxu0 %v4798
    %v4800 = vand.u32 %v4143, 4294901760
    %4801 = vmatpush.msra.mxu0 %v4800
    %v4802 = vand.u32 %v4140, 4294901760
    %4803 = vmatpush.msra.mxu0 %v4802
    %v4804 = vand.u32 %v4151, 4294901760
    %4805 = vmatmul.f32.gmra.mxu0 %v4804
    %v4806 = vpop.f32.mrf.mxu0
    %v4807 = vadd.f32 %v4778, %v4806
    %v4808 = vand.u32 %v4154, 4294901760
    %4809 = vmatmul.f32.gmra.mxu0 %v4808
    %v4810 = vpop.f32.mrf.mxu0
    %v4811 = vadd.f32 %v4782, %v4810
    %4812 = vdwg.mxu0
    %v4813 = vmul.f32 %v3700, %v4375
    %v4814 = vmul.f32 %v3916, %v4591
    %v4815 = vmul.f32 %v4132, %v4807
    %v4816 = vmul.f32 %v3704, %v4379
    %v4817 = vmul.f32 %v3920, %v4595
    %v4818 = vmul.f32 %v4136, %v4811
    %v4819 = vld [vmem:[%s2] sm:$0xff]
    %v4820 = vld [vmem:[%s2 + $0x8] sm:$0xff]
    %v4821 = vld [vmem:[%s2 + $0x10] sm:$0xff]
    %v4822 = vld [vmem:[%s2 + $0x18] sm:$0xff]
    %v4823 = vld [vmem:[%s2 + $0x20] sm:$0xff]
    %v4824 = vld [vmem:[%s2 + $0x28] sm:$0xff]
    %v4825 = vld [vmem:[%s2 + $0x30] sm:$0xff]
    %v4826 = vld [vmem:[%s2 + $0x38] sm:$0xff]
    %v4827 = vld [vmem:[%s2 + $0x40] sm:$0xff]
    %v4828 = vld [vmem:[%s2 + $0x48] sm:$0xff]
    %v4829 = vld [vmem:[%s2 + $0x50] sm:$0xff]
    %v4830 = vld [vmem:[%s2 + $0x58] sm:$0xff]
    %v4831 = vld [vmem:[%s2 + $0x60] sm:$0xff]
    %v4832 = vld [vmem:[%s2 + $0x68] sm:$0xff]
    %v4833 = vld [vmem:[%s2 + $0x70] sm:$0xff]
    %v4834 = vld [vmem:[%s2 + $0x78] sm:$0xff]
    %v4835 = vld [vmem:[%s2 + $0x80] sm:$0xff]
    %v4836 = vld [vmem:[%s2 + $0x88] sm:$0xff]
    %v4837 = vld [vmem:[%s2 + $0x90] sm:$0xff]
    %v4838 = vld [vmem:[%s2 + $0x98] sm:$0xff]
    %v4839 = vld [vmem:[%s2 + $0xa0] sm:$0xff]
    %v4840 = vld [vmem:[%s2 + $0xa8] sm:$0xff]
    %v4841 = vld [vmem:[%s2 + $0xb0] sm:$0xff]
    %v4842 = vld [vmem:[%s2 + $0xb8] sm:$0xff]
    %v4843 = vld [vmem:[%s2 + $0xc0] sm:$0xff]
    %v4844 = vld [vmem:[%s2 + $0xc8] sm:$0xff]
    %v4845 = vld [vmem:[%s2 + $0xd0] sm:$0xff]
    %v4846 = vld [vmem:[%s2 + $0xd8] sm:$0xff]
    %v4847 = vld [vmem:[%s2 + $0xe0] sm:$0xff]
    %v4848 = vld [vmem:[%s2 + $0xe8] sm:$0xff]
    %v4849 = vld [vmem:[%s2 + $0xf0] sm:$0xff]
    %v4850 = vld [vmem:[%s2 + $0xf8] sm:$0xff]
    %v4851 = vld [vmem:[%s2 + $0x100] sm:$0xff]
    %v4852 = vld [vmem:[%s2 + $0x108] sm:$0xff]
    %v4853 = vld [vmem:[%s2 + $0x110] sm:$0xff]
    %v4854 = vld [vmem:[%s2 + $0x118] sm:$0xff]
    %v4855 = vld [vmem:[%s2 + $0x120] sm:$0xff]
    %v4856 = vld [vmem:[%s2 + $0x128] sm:$0xff]
    %v4857 = vld [vmem:[%s2 + $0x130] sm:$0xff]
    %v4858 = vld [vmem:[%s2 + $0x138] sm:$0xff]
    %v4859 = vld [vmem:[%s2 + $0x140] sm:$0xff]
    %v4860 = vld [vmem:[%s2 + $0x148] sm:$0xff]
    %v4861 = vld [vmem:[%s3] sm:$0x1]
    %v4863 = vperm.slane %v4861, 0
    %vm4865 = vcmask 654336
    %v4867 = vsel %vm4865, %v4815, 0
    %v4870 = vsel %vm4865, %v4818, 0
    %v4872 = vand.u32 %v4834, 4294901760
    %4873 = vmatpush.msra.mxu0 %v4872
    %v4874 = vand.u32 %v4833, 4294901760
    %4875 = vmatpush.msra.mxu0 %v4874
    %v4876 = vand.u32 %v4832, 4294901760
    %4877 = vmatpush.msra.mxu0 %v4876
    %v4878 = vand.u32 %v4831, 4294901760
    %4879 = vmatpush.msra.mxu0 %v4878
    %v4880 = vand.u32 %v4830, 4294901760
    %4881 = vmatpush.msra.mxu0 %v4880
    %v4882 = vand.u32 %v4829, 4294901760
    %4883 = vmatpush.msra.mxu0 %v4882
    %v4884 = vand.u32 %v4828, 4294901760
    %4885 = vmatpush.msra.mxu0 %v4884
    %v4886 = vand.u32 %v4827, 4294901760
    %4887 = vmatpush.msra.mxu0 %v4886
    %v4888 = vand.u32 %v4826, 4294901760
    %4889 = vmatpush.msra.mxu0 %v4888
    %v4890 = vand.u32 %v4825, 4294901760
    %4891 = vmatpush.msra.mxu0 %v4890
    %v4892 = vand.u32 %v4824, 4294901760
    %4893 = vmatpush.msra.mxu0 %v4892
    %v4894 = vand.u32 %v4823, 4294901760
    %4895 = vmatpush.msra.mxu0 %v4894
    %v4896 = vand.u32 %v4822, 4294901760
    %4897 = vmatpush.msra.mxu0 %v4896
    %v4898 = vand.u32 %v4821, 4294901760
    %4899 = vmatpush.msra.mxu0 %v4898
    %v4900 = vand.u32 %v4820, 4294901760
    %4901 = vmatpush.msra.mxu0 %v4900
    %v4902 = vand.u32 %v4819, 4294901760
    %4903 = vmatpush.msra.mxu0 %v4902
    %v4904 = vand.u32 %v4813, 4294901760
    %v4905 = vsub.f32 %v4813, %v4904
    %v4906 = vand.u32 %v4905, 4294901760
    %v4907 = vsub.f32 %v4905, %v4906
    %v4908 = vand.u32 %v4907, 4294901760
    %4909 = vmatmul.f32.gmra.mxu0 %v4908
    %v4910 = vpop.f32.mrf.mxu0
    %v4911 = vadd.f32 %v4863, %v4910
    %v4912 = vand.u32 %v4816, 4294901760
    %v4913 = vsub.f32 %v4816, %v4912
    %v4914 = vand.u32 %v4913, 4294901760
    %v4915 = vsub.f32 %v4913, %v4914
    %v4916 = vand.u32 %v4915, 4294901760
    %4917 = vmatmul.f32.gmra.mxu0 %v4916
    %v4918 = vpop.f32.mrf.mxu0
    %v4919 = vadd.f32 %v4863, %v4918
    %4920 = vdwg.mxu0
    %v4921 = vand.u32 %v4834, 4294901760
    %v4922 = vsub.f32 %v4834, %v4921
    %v4923 = vand.u32 %v4922, 4294901760
    %v4924 = vsub.f32 %v4922, %v4923
    %v4925 = vand.u32 %v4924, 4294901760
    %4926 = vmatpush.msra.mxu0 %v4925
    %v4927 = vand.u32 %v4833, 4294901760
    %v4928 = vsub.f32 %v4833, %v4927
    %v4929 = vand.u32 %v4928, 4294901760
    %v4930 = vsub.f32 %v4928, %v4929
    %v4931 = vand.u32 %v4930, 4294901760
    %4932 = vmatpush.msra.mxu0 %v4931
    %v4933 = vand.u32 %v4832, 4294901760
    %v4934 = vsub.f32 %v4832, %v4933
    %v4935 = vand.u32 %v4934, 4294901760
    %v4936 = vsub.f32 %v4934, %v4935
    %v4937 = vand.u32 %v4936, 4294901760
    %4938 = vmatpush.msra.mxu0 %v4937
    %v4939 = vand.u32 %v4831, 4294901760
    %v4940 = vsub.f32 %v4831, %v4939
    %v4941 = vand.u32 %v4940, 4294901760
    %v4942 = vsub.f32 %v4940, %v4941
    %v4943 = vand.u32 %v4942, 4294901760
    %4944 = vmatpush.msra.mxu0 %v4943
    %v4945 = vand.u32 %v4830, 4294901760
    %v4946 = vsub.f32 %v4830, %v4945
    %v4947 = vand.u32 %v4946, 4294901760
    %v4948 = vsub.f32 %v4946, %v4947
    %v4949 = vand.u32 %v4948, 4294901760
    %4950 = vmatpush.msra.mxu0 %v4949
    %v4951 = vand.u32 %v4829, 4294901760
    %v4952 = vsub.f32 %v4829, %v4951
    %v4953 = vand.u32 %v4952, 4294901760
    %v4954 = vsub.f32 %v4952, %v4953
    %v4955 = vand.u32 %v4954, 4294901760
    %4956 = vmatpush.msra.mxu0 %v4955
    %v4957 = vand.u32 %v4828, 4294901760
    %v4958 = vsub.f32 %v4828, %v4957
    %v4959 = vand.u32 %v4958, 4294901760
    %v4960 = vsub.f32 %v4958, %v4959
    %v4961 = vand.u32 %v4960, 4294901760
    %4962 = vmatpush.msra.mxu0 %v4961
    %v4963 = vand.u32 %v4827, 4294901760
    %v4964 = vsub.f32 %v4827, %v4963
    %v4965 = vand.u32 %v4964, 4294901760
    %v4966 = vsub.f32 %v4964, %v4965
    %v4967 = vand.u32 %v4966, 4294901760
    %4968 = vmatpush.msra.mxu0 %v4967
    %v4969 = vand.u32 %v4826, 4294901760
    %v4970 = vsub.f32 %v4826, %v4969
    %v4971 = vand.u32 %v4970, 4294901760
    %v4972 = vsub.f32 %v4970, %v4971
    %v4973 = vand.u32 %v4972, 4294901760
    %4974 = vmatpush.msra.mxu0 %v4973
    %v4975 = vand.u32 %v4825, 4294901760
    %v4976 = vsub.f32 %v4825, %v4975
    %v4977 = vand.u32 %v4976, 4294901760
    %v4978 = vsub.f32 %v4976, %v4977
    %v4979 = vand.u32 %v4978, 4294901760
    %4980 = vmatpush.msra.mxu0 %v4979
    %v4981 = vand.u32 %v4824, 4294901760
    %v4982 = vsub.f32 %v4824, %v4981
    %v4983 = vand.u32 %v4982, 4294901760
    %v4984 = vsub.f32 %v4982, %v4983
    %v4985 = vand.u32 %v4984, 4294901760
    %4986 = vmatpush.msra.mxu0 %v4985
    %v4987 = vand.u32 %v4823, 4294901760
    %v4988 = vsub.f32 %v4823, %v4987
    %v4989 = vand.u32 %v4988, 4294901760
    %v4990 = vsub.f32 %v4988, %v4989
    %v4991 = vand.u32 %v4990, 4294901760
    %4992 = vmatpush.msra.mxu0 %v4991
    %v4993 = vand.u32 %v4822, 4294901760
    %v4994 = vsub.f32 %v4822, %v4993
    %v4995 = vand.u32 %v4994, 4294901760
    %v4996 = vsub.f32 %v4994, %v4995
    %v4997 = vand.u32 %v4996, 4294901760
    %4998 = vmatpush.msra.mxu0 %v4997
    %v4999 = vand.u32 %v4821, 4294901760
    %v5000 = vsub.f32 %v4821, %v4999
    %v5001 = vand.u32 %v5000, 4294901760
    %v5002 = vsub.f32 %v5000, %v5001
    %v5003 = vand.u32 %v5002, 4294901760
    %5004 = vmatpush.msra.mxu0 %v5003
    %v5005 = vand.u32 %v4820, 4294901760
    %v5006 = vsub.f32 %v4820, %v5005
    %v5007 = vand.u32 %v5006, 4294901760
    %v5008 = vsub.f32 %v5006, %v5007
    %v5009 = vand.u32 %v5008, 4294901760
    %5010 = vmatpush.msra.mxu0 %v5009
    %v5011 = vand.u32 %v4819, 4294901760
    %v5012 = vsub.f32 %v4819, %v5011
    %v5013 = vand.u32 %v5012, 4294901760
    %v5014 = vsub.f32 %v5012, %v5013
    %v5015 = vand.u32 %v5014, 4294901760
    %5016 = vmatpush.msra.mxu0 %v5015
    %v5017 = vand.u32 %v4813, 4294901760
    %5018 = vmatmul.f32.gmra.mxu0 %v5017
    %v5019 = vpop.f32.mrf.mxu0
    %v5020 = vadd.f32 %v4911, %v5019
    %v5021 = vand.u32 %v4816, 4294901760
    %5022 = vmatmul.f32.gmra.mxu0 %v5021
    %v5023 = vpop.f32.mrf.mxu0
    %v5024 = vadd.f32 %v4919, %v5023
    %5025 = vdwg.mxu0
    %v5026 = vand.u32 %v4834, 4294901760
    %v5027 = vsub.f32 %v4834, %v5026
    %5028 = vmatpush.msra.mxu0 %v5027
    %v5029 = vand.u32 %v4833, 4294901760
    %v5030 = vsub.f32 %v4833, %v5029
    %5031 = vmatpush.msra.mxu0 %v5030
    %v5032 = vand.u32 %v4832, 4294901760
    %v5033 = vsub.f32 %v4832, %v5032
    %5034 = vmatpush.msra.mxu0 %v5033
    %v5035 = vand.u32 %v4831, 4294901760
    %v5036 = vsub.f32 %v4831, %v5035
    %5037 = vmatpush.msra.mxu0 %v5036
    %v5038 = vand.u32 %v4830, 4294901760
    %v5039 = vsub.f32 %v4830, %v5038
    %5040 = vmatpush.msra.mxu0 %v5039
    %v5041 = vand.u32 %v4829, 4294901760
    %v5042 = vsub.f32 %v4829, %v5041
    %5043 = vmatpush.msra.mxu0 %v5042
    %v5044 = vand.u32 %v4828, 4294901760
    %v5045 = vsub.f32 %v4828, %v5044
    %5046 = vmatpush.msra.mxu0 %v5045
    %v5047 = vand.u32 %v4827, 4294901760
    %v5048 = vsub.f32 %v4827, %v5047
    %5049 = vmatpush.msra.mxu0 %v5048
    %v5050 = vand.u32 %v4826, 4294901760
    %v5051 = vsub.f32 %v4826, %v5050
    %5052 = vmatpush.msra.mxu0 %v5051
    %v5053 = vand.u32 %v4825, 4294901760
    %v5054 = vsub.f32 %v4825, %v5053
    %5055 = vmatpush.msra.mxu0 %v5054
    %v5056 = vand.u32 %v4824, 4294901760
    %v5057 = vsub.f32 %v4824, %v5056
    %5058 = vmatpush.msra.mxu0 %v5057
    %v5059 = vand.u32 %v4823, 4294901760
    %v5060 = vsub.f32 %v4823, %v5059
    %5061 = vmatpush.msra.mxu0 %v5060
    %v5062 = vand.u32 %v4822, 4294901760
    %v5063 = vsub.f32 %v4822, %v5062
    %5064 = vmatpush.msra.mxu0 %v5063
    %v5065 = vand.u32 %v4821, 4294901760
    %v5066 = vsub.f32 %v4821, %v5065
    %5067 = vmatpush.msra.mxu0 %v5066
    %v5068 = vand.u32 %v4820, 4294901760
    %v5069 = vsub.f32 %v4820, %v5068
    %5070 = vmatpush.msra.mxu0 %v5069
    %v5071 = vand.u32 %v4819, 4294901760
    %v5072 = vsub.f32 %v4819, %v5071
    %5073 = vmatpush.msra.mxu0 %v5072
    %v5074 = vand.u32 %v4813, 4294901760
    %v5075 = vsub.f32 %v4813, %v5074
    %5076 = vmatmul.f32.gmra.mxu0 %v5075
    %v5077 = vpop.f32.mrf.mxu0
    %v5078 = vadd.f32 %v5020, %v5077
    %v5079 = vand.u32 %v4816, 4294901760
    %v5080 = vsub.f32 %v4816, %v5079
    %5081 = vmatmul.f32.gmra.mxu0 %v5080
    %v5082 = vpop.f32.mrf.mxu0
    %v5083 = vadd.f32 %v5024, %v5082
    %5084 = vdwg.mxu0
    %v5085 = vand.u32 %v4834, 4294901760
    %5086 = vmatpush.msra.mxu0 %v5085
    %v5087 = vand.u32 %v4833, 4294901760
    %5088 = vmatpush.msra.mxu0 %v5087
    %v5089 = vand.u32 %v4832, 4294901760
    %5090 = vmatpush.msra.mxu0 %v5089
    %v5091 = vand.u32 %v4831, 4294901760
    %5092 = vmatpush.msra.mxu0 %v5091
    %v5093 = vand.u32 %v4830, 4294901760
    %5094 = vmatpush.msra.mxu0 %v5093
    %v5095 = vand.u32 %v4829, 4294901760
    %5096 = vmatpush.msra.mxu0 %v5095
    %v5097 = vand.u32 %v4828, 4294901760
    %5098 = vmatpush.msra.mxu0 %v5097
    %v5099 = vand.u32 %v4827, 4294901760
    %5100 = vmatpush.msra.mxu0 %v5099
    %v5101 = vand.u32 %v4826, 4294901760
    %5102 = vmatpush.msra.mxu0 %v5101
    %v5103 = vand.u32 %v4825, 4294901760
    %5104 = vmatpush.msra.mxu0 %v5103
    %v5105 = vand.u32 %v4824, 4294901760
    %5106 = vmatpush.msra.mxu0 %v5105
    %v5107 = vand.u32 %v4823, 4294901760
    %5108 = vmatpush.msra.mxu0 %v5107
    %v5109 = vand.u32 %v4822, 4294901760
    %5110 = vmatpush.msra.mxu0 %v5109
    %v5111 = vand.u32 %v4821, 4294901760
    %5112 = vmatpush.msra.mxu0 %v5111
    %v5113 = vand.u32 %v4820, 4294901760
    %5114 = vmatpush.msra.mxu0 %v5113
    %v5115 = vand.u32 %v4819, 4294901760
    %5116 = vmatpush.msra.mxu0 %v5115
    %v5117 = vand.u32 %v4813, 4294901760
    %v5118 = vsub.f32 %v4813, %v5117
    %v5119 = vand.u32 %v5118, 4294901760
    %5120 = vmatmul.f32.gmra.mxu0 %v5119
    %v5121 = vpop.f32.mrf.mxu0
    %v5122 = vadd.f32 %v5078, %v5121
    %v5123 = vand.u32 %v4816, 4294901760
    %v5124 = vsub.f32 %v4816, %v5123
    %v5125 = vand.u32 %v5124, 4294901760
    %5126 = vmatmul.f32.gmra.mxu0 %v5125
    %v5127 = vpop.f32.mrf.mxu0
    %v5128 = vadd.f32 %v5083, %v5127
    %5129 = vdwg.mxu0
    %v5130 = vand.u32 %v4834, 4294901760
    %v5131 = vsub.f32 %v4834, %v5130
    %v5132 = vand.u32 %v5131, 4294901760
    %5133 = vmatpush.msra.mxu0 %v5132
    %v5134 = vand.u32 %v4833, 4294901760
    %v5135 = vsub.f32 %v4833, %v5134
    %v5136 = vand.u32 %v5135, 4294901760
    %5137 = vmatpush.msra.mxu0 %v5136
    %v5138 = vand.u32 %v4832, 4294901760
    %v5139 = vsub.f32 %v4832, %v5138
    %v5140 = vand.u32 %v5139, 4294901760
    %5141 = vmatpush.msra.mxu0 %v5140
    %v5142 = vand.u32 %v4831, 4294901760
    %v5143 = vsub.f32 %v4831, %v5142
    %v5144 = vand.u32 %v5143, 4294901760
    %5145 = vmatpush.msra.mxu0 %v5144
    %v5146 = vand.u32 %v4830, 4294901760
    %v5147 = vsub.f32 %v4830, %v5146
    %v5148 = vand.u32 %v5147, 4294901760
    %5149 = vmatpush.msra.mxu0 %v5148
    %v5150 = vand.u32 %v4829, 4294901760
    %v5151 = vsub.f32 %v4829, %v5150
    %v5152 = vand.u32 %v5151, 4294901760
    %5153 = vmatpush.msra.mxu0 %v5152
    %v5154 = vand.u32 %v4828, 4294901760
    %v5155 = vsub.f32 %v4828, %v5154
    %v5156 = vand.u32 %v5155, 4294901760
    %5157 = vmatpush.msra.mxu0 %v5156
    %v5158 = vand.u32 %v4827, 4294901760
    %v5159 = vsub.f32 %v4827, %v5158
    %v5160 = vand.u32 %v5159, 4294901760
    %5161 = vmatpush.msra.mxu0 %v5160
    %v5162 = vand.u32 %v4826, 4294901760
    %v5163 = vsub.f32 %v4826, %v5162
    %v5164 = vand.u32 %v5163, 4294901760
    %5165 = vmatpush.msra.mxu0 %v5164
    %v5166 = vand.u32 %v4825, 4294901760
    %v5167 = vsub.f32 %v4825, %v5166
    %v5168 = vand.u32 %v5167, 4294901760
    %5169 = vmatpush.msra.mxu0 %v5168
    %v5170 = vand.u32 %v4824, 4294901760
    %v5171 = vsub.f32 %v4824, %v5170
    %v5172 = vand.u32 %v5171, 4294901760
    %5173 = vmatpush.msra.mxu0 %v5172
    %v5174 = vand.u32 %v4823, 4294901760
    %v5175 = vsub.f32 %v4823, %v5174
    %v5176 = vand.u32 %v5175, 4294901760
    %5177 = vmatpush.msra.mxu0 %v5176
    %v5178 = vand.u32 %v4822, 4294901760
    %v5179 = vsub.f32 %v4822, %v5178
    %v5180 = vand.u32 %v5179, 4294901760
    %5181 = vmatpush.msra.mxu0 %v5180
    %v5182 = vand.u32 %v4821, 4294901760
    %v5183 = vsub.f32 %v4821, %v5182
    %v5184 = vand.u32 %v5183, 4294901760
    %5185 = vmatpush.msra.mxu0 %v5184
    %v5186 = vand.u32 %v4820, 4294901760
    %v5187 = vsub.f32 %v4820, %v5186
    %v5188 = vand.u32 %v5187, 4294901760
    %5189 = vmatpush.msra.mxu0 %v5188
    %v5190 = vand.u32 %v4819, 4294901760
    %v5191 = vsub.f32 %v4819, %v5190
    %v5192 = vand.u32 %v5191, 4294901760
    %5193 = vmatpush.msra.mxu0 %v5192
    %v5194 = vand.u32 %v4813, 4294901760
    %5195 = vmatmul.f32.gmra.mxu0 %v5194
    %v5196 = vpop.f32.mrf.mxu0
    %v5197 = vadd.f32 %v5122, %v5196
    %v5198 = vand.u32 %v4816, 4294901760
    %5199 = vmatmul.f32.gmra.mxu0 %v5198
    %v5200 = vpop.f32.mrf.mxu0
    %v5201 = vadd.f32 %v5128, %v5200
    %5202 = vdwg.mxu0
    %v5203 = vand.u32 %v4834, 4294901760
    %5204 = vmatpush.msra.mxu0 %v5203
    %v5205 = vand.u32 %v4833, 4294901760
    %5206 = vmatpush.msra.mxu0 %v5205
    %v5207 = vand.u32 %v4832, 4294901760
    %5208 = vmatpush.msra.mxu0 %v5207
    %v5209 = vand.u32 %v4831, 4294901760
    %5210 = vmatpush.msra.mxu0 %v5209
    %v5211 = vand.u32 %v4830, 4294901760
    %5212 = vmatpush.msra.mxu0 %v5211
    %v5213 = vand.u32 %v4829, 4294901760
    %5214 = vmatpush.msra.mxu0 %v5213
    %v5215 = vand.u32 %v4828, 4294901760
    %5216 = vmatpush.msra.mxu0 %v5215
    %v5217 = vand.u32 %v4827, 4294901760
    %5218 = vmatpush.msra.mxu0 %v5217
    %v5219 = vand.u32 %v4826, 4294901760
    %5220 = vmatpush.msra.mxu0 %v5219
    %v5221 = vand.u32 %v4825, 4294901760
    %5222 = vmatpush.msra.mxu0 %v5221
    %v5223 = vand.u32 %v4824, 4294901760
    %5224 = vmatpush.msra.mxu0 %v5223
    %v5225 = vand.u32 %v4823, 4294901760
    %5226 = vmatpush.msra.mxu0 %v5225
    %v5227 = vand.u32 %v4822, 4294901760
    %5228 = vmatpush.msra.mxu0 %v5227
    %v5229 = vand.u32 %v4821, 4294901760
    %5230 = vmatpush.msra.mxu0 %v5229
    %v5231 = vand.u32 %v4820, 4294901760
    %5232 = vmatpush.msra.mxu0 %v5231
    %v5233 = vand.u32 %v4819, 4294901760
    %5234 = vmatpush.msra.mxu0 %v5233
    %v5235 = vand.u32 %v4813, 4294901760
    %5236 = vmatmul.f32.gmra.mxu0 %v5235
    %v5237 = vpop.f32.mrf.mxu0
    %v5238 = vadd.f32 %v5197, %v5237
    %v5239 = vand.u32 %v4816, 4294901760
    %5240 = vmatmul.f32.gmra.mxu0 %v5239
    %v5241 = vpop.f32.mrf.mxu0
    %v5242 = vadd.f32 %v5201, %v5241
    %5243 = vdwg.mxu0
    %v5244 = vand.u32 %v4850, 4294901760
    %5245 = vmatpush.msra.mxu0 %v5244
    %v5246 = vand.u32 %v4849, 4294901760
    %5247 = vmatpush.msra.mxu0 %v5246
    %v5248 = vand.u32 %v4848, 4294901760
    %5249 = vmatpush.msra.mxu0 %v5248
    %v5250 = vand.u32 %v4847, 4294901760
    %5251 = vmatpush.msra.mxu0 %v5250
    %v5252 = vand.u32 %v4846, 4294901760
    %5253 = vmatpush.msra.mxu0 %v5252
    %v5254 = vand.u32 %v4845, 4294901760
    %5255 = vmatpush.msra.mxu0 %v5254
    %v5256 = vand.u32 %v4844, 4294901760
    %5257 = vmatpush.msra.mxu0 %v5256
    %v5258 = vand.u32 %v4843, 4294901760
    %5259 = vmatpush.msra.mxu0 %v5258
    %v5260 = vand.u32 %v4842, 4294901760
    %5261 = vmatpush.msra.mxu0 %v5260
    %v5262 = vand.u32 %v4841, 4294901760
    %5263 = vmatpush.msra.mxu0 %v5262
    %v5264 = vand.u32 %v4840, 4294901760
    %5265 = vmatpush.msra.mxu0 %v5264
    %v5266 = vand.u32 %v4839, 4294901760
    %5267 = vmatpush.msra.mxu0 %v5266
    %v5268 = vand.u32 %v4838, 4294901760
    %5269 = vmatpush.msra.mxu0 %v5268
    %v5270 = vand.u32 %v4837, 4294901760
    %5271 = vmatpush.msra.mxu0 %v5270
    %v5272 = vand.u32 %v4836, 4294901760
    %5273 = vmatpush.msra.mxu0 %v5272
    %v5274 = vand.u32 %v4835, 4294901760
    %5275 = vmatpush.msra.mxu0 %v5274
    %v5276 = vand.u32 %v4814, 4294901760
    %v5277 = vsub.f32 %v4814, %v5276
    %v5278 = vand.u32 %v5277, 4294901760
    %v5279 = vsub.f32 %v5277, %v5278
    %v5280 = vand.u32 %v5279, 4294901760
    %5281 = vmatmul.f32.gmra.mxu0 %v5280
    %v5282 = vpop.f32.mrf.mxu0
    %v5283 = vadd.f32 %v5238, %v5282
    %v5284 = vand.u32 %v4817, 4294901760
    %v5285 = vsub.f32 %v4817, %v5284
    %v5286 = vand.u32 %v5285, 4294901760
    %v5287 = vsub.f32 %v5285, %v5286
    %v5288 = vand.u32 %v5287, 4294901760
    %5289 = vmatmul.f32.gmra.mxu0 %v5288
    %v5290 = vpop.f32.mrf.mxu0
    %v5291 = vadd.f32 %v5242, %v5290
    %5292 = vdwg.mxu0
    %v5293 = vand.u32 %v4850, 4294901760
    %v5294 = vsub.f32 %v4850, %v5293
    %v5295 = vand.u32 %v5294, 4294901760
    %v5296 = vsub.f32 %v5294, %v5295
    %v5297 = vand.u32 %v5296, 4294901760
    %5298 = vmatpush.msra.mxu0 %v5297
    %v5299 = vand.u32 %v4849, 4294901760
    %v5300 = vsub.f32 %v4849, %v5299
    %v5301 = vand.u32 %v5300, 4294901760
    %v5302 = vsub.f32 %v5300, %v5301
    %v5303 = vand.u32 %v5302, 4294901760
    %5304 = vmatpush.msra.mxu0 %v5303
    %v5305 = vand.u32 %v4848, 4294901760
    %v5306 = vsub.f32 %v4848, %v5305
    %v5307 = vand.u32 %v5306, 4294901760
    %v5308 = vsub.f32 %v5306, %v5307
    %v5309 = vand.u32 %v5308, 4294901760
    %5310 = vmatpush.msra.mxu0 %v5309
    %v5311 = vand.u32 %v4847, 4294901760
    %v5312 = vsub.f32 %v4847, %v5311
    %v5313 = vand.u32 %v5312, 4294901760
    %v5314 = vsub.f32 %v5312, %v5313
    %v5315 = vand.u32 %v5314, 4294901760
    %5316 = vmatpush.msra.mxu0 %v5315
    %v5317 = vand.u32 %v4846, 4294901760
    %v5318 = vsub.f32 %v4846, %v5317
    %v5319 = vand.u32 %v5318, 4294901760
    %v5320 = vsub.f32 %v5318, %v5319
    %v5321 = vand.u32 %v5320, 4294901760
    %5322 = vmatpush.msra.mxu0 %v5321
    %v5323 = vand.u32 %v4845, 4294901760
    %v5324 = vsub.f32 %v4845, %v5323
    %v5325 = vand.u32 %v5324, 4294901760
    %v5326 = vsub.f32 %v5324, %v5325
    %v5327 = vand.u32 %v5326, 4294901760
    %5328 = vmatpush.msra.mxu0 %v5327
    %v5329 = vand.u32 %v4844, 4294901760
    %v5330 = vsub.f32 %v4844, %v5329
    %v5331 = vand.u32 %v5330, 4294901760
    %v5332 = vsub.f32 %v5330, %v5331
    %v5333 = vand.u32 %v5332, 4294901760
    %5334 = vmatpush.msra.mxu0 %v5333
    %v5335 = vand.u32 %v4843, 4294901760
    %v5336 = vsub.f32 %v4843, %v5335
    %v5337 = vand.u32 %v5336, 4294901760
    %v5338 = vsub.f32 %v5336, %v5337
    %v5339 = vand.u32 %v5338, 4294901760
    %5340 = vmatpush.msra.mxu0 %v5339
    %v5341 = vand.u32 %v4842, 4294901760
    %v5342 = vsub.f32 %v4842, %v5341
    %v5343 = vand.u32 %v5342, 4294901760
    %v5344 = vsub.f32 %v5342, %v5343
    %v5345 = vand.u32 %v5344, 4294901760
    %5346 = vmatpush.msra.mxu0 %v5345
    %v5347 = vand.u32 %v4841, 4294901760
    %v5348 = vsub.f32 %v4841, %v5347
    %v5349 = vand.u32 %v5348, 4294901760
    %v5350 = vsub.f32 %v5348, %v5349
    %v5351 = vand.u32 %v5350, 4294901760
    %5352 = vmatpush.msra.mxu0 %v5351
    %v5353 = vand.u32 %v4840, 4294901760
    %v5354 = vsub.f32 %v4840, %v5353
    %v5355 = vand.u32 %v5354, 4294901760
    %v5356 = vsub.f32 %v5354, %v5355
    %v5357 = vand.u32 %v5356, 4294901760
    %5358 = vmatpush.msra.mxu0 %v5357
    %v5359 = vand.u32 %v4839, 4294901760
    %v5360 = vsub.f32 %v4839, %v5359
    %v5361 = vand.u32 %v5360, 4294901760
    %v5362 = vsub.f32 %v5360, %v5361
    %v5363 = vand.u32 %v5362, 4294901760
    %5364 = vmatpush.msra.mxu0 %v5363
    %v5365 = vand.u32 %v4838, 4294901760
    %v5366 = vsub.f32 %v4838, %v5365
    %v5367 = vand.u32 %v5366, 4294901760
    %v5368 = vsub.f32 %v5366, %v5367
    %v5369 = vand.u32 %v5368, 4294901760
    %5370 = vmatpush.msra.mxu0 %v5369
    %v5371 = vand.u32 %v4837, 4294901760
    %v5372 = vsub.f32 %v4837, %v5371
    %v5373 = vand.u32 %v5372, 4294901760
    %v5374 = vsub.f32 %v5372, %v5373
    %v5375 = vand.u32 %v5374, 4294901760
    %5376 = vmatpush.msra.mxu0 %v5375
    %v5377 = vand.u32 %v4836, 4294901760
    %v5378 = vsub.f32 %v4836, %v5377
    %v5379 = vand.u32 %v5378, 4294901760
    %v5380 = vsub.f32 %v5378, %v5379
    %v5381 = vand.u32 %v5380, 4294901760
    %5382 = vmatpush.msra.mxu0 %v5381
    %v5383 = vand.u32 %v4835, 4294901760
    %v5384 = vsub.f32 %v4835, %v5383
    %v5385 = vand.u32 %v5384, 4294901760
    %v5386 = vsub.f32 %v5384, %v5385
    %v5387 = vand.u32 %v5386, 4294901760
    %5388 = vmatpush.msra.mxu0 %v5387
    %v5389 = vand.u32 %v4814, 4294901760
    %5390 = vmatmul.f32.gmra.mxu0 %v5389
    %v5391 = vpop.f32.mrf.mxu0
    %v5392 = vadd.f32 %v5283, %v5391
    %v5393 = vand.u32 %v4817, 4294901760
    %5394 = vmatmul.f32.gmra.mxu0 %v5393
    %v5395 = vpop.f32.mrf.mxu0
    %v5396 = vadd.f32 %v5291, %v5395
    %5397 = vdwg.mxu0
    %v5398 = vand.u32 %v4850, 4294901760
    %v5399 = vsub.f32 %v4850, %v5398
    %5400 = vmatpush.msra.mxu0 %v5399
    %v5401 = vand.u32 %v4849, 4294901760
    %v5402 = vsub.f32 %v4849, %v5401
    %5403 = vmatpush.msra.mxu0 %v5402
    %v5404 = vand.u32 %v4848, 4294901760
    %v5405 = vsub.f32 %v4848, %v5404
    %5406 = vmatpush.msra.mxu0 %v5405
    %v5407 = vand.u32 %v4847, 4294901760
    %v5408 = vsub.f32 %v4847, %v5407
    %5409 = vmatpush.msra.mxu0 %v5408
    %v5410 = vand.u32 %v4846, 4294901760
    %v5411 = vsub.f32 %v4846, %v5410
    %5412 = vmatpush.msra.mxu0 %v5411
    %v5413 = vand.u32 %v4845, 4294901760
    %v5414 = vsub.f32 %v4845, %v5413
    %5415 = vmatpush.msra.mxu0 %v5414
    %v5416 = vand.u32 %v4844, 4294901760
    %v5417 = vsub.f32 %v4844, %v5416
    %5418 = vmatpush.msra.mxu0 %v5417
    %v5419 = vand.u32 %v4843, 4294901760
    %v5420 = vsub.f32 %v4843, %v5419
    %5421 = vmatpush.msra.mxu0 %v5420
    %v5422 = vand.u32 %v4842, 4294901760
    %v5423 = vsub.f32 %v4842, %v5422
    %5424 = vmatpush.msra.mxu0 %v5423
    %v5425 = vand.u32 %v4841, 4294901760
    %v5426 = vsub.f32 %v4841, %v5425
    %5427 = vmatpush.msra.mxu0 %v5426
    %v5428 = vand.u32 %v4840, 4294901760
    %v5429 = vsub.f32 %v4840, %v5428
    %5430 = vmatpush.msra.mxu0 %v5429
    %v5431 = vand.u32 %v4839, 4294901760
    %v5432 = vsub.f32 %v4839, %v5431
    %5433 = vmatpush.msra.mxu0 %v5432
    %v5434 = vand.u32 %v4838, 4294901760
    %v5435 = vsub.f32 %v4838, %v5434
    %5436 = vmatpush.msra.mxu0 %v5435
    %v5437 = vand.u32 %v4837, 4294901760
    %v5438 = vsub.f32 %v4837, %v5437
    %5439 = vmatpush.msra.mxu0 %v5438
    %v5440 = vand.u32 %v4836, 4294901760
    %v5441 = vsub.f32 %v4836, %v5440
    %5442 = vmatpush.msra.mxu0 %v5441
    %v5443 = vand.u32 %v4835, 4294901760
    %v5444 = vsub.f32 %v4835, %v5443
    %5445 = vmatpush.msra.mxu0 %v5444
    %v5446 = vand.u32 %v4814, 4294901760
    %v5447 = vsub.f32 %v4814, %v5446
    %5448 = vmatmul.f32.gmra.mxu0 %v5447
    %v5449 = vpop.f32.mrf.mxu0
    %v5450 = vadd.f32 %v5392, %v5449
    %v5451 = vand.u32 %v4817, 4294901760
    %v5452 = vsub.f32 %v4817, %v5451
    %5453 = vmatmul.f32.gmra.mxu0 %v5452
    %v5454 = vpop.f32.mrf.mxu0
    %v5455 = vadd.f32 %v5396, %v5454
    %5456 = vdwg.mxu0
    %v5457 = vand.u32 %v4850, 4294901760
    %5458 = vmatpush.msra.mxu0 %v5457
    %v5459 = vand.u32 %v4849, 4294901760
    %5460 = vmatpush.msra.mxu0 %v5459
    %v5461 = vand.u32 %v4848, 4294901760
    %5462 = vmatpush.msra.mxu0 %v5461
    %v5463 = vand.u32 %v4847, 4294901760
    %5464 = vmatpush.msra.mxu0 %v5463
    %v5465 = vand.u32 %v4846, 4294901760
    %5466 = vmatpush.msra.mxu0 %v5465
    %v5467 = vand.u32 %v4845, 4294901760
    %5468 = vmatpush.msra.mxu0 %v5467
    %v5469 = vand.u32 %v4844, 4294901760
    %5470 = vmatpush.msra.mxu0 %v5469
    %v5471 = vand.u32 %v4843, 4294901760
    %5472 = vmatpush.msra.mxu0 %v5471
    %v5473 = vand.u32 %v4842, 4294901760
    %5474 = vmatpush.msra.mxu0 %v5473
    %v5475 = vand.u32 %v4841, 4294901760
    %5476 = vmatpush.msra.mxu0 %v5475
    %v5477 = vand.u32 %v4840, 4294901760
    %5478 = vmatpush.msra.mxu0 %v5477
    %v5479 = vand.u32 %v4839, 4294901760
    %5480 = vmatpush.msra.mxu0 %v5479
    %v5481 = vand.u32 %v4838, 4294901760
    %5482 = vmatpush.msra.mxu0 %v5481
    %v5483 = vand.u32 %v4837, 4294901760
    %5484 = vmatpush.msra.mxu0 %v5483
    %v5485 = vand.u32 %v4836, 4294901760
    %5486 = vmatpush.msra.mxu0 %v5485
    %v5487 = vand.u32 %v4835, 4294901760
    %5488 = vmatpush.msra.mxu0 %v5487
    %v5489 = vand.u32 %v4814, 4294901760
    %v5490 = vsub.f32 %v4814, %v5489
    %v5491 = vand.u32 %v5490, 4294901760
    %5492 = vmatmul.f32.gmra.mxu0 %v5491
    %v5493 = vpop.f32.mrf.mxu0
    %v5494 = vadd.f32 %v5450, %v5493
    %v5495 = vand.u32 %v4817, 4294901760
    %v5496 = vsub.f32 %v4817, %v5495
    %v5497 = vand.u32 %v5496, 4294901760
    %5498 = vmatmul.f32.gmra.mxu0 %v5497
    %v5499 = vpop.f32.mrf.mxu0
    %v5500 = vadd.f32 %v5455, %v5499
    %5501 = vdwg.mxu0
    %v5502 = vand.u32 %v4850, 4294901760
    %v5503 = vsub.f32 %v4850, %v5502
    %v5504 = vand.u32 %v5503, 4294901760
    %5505 = vmatpush.msra.mxu0 %v5504
    %v5506 = vand.u32 %v4849, 4294901760
    %v5507 = vsub.f32 %v4849, %v5506
    %v5508 = vand.u32 %v5507, 4294901760
    %5509 = vmatpush.msra.mxu0 %v5508
    %v5510 = vand.u32 %v4848, 4294901760
    %v5511 = vsub.f32 %v4848, %v5510
    %v5512 = vand.u32 %v5511, 4294901760
    %5513 = vmatpush.msra.mxu0 %v5512
    %v5514 = vand.u32 %v4847, 4294901760
    %v5515 = vsub.f32 %v4847, %v5514
    %v5516 = vand.u32 %v5515, 4294901760
    %5517 = vmatpush.msra.mxu0 %v5516
    %v5518 = vand.u32 %v4846, 4294901760
    %v5519 = vsub.f32 %v4846, %v5518
    %v5520 = vand.u32 %v5519, 4294901760
    %5521 = vmatpush.msra.mxu0 %v5520
    %v5522 = vand.u32 %v4845, 4294901760
    %v5523 = vsub.f32 %v4845, %v5522
    %v5524 = vand.u32 %v5523, 4294901760
    %5525 = vmatpush.msra.mxu0 %v5524
    %v5526 = vand.u32 %v4844, 4294901760
    %v5527 = vsub.f32 %v4844, %v5526
    %v5528 = vand.u32 %v5527, 4294901760
    %5529 = vmatpush.msra.mxu0 %v5528
    %v5530 = vand.u32 %v4843, 4294901760
    %v5531 = vsub.f32 %v4843, %v5530
    %v5532 = vand.u32 %v5531, 4294901760
    %5533 = vmatpush.msra.mxu0 %v5532
    %v5534 = vand.u32 %v4842, 4294901760
    %v5535 = vsub.f32 %v4842, %v5534
    %v5536 = vand.u32 %v5535, 4294901760
    %5537 = vmatpush.msra.mxu0 %v5536
    %v5538 = vand.u32 %v4841, 4294901760
    %v5539 = vsub.f32 %v4841, %v5538
    %v5540 = vand.u32 %v5539, 4294901760
    %5541 = vmatpush.msra.mxu0 %v5540
    %v5542 = vand.u32 %v4840, 4294901760
    %v5543 = vsub.f32 %v4840, %v5542
    %v5544 = vand.u32 %v5543, 4294901760
    %5545 = vmatpush.msra.mxu0 %v5544
    %v5546 = vand.u32 %v4839, 4294901760
    %v5547 = vsub.f32 %v4839, %v5546
    %v5548 = vand.u32 %v5547, 4294901760
    %5549 = vmatpush.msra.mxu0 %v5548
    %v5550 = vand.u32 %v4838, 4294901760
    %v5551 = vsub.f32 %v4838, %v5550
    %v5552 = vand.u32 %v5551, 4294901760
    %5553 = vmatpush.msra.mxu0 %v5552
    %v5554 = vand.u32 %v4837, 4294901760
    %v5555 = vsub.f32 %v4837, %v5554
    %v5556 = vand.u32 %v5555, 4294901760
    %5557 = vmatpush.msra.mxu0 %v5556
    %v5558 = vand.u32 %v4836, 4294901760
    %v5559 = vsub.f32 %v4836, %v5558
    %v5560 = vand.u32 %v5559, 4294901760
    %5561 = vmatpush.msra.mxu0 %v5560
    %v5562 = vand.u32 %v4835, 4294901760
    %v5563 = vsub.f32 %v4835, %v5562
    %v5564 = vand.u32 %v5563, 4294901760
    %5565 = vmatpush.msra.mxu0 %v5564
    %v5566 = vand.u32 %v4814, 4294901760
    %5567 = vmatmul.f32.gmra.mxu0 %v5566
    %v5568 = vpop.f32.mrf.mxu0
    %v5569 = vadd.f32 %v5494, %v5568
    %v5570 = vand.u32 %v4817, 4294901760
    %5571 = vmatmul.f32.gmra.mxu0 %v5570
    %v5572 = vpop.f32.mrf.mxu0
    %v5573 = vadd.f32 %v5500, %v5572
    %5574 = vdwg.mxu0
    %v5575 = vand.u32 %v4850, 4294901760
    %5576 = vmatpush.msra.mxu0 %v5575
    %v5577 = vand.u32 %v4849, 4294901760
    %5578 = vmatpush.msra.mxu0 %v5577
    %v5579 = vand.u32 %v4848, 4294901760
    %5580 = vmatpush.msra.mxu0 %v5579
    %v5581 = vand.u32 %v4847, 4294901760
    %5582 = vmatpush.msra.mxu0 %v5581
    %v5583 = vand.u32 %v4846, 4294901760
    %5584 = vmatpush.msra.mxu0 %v5583
    %v5585 = vand.u32 %v4845, 4294901760
    %5586 = vmatpush.msra.mxu0 %v5585
    %v5587 = vand.u32 %v4844, 4294901760
    %5588 = vmatpush.msra.mxu0 %v5587
    %v5589 = vand.u32 %v4843, 4294901760
    %5590 = vmatpush.msra.mxu0 %v5589
    %v5591 = vand.u32 %v4842, 4294901760
    %5592 = vmatpush.msra.mxu0 %v5591
    %v5593 = vand.u32 %v4841, 4294901760
    %5594 = vmatpush.msra.mxu0 %v5593
    %v5595 = vand.u32 %v4840, 4294901760
    %5596 = vmatpush.msra.mxu0 %v5595
    %v5597 = vand.u32 %v4839, 4294901760
    %5598 = vmatpush.msra.mxu0 %v5597
    %v5599 = vand.u32 %v4838, 4294901760
    %5600 = vmatpush.msra.mxu0 %v5599
    %v5601 = vand.u32 %v4837, 4294901760
    %5602 = vmatpush.msra.mxu0 %v5601
    %v5603 = vand.u32 %v4836, 4294901760
    %5604 = vmatpush.msra.mxu0 %v5603
    %v5605 = vand.u32 %v4835, 4294901760
    %5606 = vmatpush.msra.mxu0 %v5605
    %v5607 = vand.u32 %v4814, 4294901760
    %5608 = vmatmul.f32.gmra.mxu0 %v5607
    %v5609 = vpop.f32.mrf.mxu0
    %v5610 = vadd.f32 %v5569, %v5609
    %v5611 = vand.u32 %v4817, 4294901760
    %5612 = vmatmul.f32.gmra.mxu0 %v5611
    %v5613 = vpop.f32.mrf.mxu0
    %v5614 = vadd.f32 %v5573, %v5613
    %5615 = vdwg.mxu0
    %5616 = vmatpush.msra.mxu0 0.0
    %5617 = vmatpush.msra.mxu0 0.0
    %5618 = vmatpush.msra.mxu0 0.0
    %5619 = vmatpush.msra.mxu0 0.0
    %5620 = vmatpush.msra.mxu0 0.0
    %5621 = vmatpush.msra.mxu0 0.0
    %v5622 = vand.u32 %v4860, 4294901760
    %5623 = vmatpush.msra.mxu0 %v5622
    %v5624 = vand.u32 %v4859, 4294901760
    %5625 = vmatpush.msra.mxu0 %v5624
    %v5626 = vand.u32 %v4858, 4294901760
    %5627 = vmatpush.msra.mxu0 %v5626
    %v5628 = vand.u32 %v4857, 4294901760
    %5629 = vmatpush.msra.mxu0 %v5628
    %v5630 = vand.u32 %v4856, 4294901760
    %5631 = vmatpush.msra.mxu0 %v5630
    %v5632 = vand.u32 %v4855, 4294901760
    %5633 = vmatpush.msra.mxu0 %v5632
    %v5634 = vand.u32 %v4854, 4294901760
    %5635 = vmatpush.msra.mxu0 %v5634
    %v5636 = vand.u32 %v4853, 4294901760
    %5637 = vmatpush.msra.mxu0 %v5636
    %v5638 = vand.u32 %v4852, 4294901760
    %5639 = vmatpush.msra.mxu0 %v5638
    %v5640 = vand.u32 %v4851, 4294901760
    %5641 = vmatpush.msra.mxu0 %v5640
    %v5642 = vand.u32 %v4867, 4294901760
    %v5643 = vsub.f32 %v4867, %v5642
    %v5644 = vand.u32 %v5643, 4294901760
    %v5645 = vsub.f32 %v5643, %v5644
    %v5646 = vand.u32 %v5645, 4294901760
    %5647 = vmatmul.f32.gmra.mxu0 %v5646
    %v5648 = vpop.f32.mrf.mxu0
    %v5649 = vadd.f32 %v5610, %v5648
    %v5650 = vand.u32 %v4870, 4294901760
    %v5651 = vsub.f32 %v4870, %v5650
    %v5652 = vand.u32 %v5651, 4294901760
    %v5653 = vsub.f32 %v5651, %v5652
    %v5654 = vand.u32 %v5653, 4294901760
    %5655 = vmatmul.f32.gmra.mxu0 %v5654
    %v5656 = vpop.f32.mrf.mxu0
    %v5657 = vadd.f32 %v5614, %v5656
    %5658 = vdwg.mxu0
    %5659 = vmatpush.msra.mxu0 0.0
    %5660 = vmatpush.msra.mxu0 0.0
    %5661 = vmatpush.msra.mxu0 0.0
    %5662 = vmatpush.msra.mxu0 0.0
    %5663 = vmatpush.msra.mxu0 0.0
    %5664 = vmatpush.msra.mxu0 0.0
    %v5665 = vand.u32 %v4860, 4294901760
    %v5666 = vsub.f32 %v4860, %v5665
    %v5667 = vand.u32 %v5666, 4294901760
    %v5668 = vsub.f32 %v5666, %v5667
    %v5669 = vand.u32 %v5668, 4294901760
    %5670 = vmatpush.msra.mxu0 %v5669
    %v5671 = vand.u32 %v4859, 4294901760
    %v5672 = vsub.f32 %v4859, %v5671
    %v5673 = vand.u32 %v5672, 4294901760
    %v5674 = vsub.f32 %v5672, %v5673
    %v5675 = vand.u32 %v5674, 4294901760
    %5676 = vmatpush.msra.mxu0 %v5675
    %v5677 = vand.u32 %v4858, 4294901760
    %v5678 = vsub.f32 %v4858, %v5677
    %v5679 = vand.u32 %v5678, 4294901760
    %v5680 = vsub.f32 %v5678, %v5679
    %v5681 = vand.u32 %v5680, 4294901760
    %5682 = vmatpush.msra.mxu0 %v5681
    %v5683 = vand.u32 %v4857, 4294901760
    %v5684 = vsub.f32 %v4857, %v5683
    %v5685 = vand.u32 %v5684, 4294901760
    %v5686 = vsub.f32 %v5684, %v5685
    %v5687 = vand.u32 %v5686, 4294901760
    %5688 = vmatpush.msra.mxu0 %v5687
    %v5689 = vand.u32 %v4856, 4294901760
    %v5690 = vsub.f32 %v4856, %v5689
    %v5691 = vand.u32 %v5690, 4294901760
    %v5692 = vsub.f32 %v5690, %v5691
    %v5693 = vand.u32 %v5692, 4294901760
    %5694 = vmatpush.msra.mxu0 %v5693
    %v5695 = vand.u32 %v4855, 4294901760
    %v5696 = vsub.f32 %v4855, %v5695
    %v5697 = vand.u32 %v5696, 4294901760
    %v5698 = vsub.f32 %v5696, %v5697
    %v5699 = vand.u32 %v5698, 4294901760
    %5700 = vmatpush.msra.mxu0 %v5699
    %v5701 = vand.u32 %v4854, 4294901760
    %v5702 = vsub.f32 %v4854, %v5701
    %v5703 = vand.u32 %v5702, 4294901760
    %v5704 = vsub.f32 %v5702, %v5703
    %v5705 = vand.u32 %v5704, 4294901760
    %5706 = vmatpush.msra.mxu0 %v5705
    %v5707 = vand.u32 %v4853, 4294901760
    %v5708 = vsub.f32 %v4853, %v5707
    %v5709 = vand.u32 %v5708, 4294901760
    %v5710 = vsub.f32 %v5708, %v5709
    %v5711 = vand.u32 %v5710, 4294901760
    %5712 = vmatpush.msra.mxu0 %v5711
    %v5713 = vand.u32 %v4852, 4294901760
    %v5714 = vsub.f32 %v4852, %v5713
    %v5715 = vand.u32 %v5714, 4294901760
    %v5716 = vsub.f32 %v5714, %v5715
    %v5717 = vand.u32 %v5716, 4294901760
    %5718 = vmatpush.msra.mxu0 %v5717
    %v5719 = vand.u32 %v4851, 4294901760
    %v5720 = vsub.f32 %v4851, %v5719
    %v5721 = vand.u32 %v5720, 4294901760
    %v5722 = vsub.f32 %v5720, %v5721
    %v5723 = vand.u32 %v5722, 4294901760
    %5724 = vmatpush.msra.mxu0 %v5723
    %v5725 = vand.u32 %v4867, 4294901760
    %5726 = vmatmul.f32.gmra.mxu0 %v5725
    %v5727 = vpop.f32.mrf.mxu0
    %v5728 = vadd.f32 %v5649, %v5727
    %v5729 = vand.u32 %v4870, 4294901760
    %5730 = vmatmul.f32.gmra.mxu0 %v5729
    %v5731 = vpop.f32.mrf.mxu0
    %v5732 = vadd.f32 %v5657, %v5731
    %5733 = vdwg.mxu0
    %5734 = vmatpush.msra.mxu0 0.0
    %5735 = vmatpush.msra.mxu0 0.0
    %5736 = vmatpush.msra.mxu0 0.0
    %5737 = vmatpush.msra.mxu0 0.0
    %5738 = vmatpush.msra.mxu0 0.0
    %5739 = vmatpush.msra.mxu0 0.0
    %v5740 = vand.u32 %v4860, 4294901760
    %v5741 = vsub.f32 %v4860, %v5740
    %5742 = vmatpush.msra.mxu0 %v5741
    %v5743 = vand.u32 %v4859, 4294901760
    %v5744 = vsub.f32 %v4859, %v5743
    %5745 = vmatpush.msra.mxu0 %v5744
    %v5746 = vand.u32 %v4858, 4294901760
    %v5747 = vsub.f32 %v4858, %v5746
    %5748 = vmatpush.msra.mxu0 %v5747
    %v5749 = vand.u32 %v4857, 4294901760
    %v5750 = vsub.f32 %v4857, %v5749
    %5751 = vmatpush.msra.mxu0 %v5750
    %v5752 = vand.u32 %v4856, 4294901760
    %v5753 = vsub.f32 %v4856, %v5752
    %5754 = vmatpush.msra.mxu0 %v5753
    %v5755 = vand.u32 %v4855, 4294901760
    %v5756 = vsub.f32 %v4855, %v5755
    %5757 = vmatpush.msra.mxu0 %v5756
    %v5758 = vand.u32 %v4854, 4294901760
    %v5759 = vsub.f32 %v4854, %v5758
    %5760 = vmatpush.msra.mxu0 %v5759
    %v5761 = vand.u32 %v4853, 4294901760
    %v5762 = vsub.f32 %v4853, %v5761
    %5763 = vmatpush.msra.mxu0 %v5762
    %v5764 = vand.u32 %v4852, 4294901760
    %v5765 = vsub.f32 %v4852, %v5764
    %5766 = vmatpush.msra.mxu0 %v5765
    %v5767 = vand.u32 %v4851, 4294901760
    %v5768 = vsub.f32 %v4851, %v5767
    %5769 = vmatpush.msra.mxu0 %v5768
    %v5770 = vand.u32 %v4867, 4294901760
    %v5771 = vsub.f32 %v4867, %v5770
    %5772 = vmatmul.f32.gmra.mxu0 %v5771
    %v5773 = vpop.f32.mrf.mxu0
    %v5774 = vadd.f32 %v5728, %v5773
    %v5775 = vand.u32 %v4870, 4294901760
    %v5776 = vsub.f32 %v4870, %v5775
    %5777 = vmatmul.f32.gmra.mxu0 %v5776
    %v5778 = vpop.f32.mrf.mxu0
    %v5779 = vadd.f32 %v5732, %v5778
    %5780 = vdwg.mxu0
    %5781 = vmatpush.msra.mxu0 0.0
    %5782 = vmatpush.msra.mxu0 0.0
    %5783 = vmatpush.msra.mxu0 0.0
    %5784 = vmatpush.msra.mxu0 0.0
    %5785 = vmatpush.msra.mxu0 0.0
    %5786 = vmatpush.msra.mxu0 0.0
    %v5787 = vand.u32 %v4860, 4294901760
    %5788 = vmatpush.msra.mxu0 %v5787
    %v5789 = vand.u32 %v4859, 4294901760
    %5790 = vmatpush.msra.mxu0 %v5789
    %v5791 = vand.u32 %v4858, 4294901760
    %5792 = vmatpush.msra.mxu0 %v5791
    %v5793 = vand.u32 %v4857, 4294901760
    %5794 = vmatpush.msra.mxu0 %v5793
    %v5795 = vand.u32 %v4856, 4294901760
    %5796 = vmatpush.msra.mxu0 %v5795
    %v5797 = vand.u32 %v4855, 4294901760
    %5798 = vmatpush.msra.mxu0 %v5797
    %v5799 = vand.u32 %v4854, 4294901760
    %5800 = vmatpush.msra.mxu0 %v5799
    %v5801 = vand.u32 %v4853, 4294901760
    %5802 = vmatpush.msra.mxu0 %v5801
    %v5803 = vand.u32 %v4852, 4294901760
    %5804 = vmatpush.msra.mxu0 %v5803
    %v5805 = vand.u32 %v4851, 4294901760
    %5806 = vmatpush.msra.mxu0 %v5805
    %v5807 = vand.u32 %v4867, 4294901760
    %v5808 = vsub.f32 %v4867, %v5807
    %v5809 = vand.u32 %v5808, 4294901760
    %5810 = vmatmul.f32.gmra.mxu0 %v5809
    %v5811 = vpop.f32.mrf.mxu0
    %v5812 = vadd.f32 %v5774, %v5811
    %v5813 = vand.u32 %v4870, 4294901760
    %v5814 = vsub.f32 %v4870, %v5813
    %v5815 = vand.u32 %v5814, 4294901760
    %5816 = vmatmul.f32.gmra.mxu0 %v5815
    %v5817 = vpop.f32.mrf.mxu0
    %v5818 = vadd.f32 %v5779, %v5817
    %5819 = vdwg.mxu0
    %5820 = vmatpush.msra.mxu0 0.0
    %5821 = vmatpush.msra.mxu0 0.0
    %5822 = vmatpush.msra.mxu0 0.0
    %5823 = vmatpush.msra.mxu0 0.0
    %5824 = vmatpush.msra.mxu0 0.0
    %5825 = vmatpush.msra.mxu0 0.0
    %v5826 = vand.u32 %v4860, 4294901760
    %v5827 = vsub.f32 %v4860, %v5826
    %v5828 = vand.u32 %v5827, 4294901760
    %5829 = vmatpush.msra.mxu0 %v5828
    %v5830 = vand.u32 %v4859, 4294901760
    %v5831 = vsub.f32 %v4859, %v5830
    %v5832 = vand.u32 %v5831, 4294901760
    %5833 = vmatpush.msra.mxu0 %v5832
    %v5834 = vand.u32 %v4858, 4294901760
    %v5835 = vsub.f32 %v4858, %v5834
    %v5836 = vand.u32 %v5835, 4294901760
    %5837 = vmatpush.msra.mxu0 %v5836
    %v5838 = vand.u32 %v4857, 4294901760
    %v5839 = vsub.f32 %v4857, %v5838
    %v5840 = vand.u32 %v5839, 4294901760
    %5841 = vmatpush.msra.mxu0 %v5840
    %v5842 = vand.u32 %v4856, 4294901760
    %v5843 = vsub.f32 %v4856, %v5842
    %v5844 = vand.u32 %v5843, 4294901760
    %5845 = vmatpush.msra.mxu0 %v5844
    %v5846 = vand.u32 %v4855, 4294901760
    %v5847 = vsub.f32 %v4855, %v5846
    %v5848 = vand.u32 %v5847, 4294901760
    %5849 = vmatpush.msra.mxu0 %v5848
    %v5850 = vand.u32 %v4854, 4294901760
    %v5851 = vsub.f32 %v4854, %v5850
    %v5852 = vand.u32 %v5851, 4294901760
    %5853 = vmatpush.msra.mxu0 %v5852
    %v5854 = vand.u32 %v4853, 4294901760
    %v5855 = vsub.f32 %v4853, %v5854
    %v5856 = vand.u32 %v5855, 4294901760
    %5857 = vmatpush.msra.mxu0 %v5856
    %v5858 = vand.u32 %v4852, 4294901760
    %v5859 = vsub.f32 %v4852, %v5858
    %v5860 = vand.u32 %v5859, 4294901760
    %5861 = vmatpush.msra.mxu0 %v5860
    %v5862 = vand.u32 %v4851, 4294901760
    %v5863 = vsub.f32 %v4851, %v5862
    %v5864 = vand.u32 %v5863, 4294901760
    %5865 = vmatpush.msra.mxu0 %v5864
    %v5866 = vand.u32 %v4867, 4294901760
    %5867 = vmatmul.f32.gmra.mxu0 %v5866
    %v5868 = vpop.f32.mrf.mxu0
    %v5869 = vadd.f32 %v5812, %v5868
    %v5870 = vand.u32 %v4870, 4294901760
    %5871 = vmatmul.f32.gmra.mxu0 %v5870
    %v5872 = vpop.f32.mrf.mxu0
    %v5873 = vadd.f32 %v5818, %v5872
    %5874 = vdwg.mxu0
    %5875 = vmatpush.msra.mxu0 0.0
    %5876 = vmatpush.msra.mxu0 0.0
    %5877 = vmatpush.msra.mxu0 0.0
    %5878 = vmatpush.msra.mxu0 0.0
    %5879 = vmatpush.msra.mxu0 0.0
    %5880 = vmatpush.msra.mxu0 0.0
    %v5881 = vand.u32 %v4860, 4294901760
    %5882 = vmatpush.msra.mxu0 %v5881
    %v5883 = vand.u32 %v4859, 4294901760
    %5884 = vmatpush.msra.mxu0 %v5883
    %v5885 = vand.u32 %v4858, 4294901760
    %5886 = vmatpush.msra.mxu0 %v5885
    %v5887 = vand.u32 %v4857, 4294901760
    %5888 = vmatpush.msra.mxu0 %v5887
    %v5889 = vand.u32 %v4856, 4294901760
    %5890 = vmatpush.msra.mxu0 %v5889
    %v5891 = vand.u32 %v4855, 4294901760
    %5892 = vmatpush.msra.mxu0 %v5891
    %v5893 = vand.u32 %v4854, 4294901760
    %5894 = vmatpush.msra.mxu0 %v5893
    %v5895 = vand.u32 %v4853, 4294901760
    %5896 = vmatpush.msra.mxu0 %v5895
    %v5897 = vand.u32 %v4852, 4294901760
    %5898 = vmatpush.msra.mxu0 %v5897
    %v5899 = vand.u32 %v4851, 4294901760
    %5900 = vmatpush.msra.mxu0 %v5899
    %v5901 = vand.u32 %v4867, 4294901760
    %5902 = vmatmul.f32.gmra.mxu0 %v5901
    %v5903 = vpop.f32.mrf.mxu0
    %v5904 = vadd.f32 %v5869, %v5903
    %v5905 = vand.u32 %v4870, 4294901760
    %5906 = vmatmul.f32.gmra.mxu0 %v5905
    %v5907 = vpop.f32.mrf.mxu0
    %v5908 = vadd.f32 %v5873, %v5907
    %5909 = vdwg.mxu0
    %v5910 = vld [vmem:[%s0] sm:$0xff]
    %v5911 = vld [vmem:[%s0 + $0x8] sm:$0xff]
    %v5912 = vadd.f32 %v5904, 0.5
    %v5913 = vadd.f32 %v5908, 0.5
    %v5914 = vmul.f32 %v5910, %v5912
    %v5915 = vmul.f32 %v5911, %v5913
    %5916 = vst.msk [vmem:[#allocation2] sm:$0xff] %vm35, %v5914
    %5917 = vst.msk [vmem:[#allocation2 + $0x8] sm:$0xff] %vm35, %v5915
    // Predicated region
    $region26: #{tpu_custom_call.1} parent=1 // pred_check
      _
    $region27: #{tpu_custom_call.1} parent=1 // pred_check_branch
      %5919 = sbr.rel (0) target = $region29
    $region28: #{tpu_custom_call.1} parent=1 // pred_region
      %5921 = vsyncadd [#allocation3], 0
      %s5922 = sshll.u32 [#allocation2], 4
      %s5923 = int_to_ptr.vmem [resolvable:$true] %s5922
      %s5924 = sshll.u32 %s6, 4
      %s5925 = int_to_ptr.hbm [resolvable:$true] %s5924
      %5930 = dma.vmem_to_hbm [thread:$0]  %s5923, 256, %s5925, [#allocation3], 128, 128, 8
    $region29: #{tpu_custom_call.1} parent=1 // pred_fallthru
      _
    // Predicated region
    $region30: #{tpu_custom_call.1} parent=1 // pred_check
      _
    $region31: #{tpu_custom_call.1} parent=1 // pred_check_branch
      %5932 = sbr.rel (0) target = $region33
    $region32: #{tpu_custom_call.1} parent=1 // pred_region
      %5934 = dma.done [#allocation3], 256
    $region33: #{tpu_custom_call.1} parent=1 // pred_fallthru
      _
    %5935 = vsyncpa [#allocation3], 1

</llo_original>
